<compile_context>
chip_gen: v7x
topology: tpu7x:2x2x1
jax: 0.10.0
libtpu: 0.0.40
codegen_flags: <defaults>
</compile_context>

<pallas_src>
import jax
import jax.numpy as jnp
from jax import lax
from jax.experimental import pallas as pl
from jax.experimental.pallas import tpu as pltpu

# ---- synthetic "CLIP text" config (small, structurally faithful) ----
VOCAB = 512
HIDDEN = 128
HEADS = 4
HEAD_DIM = HIDDEN // HEADS
INTERMEDIATE = 256
LAYERS = 2
MAX_POS = 16
EPS = 1e-5
PAD_ID = VOCAB - 1          # synthetic stand-in for tokenizer id of '<|endoftext|>'
NEG_INF = -1e9
OUTPUT_MODE = "cat"
COMPUTE_DTYPE = jnp.bfloat16   # MXU operand dtype (f32 accumulation)

STACKED_KEYS = ('ln1_g', 'ln1_b', 'qw', 'qb', 'kw', 'kb', 'vw', 'vb',
                'ow', 'ob', 'ln2_g', 'ln2_b', 'f1w', 'f1b', 'f2w', 'f2b')


# ----------------------------------------------------------------------------
# Kernel
# ----------------------------------------------------------------------------
def _layer_norm(x, g, b, eps=EPS):
    x = x.astype(jnp.float32)
    mu = jnp.mean(x, axis=-1, keepdims=True)
    var = jnp.mean(jnp.square(x - mu), axis=-1, keepdims=True)
    return (x - mu) * lax.rsqrt(var + eps) * g + b


def fused_clip_kernel(padb_ref, tok_ref, pos_ref, lexg_ref, lexb_ref,
                      ln1g_ref, ln1b_ref,
                      qw_ref, qb_ref, kw_ref, kb_ref, vw_ref, vb_ref,
                      ow_ref, ob_ref,
                      ln2g_ref, ln2b_ref,
                      f1w_ref, f1b_ref, f2w_ref, f2b_ref,
                      out_ref):
    """Whole CLIP-text forward for one batch block: lex LN, embeddings,
    all encoder layers, and the final 'cat' output write."""
    BB, S, D = tok_ref.shape          # block batch, seq, hidden (static)
    N = BB * S
    BH = BB * HEADS

    def to_bh(w):
        # (HEADS, ...) per-head tensor -> (BB*HEADS, ...) batch*head tensor.
        if BB == 1:
            return w
        return jnp.broadcast_to(w[None], (BB,) + w.shape).reshape((BH,) + w.shape[1:])

    tok = tok_ref[...]                                           # (BB,S,D) f32

    # lex_seq = LayerNorm(word_embeddings(ids))   (kept in f32)
    lex = _layer_norm(tok.reshape(N, D), lexg_ref[...], lexb_ref[...])   # (N,D)

    # Additive attention bias (causal + key padding), built once, reused per layer.
    qi = lax.broadcasted_iota(jnp.int32, (S, S), 0)
    ki = lax.broadcasted_iota(jnp.int32, (S, S), 1)
    causal = jnp.where(ki > qi, NEG_INF, 0.0).astype(jnp.float32)        # (S,S)
    bias = causal[None, :, :] + padb_ref[...]                            # (BB,S,S)
    if BB == 1:
        bias_h = jnp.broadcast_to(bias, (HEADS, S, S))
    else:
        bias_h = jnp.broadcast_to(bias[:, None], (BB, HEADS, S, S)).reshape(BH, S, S)

    # CLIPTextEmbeddings: token + position embeddings (residual stream, f32).
    h = (tok + pos_ref[...][None, :, :]).reshape(N, D)

    for l in range(LAYERS):                                       # static unroll
        # ---- pre-LN self-attention ----
        x = _layer_norm(h, ln1g_ref[l], ln1b_ref[l])              # (N,D) f32
        # Cast BEFORE the per-head broadcast: replicated bytes are bf16.
        x3 = x.reshape(BB, S, D).astype(COMPUTE_DTYPE)
        if BB == 1:
            xh = jnp.broadcast_to(x3, (HEADS, S, D))              # (H,S,D)
        else:
            xh = jnp.broadcast_to(x3[:, None], (BB, HEADS, S, D)).reshape(BH, S, D)

        qw = to_bh(qw_ref[l]); kw = to_bh(kw_ref[l]); vw = to_bh(vw_ref[l])
        qb = to_bh(qb_ref[l]); kb = to_bh(kb_ref[l]); vb = to_bh(vb_ref[l])

        # Head-batched projections (1/sqrt(head_dim) already folded into qw/qb).
        q = jnp.einsum('bsd,bde->bse', xh, qw,
                       preferred_element_type=jnp.float32) + qb   # (BH,S,Dh)
        k = jnp.einsum('bsd,bde->bse', xh, kw,
                       preferred_element_type=jnp.float32) + kb
        v = jnp.einsum('bsd,bde->bse', xh, vw,
                       preferred_element_type=jnp.float32) + vb

        s = jnp.einsum('bqe,bke->bqk',
                       q.astype(COMPUTE_DTYPE), k.astype(COMPUTE_DTYPE),
                       preferred_element_type=jnp.float32) + bias_h   # (BH,S,S)
        s = s - jnp.max(s, axis=-1, keepdims=True)
        p = jnp.exp(s)
        p = p * pl.reciprocal(jnp.sum(p, axis=-1, keepdims=True), approx=True)

        ctx = jnp.einsum('bqk,bke->bqe',
                         p.astype(COMPUTE_DTYPE), v.astype(COMPUTE_DTYPE),
                         preferred_element_type=jnp.float32)           # (BH,S,Dh)

        # Out-projection: per-head (Dh->D) matmul (lane-dense 128-wide output),
        # then a cheap major-axis reduction over heads (no lane concat).
        oh = jnp.einsum('bse,bed->bsd',
                        ctx.astype(COMPUTE_DTYPE), to_bh(ow_ref[l]),
                        preferred_element_type=jnp.float32)            # (BH,S,D)
        if BB == 1:
            attn = jnp.sum(oh, axis=0)                                 # (S,D)
        else:
            attn = jnp.sum(oh.reshape(BB, HEADS, S, D), axis=1)        # (BB,S,D)
        h = h + (attn.reshape(N, D) + ob_ref[l])

        # ---- pre-LN MLP (quick_gelu) ----
        x = _layer_norm(h, ln2g_ref[l], ln2b_ref[l])
        y = jnp.dot(x.astype(COMPUTE_DTYPE), f1w_ref[l],
                    preferred_element_type=jnp.float32) + f1b_ref[l]
        y = y * jax.nn.sigmoid(1.702 * y)                              # quick_gelu
        y = jnp.dot(y.astype(COMPUTE_DTYPE), f2w_ref[l],
                    preferred_element_type=jnp.float32) + f2b_ref[l]
        h = h + y

    # prepare_output('cat'): single lane-dense store of
    # [hidden_states[-1] | lex_seq] -- both halves are 128-lane aligned.
    h3 = h.reshape(BB, S, D).astype(out_ref.dtype)
    lex3 = lex.reshape(BB, S, D).astype(out_ref.dtype)
    out_ref[...] = jnp.concatenate([h3, lex3], axis=-1)


# ----------------------------------------------------------------------------
# Wrapper
# ----------------------------------------------------------------------------
def _pick_batch_block(B, S, target_rows=256, min_grid=2):
    """Rows per grid step: aim at filling the MXU (target_rows = B_BLOCK*S) but
    keep >=2 grid steps when the batch allows so both v7x TensorCores get work."""
    bb = max(1, min(B, max(1, target_rows // max(S, 1))))
    while bb > 1 and (B % bb != 0 or B // bb < min_grid):
        bb -= 1
    return bb


def clip_embedder_forward(ids_allen, prepped):
    B, S = ids_allen.shape
    assert S <= MAX_POS, "input length exceeds position embedding capacity"

    # correct_sent_indexing (trivial elementwise; fused by XLA into the gather).
    valid = (ids_allen > 1).astype(jnp.int32)
    pad = (ids_allen == 0).astype(jnp.int32)
    ids = (ids_allen - 2) * valid + PAD_ID * pad
    input_mask = (ids_allen != 0).astype(jnp.int32)
    # TODO(synk): PyTorch module asserts on AllenNLP '@@UNKNOWN@@' (id==1); inputs avoid it.

    # Word-embedding gather stays in XLA (no clean Pallas gather at this size).
    tok = jnp.take(prepped['token_emb'], ids, axis=0)              # (B,S,D) f32
    pos = prepped['pos_emb'][:S]                                   # (S,D) f32
    # Tiny O(B*S) additive key-padding bias; causal part is rebuilt in-kernel.
    pad_key_bias = jnp.where(input_mask == 0, NEG_INF, 0.0).astype(jnp.float32)[:, None, :]

    BB = _pick_batch_block(B, S)
    grid = (B // BB,)
    w = prepped['stacked']
    weights = [w[k] for k in STACKED_KEYS]

    def fullspec(a):
        # Constant block index across grid steps -> weights are DMA'd once and
        # stay VMEM-resident for every batch block.
        return pl.BlockSpec(a.shape, lambda b, _nd=a.ndim: (0,) * _nd)

    in_specs = ([pl.BlockSpec((BB, 1, S), lambda b: (b, 0, 0)),        # pad key bias
                 pl.BlockSpec((BB, S, HIDDEN), lambda b: (b, 0, 0)),   # token embeds
                 fullspec(pos),
                 fullspec(prepped['lex_ln_g']),
                 fullspec(prepped['lex_ln_b'])]
                + [fullspec(a) for a in weights])

    h = pl.pallas_call(
        fused_clip_kernel,
        grid=grid,
        in_specs=in_specs,
        out_specs=pl.BlockSpec((BB, S, 2 * HIDDEN), lambda b: (b, 0, 0)),
        out_shape=jax.ShapeDtypeStruct((B, S, 2 * HIDDEN), jnp.float32),
        compiler_params=pltpu.CompilerParams(dimension_semantics=("parallel",)),
    )(pad_key_bias, tok, pos, prepped['lex_ln_g'], prepped['lex_ln_b'], *weights)
    return h, input_mask


# ----------------------------------------------------------------------------
# Parameters: PyTorch-layout init + kernel-layout prep
# ----------------------------------------------------------------------------
def init_params(key):
    keys = iter(jax.random.split(key, 8 * LAYERS + 8))

    def nrm(shape, scale=0.02):
        return jax.random.normal(next(keys), shape, jnp.float32) * scale

    params = {
        'token_emb': nrm((VOCAB, HIDDEN)),
        'pos_emb': nrm((MAX_POS, HIDDEN)),
        'lex_ln_g': jnp.ones((1, HIDDEN), jnp.float32),
        'lex_ln_b': jnp.zeros((1, HIDDEN), jnp.float32),
        'layers': [],
    }
    for _ in range(LAYERS):
        params['layers'].append(dict(
            ln1_g=jnp.ones((1, HIDDEN), jnp.float32),
            ln1_b=jnp.zeros((1, HIDDEN), jnp.float32),
            qw=nrm((HIDDEN, HIDDEN)), qb=jnp.zeros((1, HIDDEN), jnp.float32),
            kw=nrm((HIDDEN, HIDDEN)), kb=jnp.zeros((1, HIDDEN), jnp.float32),
            vw=nrm((HIDDEN, HIDDEN)), vb=jnp.zeros((1, HIDDEN), jnp.float32),
            ow=nrm((HIDDEN, HIDDEN)), ob=jnp.zeros((1, HIDDEN), jnp.float32),
            ln2_g=jnp.ones((1, HIDDEN), jnp.float32),
            ln2_b=jnp.zeros((1, HIDDEN), jnp.float32),
            f1w=nrm((HIDDEN, INTERMEDIATE)),
            f1b=jnp.zeros((1, INTERMEDIATE), jnp.float32),
            f2w=nrm((INTERMEDIATE, HIDDEN)),
            f2b=jnp.zeros((1, HIDDEN), jnp.float32),
        ))
    return params


def prep_inference_params(params, compute_dtype=COMPUTE_DTYPE):
    """Stack per-layer weights, split heads, fold the q scale, cast matmul
    operands to bf16 (LayerNorm params and biases stay f32)."""
    H, Dh = HEADS, HEAD_DIM
    scale = Dh ** -0.5
    layers = params['layers']

    def stack(fn, dtype=None):
        a = jnp.stack([fn(lp) for lp in layers], axis=0)
        return a.astype(dtype) if dtype is not None else a

    stacked = {
        'ln1_g': stack(lambda lp: lp['ln1_g']),
        'ln1_b': stack(lambda lp: lp['ln1_b']),
        'qw': stack(lambda lp: (lp['qw'] * scale).reshape(HIDDEN, H, Dh).transpose(1, 0, 2),
                    compute_dtype),                                   # (L,H,D,Dh)
        'qb': stack(lambda lp: (lp['qb'] * scale).reshape(H, 1, Dh)),  # (L,H,1,Dh)
        'kw': stack(lambda lp: lp['kw'].reshape(HIDDEN, H, Dh).transpose(1, 0, 2), compute_dtype),
        'kb': stack(lambda lp: lp['kb'].reshape(H, 1, Dh)),
        'vw': stack(lambda lp: lp['vw'].reshape(HIDDEN, H, Dh).transpose(1, 0, 2), compute_dtype),
        'vb': stack(lambda lp: lp['vb'].reshape(H, 1, Dh)),
        'ow': stack(lambda lp: lp['ow'].reshape(H, Dh, HIDDEN), compute_dtype),  # (L,H,Dh,D)
        'ob': stack(lambda lp: lp['ob']),
        'ln2_g': stack(lambda lp: lp['ln2_g']),
        'ln2_b': stack(lambda lp: lp['ln2_b']),
        'f1w': stack(lambda lp: lp['f1w'], compute_dtype),
        'f1b': stack(lambda lp: lp['f1b']),
        'f2w': stack(lambda lp: lp['f2w'], compute_dtype),
        'f2b': stack(lambda lp: lp['f2b']),
    }
    return {
        'token_emb': params['token_emb'],
        'pos_emb': params['pos_emb'],
        'lex_ln_g': params['lex_ln_g'],
        'lex_ln_b': params['lex_ln_b'],
        'stacked': stacked,
    }


# ----------------------------------------------------------------------------
# Pure-JAX reference (f32) for a correctness check
# ----------------------------------------------------------------------------
def reference_forward(ids_allen, params):
    valid = (ids_allen > 1).astype(jnp.int32)
    pad = (ids_allen == 0).astype(jnp.int32)
    ids = (ids_allen - 2) * valid + PAD_ID * pad
    input_mask = (ids_allen != 0).astype(jnp.int32)
    B, S = ids.shape

    tok = jnp.take(params['token_emb'], ids, axis=0)
    lex = _layer_norm(tok, params['lex_ln_g'][0], params['lex_ln_b'][0])
    h = tok + params['pos_emb'][:S][None]

    i = jnp.arange(S)
    causal = jnp.where(i[None, :] > i[:, None], NEG_INF, 0.0)
    bias = causal[None] + jnp.where(input_mask == 0, NEG_INF, 0.0)[:, None, :]   # (B,S,S)

    def split(t):
        return t.reshape(B, S, HEADS, HEAD_DIM).transpose(0, 2, 1, 3)

    for lp in params['layers']:
        x = _layer_norm(h, lp['ln1_g'][0], lp['ln1_b'][0])
        q = (x @ lp['qw'] + lp['qb']) * (HEAD_DIM ** -0.5)
        k = x @ lp['kw'] + lp['kb']
        v = x @ lp['vw'] + lp['vb']
        qh, kh, vh = split(q), split(k), split(v)
        s = jnp.einsum('bhqd,bhkd->bhqk', qh, kh) + bias[:, None]
        p = jax.nn.softmax(s, axis=-1)
        ctx = jnp.einsum('bhqk,bhkd->bhqd', p, vh).transpose(0, 2, 1, 3).reshape(B, S, HIDDEN)
        h = h + (ctx @ lp['ow'] + lp['ob'])
        x = _layer_norm(h, lp['ln2_g'][0], lp['ln2_b'][0])
        y = x @ lp['f1w'] + lp['f1b']
        y = y * jax.nn.sigmoid(1.702 * y)
        h = h + (y @ lp['f2w'] + lp['f2b'])
    return jnp.concatenate([h, lex], axis=2), input_mask


if __name__ == "__main__":
    key = jax.random.PRNGKey(0)
    pkey, ikey = jax.random.split(key)
    params = init_params(pkey)
    prepped = prep_inference_params(params)

    B, S = 2, 8
    # AllenNLP-style ids: 0 = pad, 1 = unk (avoided), >=2 valid
    ids_allen = jax.random.randint(ikey, (B, S), 2, VOCAB + 2, dtype=jnp.int32)
    ids_allen = ids_allen.at[1, S - 2:].set(0)   # padding tail on second sentence

    fwd = jax.jit(clip_embedder_forward)
    out, mask = fwd(ids_allen, prepped)
    out = jax.block_until_ready(out)

    ref, ref_mask = reference_forward(ids_allen, params)

    assert out.shape == (B, S, 2 * HIDDEN), out.shape
    assert bool(jnp.all(jnp.isfinite(out)))
    assert bool(jnp.all(mask == ref_mask))
    max_err = float(jnp.max(jnp.abs(out - ref)))
    assert max_err < 5e-2, f"kernel/reference mismatch: max abs err = {max_err}"
    print("KERNEL_OK")
</pallas_src>

<mosaic_0001>
module attributes {stable_mosaic.version = 11 : i64} {
  func.func @fused_clip_kernel(%arg0: i32, %arg1: memref<1x1x8xf32, #tpu.memory_space<vmem>>, %arg2: memref<1x8x128xf32, #tpu.memory_space<vmem>>, %arg3: memref<8x128xf32, #tpu.memory_space<vmem>>, %arg4: memref<1x128xf32, #tpu.memory_space<vmem>>, %arg5: memref<1x128xf32, #tpu.memory_space<vmem>>, %arg6: memref<2x1x128xf32, #tpu.memory_space<vmem>>, %arg7: memref<2x1x128xf32, #tpu.memory_space<vmem>>, %arg8: memref<2x4x128x32xbf16, #tpu.memory_space<vmem>>, %arg9: memref<2x4x1x32xf32, #tpu.memory_space<vmem>>, %arg10: memref<2x4x128x32xbf16, #tpu.memory_space<vmem>>, %arg11: memref<2x4x1x32xf32, #tpu.memory_space<vmem>>, %arg12: memref<2x4x128x32xbf16, #tpu.memory_space<vmem>>, %arg13: memref<2x4x1x32xf32, #tpu.memory_space<vmem>>, %arg14: memref<2x4x32x128xbf16, #tpu.memory_space<vmem>>, %arg15: memref<2x1x128xf32, #tpu.memory_space<vmem>>, %arg16: memref<2x1x128xf32, #tpu.memory_space<vmem>>, %arg17: memref<2x1x128xf32, #tpu.memory_space<vmem>>, %arg18: memref<2x128x256xbf16, #tpu.memory_space<vmem>>, %arg19: memref<2x1x256xf32, #tpu.memory_space<vmem>>, %arg20: memref<2x256x128xbf16, #tpu.memory_space<vmem>>, %arg21: memref<2x1x128xf32, #tpu.memory_space<vmem>>, %arg22: memref<1x8x256xf32, #tpu.memory_space<vmem>>) attributes {dimension_semantics = [#tpu.dimension_semantics<parallel>], iteration_bounds = array<i64: 2>, scalar_prefetch = 0 : i64, scratch_operands = 0 : i64, tpu.core_type = #tpu.core_type<tc>, window_params = [{transform_indices = @transform_0, window_bounds = array<i64: 1, 1, 8>}, {transform_indices = @transform_1, window_bounds = array<i64: 1, 8, 128>}, {pipeline_mode = #tpu.pipeline_mode<synchronous>, transform_indices = @transform_2, window_bounds = array<i64: 8, 128>}, {pipeline_mode = #tpu.pipeline_mode<synchronous>, transform_indices = @transform_3, window_bounds = array<i64: 1, 128>}, {pipeline_mode = #tpu.pipeline_mode<synchronous>, transform_indices = @transform_4, window_bounds = array<i64: 1, 128>}, {pipeline_mode = #tpu.pipeline_mode<synchronous>, transform_indices = @transform_5, window_bounds = array<i64: 2, 1, 128>}, {pipeline_mode = #tpu.pipeline_mode<synchronous>, transform_indices = @transform_6, window_bounds = array<i64: 2, 1, 128>}, {pipeline_mode = #tpu.pipeline_mode<synchronous>, transform_indices = @transform_7, window_bounds = array<i64: 2, 4, 128, 32>}, {pipeline_mode = #tpu.pipeline_mode<synchronous>, transform_indices = @transform_8, window_bounds = array<i64: 2, 4, 1, 32>}, {pipeline_mode = #tpu.pipeline_mode<synchronous>, transform_indices = @transform_9, window_bounds = array<i64: 2, 4, 128, 32>}, {pipeline_mode = #tpu.pipeline_mode<synchronous>, transform_indices = @transform_10, window_bounds = array<i64: 2, 4, 1, 32>}, {pipeline_mode = #tpu.pipeline_mode<synchronous>, transform_indices = @transform_11, window_bounds = array<i64: 2, 4, 128, 32>}, {pipeline_mode = #tpu.pipeline_mode<synchronous>, transform_indices = @transform_12, window_bounds = array<i64: 2, 4, 1, 32>}, {pipeline_mode = #tpu.pipeline_mode<synchronous>, transform_indices = @transform_13, window_bounds = array<i64: 2, 4, 32, 128>}, {pipeline_mode = #tpu.pipeline_mode<synchronous>, transform_indices = @transform_14, window_bounds = array<i64: 2, 1, 128>}, {pipeline_mode = #tpu.pipeline_mode<synchronous>, transform_indices = @transform_15, window_bounds = array<i64: 2, 1, 128>}, {pipeline_mode = #tpu.pipeline_mode<synchronous>, transform_indices = @transform_16, window_bounds = array<i64: 2, 1, 128>}, {pipeline_mode = #tpu.pipeline_mode<synchronous>, transform_indices = @transform_17, window_bounds = array<i64: 2, 128, 256>}, {pipeline_mode = #tpu.pipeline_mode<synchronous>, transform_indices = @transform_18, window_bounds = array<i64: 2, 1, 256>}, {pipeline_mode = #tpu.pipeline_mode<synchronous>, transform_indices = @transform_19, window_bounds = array<i64: 2, 256, 128>}, {pipeline_mode = #tpu.pipeline_mode<synchronous>, transform_indices = @transform_20, window_bounds = array<i64: 2, 1, 128>}, {transform_indices = @transform_21, window_bounds = array<i64: 1, 8, 256>}]} {
    %c0 = arith.constant 0 : index
    %c0_0 = arith.constant 0 : index
    %c0_1 = arith.constant 0 : index
    %0 = vector.load %arg2[%c0, %c0_0, %c0_1] : memref<1x8x128xf32, #tpu.memory_space<vmem>>, vector<1x8x128xf32>
    %1 = vector.shape_cast %0 : vector<1x8x128xf32> to vector<8x128xf32>
    %c0_2 = arith.constant 0 : index
    %c0_3 = arith.constant 0 : index
    %2 = vector.load %arg4[%c0_2, %c0_3] : memref<1x128xf32, #tpu.memory_space<vmem>>, vector<1x128xf32>
    %c0_4 = arith.constant 0 : index
    %c0_5 = arith.constant 0 : index
    %3 = vector.load %arg5[%c0_4, %c0_5] : memref<1x128xf32, #tpu.memory_space<vmem>>, vector<1x128xf32>
    %cst = arith.constant dense<0.000000e+00> : vector<8xf32>
    %4 = vector.multi_reduction <add>, %1, %cst [1] : vector<8x128xf32> to vector<8xf32>
    %5 = vector.shape_cast %4 : vector<8xf32> to vector<8x1xf32>
    %cst_6 = arith.constant 1.280000e+02 : f32
    %6 = vector.broadcast %cst_6 : f32 to vector<8x1xf32>
    %7 = arith.divf %5, %6 : vector<8x1xf32>
    %8 = vector.broadcast %7 : vector<8x1xf32> to vector<8x128xf32>
    %9 = arith.subf %1, %8 : vector<8x128xf32>
    %10 = arith.mulf %9, %9 : vector<8x128xf32>
    %cst_7 = arith.constant dense<0.000000e+00> : vector<8xf32>
    %11 = vector.multi_reduction <add>, %10, %cst_7 [1] : vector<8x128xf32> to vector<8xf32>
    %12 = vector.shape_cast %11 : vector<8xf32> to vector<8x1xf32>
    %cst_8 = arith.constant 1.280000e+02 : f32
    %13 = vector.broadcast %cst_8 : f32 to vector<8x1xf32>
    %14 = arith.divf %12, %13 : vector<8x1xf32>
    %15 = vector.broadcast %7 : vector<8x1xf32> to vector<8x128xf32>
    %16 = arith.subf %1, %15 : vector<8x128xf32>
    %cst_9 = arith.constant 9.99999974E-6 : f32
    %17 = vector.broadcast %cst_9 : f32 to vector<8x1xf32>
    %18 = arith.addf %14, %17 : vector<8x1xf32>
    %19 = math.rsqrt %18 : vector<8x1xf32>
    %20 = vector.broadcast %19 : vector<8x1xf32> to vector<8x128xf32>
    %21 = arith.mulf %16, %20 : vector<8x128xf32>
    %22 = vector.broadcast %2 : vector<1x128xf32> to vector<8x128xf32>
    %23 = arith.mulf %21, %22 : vector<8x128xf32>
    %24 = vector.broadcast %3 : vector<1x128xf32> to vector<8x128xf32>
    %25 = arith.addf %23, %24 : vector<8x128xf32>
    %26 = tpu.iota {dimensions = array<i32: 0>} : vector<8x8xi32>
    %27 = tpu.iota {dimensions = array<i32: 1>} : vector<8x8xi32>
    %28 = arith.cmpi sgt, %27, %26 : vector<8x8xi32>
    %cst_10 = arith.constant -1.000000e+09 : f32
    %cst_11 = arith.constant 0.000000e+00 : f32
    %29 = vector.broadcast %cst_10 : f32 to vector<8x8xf32>
    %30 = vector.broadcast %cst_11 : f32 to vector<8x8xf32>
    %31 = arith.select %28, %29, %30 : vector<8x8xi1>, vector<8x8xf32>
    %32 = vector.shape_cast %31 : vector<8x8xf32> to vector<1x8x8xf32>
    %c0_12 = arith.constant 0 : index
    %c0_13 = arith.constant 0 : index
    %c0_14 = arith.constant 0 : index
    %33 = vector.load %arg1[%c0_12, %c0_13, %c0_14] : memref<1x1x8xf32, #tpu.memory_space<vmem>>, vector<1x1x8xf32>
    %34 = vector.broadcast %33 : vector<1x1x8xf32> to vector<1x8x8xf32>
    %35 = arith.addf %32, %34 : vector<1x8x8xf32>
    %36 = vector.shape_cast %35 : vector<1x8x8xf32> to vector<1x8x8xf32>
    %37 = vector.broadcast %36 : vector<1x8x8xf32> to vector<4x8x8xf32>
    %c0_15 = arith.constant 0 : index
    %c0_16 = arith.constant 0 : index
    %38 = vector.load %arg3[%c0_15, %c0_16] : memref<8x128xf32, #tpu.memory_space<vmem>>, vector<8x128xf32>
    %39 = vector.shape_cast %38 : vector<8x128xf32> to vector<1x8x128xf32>
    %40 = arith.addf %0, %39 : vector<1x8x128xf32>
    %41 = vector.shape_cast %40 : vector<1x8x128xf32> to vector<8x128xf32>
    %c0_17 = arith.constant 0 : index
    %c0_18 = arith.constant 0 : index
    %c0_19 = arith.constant 0 : index
    %42 = vector.load %arg6[%c0_17, %c0_18, %c0_19] : memref<2x1x128xf32, #tpu.memory_space<vmem>>, vector<1x1x128xf32>
    %43 = vector.shape_cast %42 : vector<1x1x128xf32> to vector<1x128xf32>
    %c0_20 = arith.constant 0 : index
    %c0_21 = arith.constant 0 : index
    %c0_22 = arith.constant 0 : index
    %44 = vector.load %arg7[%c0_20, %c0_21, %c0_22] : memref<2x1x128xf32, #tpu.memory_space<vmem>>, vector<1x1x128xf32>
    %45 = vector.shape_cast %44 : vector<1x1x128xf32> to vector<1x128xf32>
    %cst_23 = arith.constant dense<0.000000e+00> : vector<8xf32>
    %46 = vector.multi_reduction <add>, %41, %cst_23 [1] : vector<8x128xf32> to vector<8xf32>
    %47 = vector.shape_cast %46 : vector<8xf32> to vector<8x1xf32>
    %cst_24 = arith.constant 1.280000e+02 : f32
    %48 = vector.broadcast %cst_24 : f32 to vector<8x1xf32>
    %49 = arith.divf %47, %48 : vector<8x1xf32>
    %50 = vector.broadcast %49 : vector<8x1xf32> to vector<8x128xf32>
    %51 = arith.subf %41, %50 : vector<8x128xf32>
    %52 = arith.mulf %51, %51 : vector<8x128xf32>
    %cst_25 = arith.constant dense<0.000000e+00> : vector<8xf32>
    %53 = vector.multi_reduction <add>, %52, %cst_25 [1] : vector<8x128xf32> to vector<8xf32>
    %54 = vector.shape_cast %53 : vector<8xf32> to vector<8x1xf32>
    %cst_26 = arith.constant 1.280000e+02 : f32
    %55 = vector.broadcast %cst_26 : f32 to vector<8x1xf32>
    %56 = arith.divf %54, %55 : vector<8x1xf32>
    %57 = vector.broadcast %49 : vector<8x1xf32> to vector<8x128xf32>
    %58 = arith.subf %41, %57 : vector<8x128xf32>
    %cst_27 = arith.constant 9.99999974E-6 : f32
    %59 = vector.broadcast %cst_27 : f32 to vector<8x1xf32>
    %60 = arith.addf %56, %59 : vector<8x1xf32>
    %61 = math.rsqrt %60 : vector<8x1xf32>
    %62 = vector.broadcast %61 : vector<8x1xf32> to vector<8x128xf32>
    %63 = arith.mulf %58, %62 : vector<8x128xf32>
    %64 = vector.broadcast %43 : vector<1x128xf32> to vector<8x128xf32>
    %65 = arith.mulf %63, %64 : vector<8x128xf32>
    %66 = vector.broadcast %45 : vector<1x128xf32> to vector<8x128xf32>
    %67 = arith.addf %65, %66 : vector<8x128xf32>
    %68 = vector.shape_cast %67 : vector<8x128xf32> to vector<1x8x128xf32>
    %69 = arith.truncf %68 : vector<1x8x128xf32> to vector<1x8x128xbf16>
    %70 = vector.shape_cast %69 : vector<1x8x128xbf16> to vector<1x8x128xbf16>
    %71 = vector.broadcast %70 : vector<1x8x128xbf16> to vector<4x8x128xbf16>
    %c0_28 = arith.constant 0 : index
    %c0_29 = arith.constant 0 : index
    %c0_30 = arith.constant 0 : index
    %c0_31 = arith.constant 0 : index
    %72 = vector.load %arg8[%c0_28, %c0_29, %c0_30, %c0_31] : memref<2x4x128x32xbf16, #tpu.memory_space<vmem>>, vector<1x4x128x32xbf16>
    %73 = vector.shape_cast %72 : vector<1x4x128x32xbf16> to vector<4x128x32xbf16>
    %c0_32 = arith.constant 0 : index
    %c0_33 = arith.constant 0 : index
    %c0_34 = arith.constant 0 : index
    %c0_35 = arith.constant 0 : index
    %74 = vector.load %arg10[%c0_32, %c0_33, %c0_34, %c0_35] : memref<2x4x128x32xbf16, #tpu.memory_space<vmem>>, vector<1x4x128x32xbf16>
    %75 = vector.shape_cast %74 : vector<1x4x128x32xbf16> to vector<4x128x32xbf16>
    %c0_36 = arith.constant 0 : index
    %c0_37 = arith.constant 0 : index
    %c0_38 = arith.constant 0 : index
    %c0_39 = arith.constant 0 : index
    %76 = vector.load %arg12[%c0_36, %c0_37, %c0_38, %c0_39] : memref<2x4x128x32xbf16, #tpu.memory_space<vmem>>, vector<1x4x128x32xbf16>
    %77 = vector.shape_cast %76 : vector<1x4x128x32xbf16> to vector<4x128x32xbf16>
    %c0_40 = arith.constant 0 : index
    %c0_41 = arith.constant 0 : index
    %c0_42 = arith.constant 0 : index
    %c0_43 = arith.constant 0 : index
    %78 = vector.load %arg9[%c0_40, %c0_41, %c0_42, %c0_43] : memref<2x4x1x32xf32, #tpu.memory_space<vmem>>, vector<1x4x1x32xf32>
    %79 = vector.shape_cast %78 : vector<1x4x1x32xf32> to vector<4x1x32xf32>
    %c0_44 = arith.constant 0 : index
    %c0_45 = arith.constant 0 : index
    %c0_46 = arith.constant 0 : index
    %c0_47 = arith.constant 0 : index
    %80 = vector.load %arg11[%c0_44, %c0_45, %c0_46, %c0_47] : memref<2x4x1x32xf32, #tpu.memory_space<vmem>>, vector<1x4x1x32xf32>
    %81 = vector.shape_cast %80 : vector<1x4x1x32xf32> to vector<4x1x32xf32>
    %c0_48 = arith.constant 0 : index
    %c0_49 = arith.constant 0 : index
    %c0_50 = arith.constant 0 : index
    %c0_51 = arith.constant 0 : index
    %82 = vector.load %arg13[%c0_48, %c0_49, %c0_50, %c0_51] : memref<2x4x1x32xf32, #tpu.memory_space<vmem>>, vector<1x4x1x32xf32>
    %83 = vector.shape_cast %82 : vector<1x4x1x32xf32> to vector<4x1x32xf32>
    "tpu.trace_start"() <{level = 10 : i32, message = "bsd,bde->bse"}> : () -> ()
    %cst_52 = arith.constant dense<0.000000e+00> : vector<4x8x32xf32>
    %84 = tpu.matmul %71, %73, %cst_52 {dimension_numbers = #tpu.dot_dimension_numbers<[2], [1], [1], [2], [0, 0, 0, 1, 1, 2], [0], [0]>} : vector<4x8x128xbf16>, vector<4x128x32xbf16>, vector<4x8x32xf32> -> vector<4x8x32xf32>
    "tpu.trace_stop"() : () -> ()
    %85 = vector.broadcast %79 : vector<4x1x32xf32> to vector<4x8x32xf32>
    %86 = arith.addf %84, %85 : vector<4x8x32xf32>
    "tpu.trace_start"() <{level = 10 : i32, message = "bsd,bde->bse"}> : () -> ()
    %cst_53 = arith.constant dense<0.000000e+00> : vector<4x8x32xf32>
    %87 = tpu.matmul %71, %75, %cst_53 {dimension_numbers = #tpu.dot_dimension_numbers<[2], [1], [1], [2], [0, 0, 0, 1, 1, 2], [0], [0]>} : vector<4x8x128xbf16>, vector<4x128x32xbf16>, vector<4x8x32xf32> -> vector<4x8x32xf32>
    "tpu.trace_stop"() : () -> ()
    %88 = vector.broadcast %81 : vector<4x1x32xf32> to vector<4x8x32xf32>
    %89 = arith.addf %87, %88 : vector<4x8x32xf32>
    "tpu.trace_start"() <{level = 10 : i32, message = "bsd,bde->bse"}> : () -> ()
    %cst_54 = arith.constant dense<0.000000e+00> : vector<4x8x32xf32>
    %90 = tpu.matmul %71, %77, %cst_54 {dimension_numbers = #tpu.dot_dimension_numbers<[2], [1], [1], [2], [0, 0, 0, 1, 1, 2], [0], [0]>} : vector<4x8x128xbf16>, vector<4x128x32xbf16>, vector<4x8x32xf32> -> vector<4x8x32xf32>
    "tpu.trace_stop"() : () -> ()
    %91 = vector.broadcast %83 : vector<4x1x32xf32> to vector<4x8x32xf32>
    %92 = arith.addf %90, %91 : vector<4x8x32xf32>
    %93 = arith.truncf %86 : vector<4x8x32xf32> to vector<4x8x32xbf16>
    %94 = arith.truncf %89 : vector<4x8x32xf32> to vector<4x8x32xbf16>
    "tpu.trace_start"() <{level = 10 : i32, message = "bqe,bke->bqk"}> : () -> ()
    %cst_55 = arith.constant dense<0.000000e+00> : vector<4x8x8xf32>
    %95 = tpu.matmul %93, %94, %cst_55 {dimension_numbers = #tpu.dot_dimension_numbers<[2], [2], [1], [1], [0, 0, 0, 1, 1, 1], [0], [0]>} : vector<4x8x32xbf16>, vector<4x8x32xbf16>, vector<4x8x8xf32> -> vector<4x8x8xf32>
    "tpu.trace_stop"() : () -> ()
    %96 = arith.addf %95, %37 : vector<4x8x8xf32>
    %cst_56 = arith.constant dense<0xFF800000> : vector<4x8xf32>
    %97 = vector.multi_reduction <maximumf>, %96, %cst_56 [2] : vector<4x8x8xf32> to vector<4x8xf32>
    %98 = vector.shape_cast %97 : vector<4x8xf32> to vector<4x8x1xf32>
    %99 = vector.broadcast %98 : vector<4x8x1xf32> to vector<4x8x8xf32>
    %100 = arith.subf %96, %99 : vector<4x8x8xf32>
    %101 = math.exp %100 : vector<4x8x8xf32>
    %cst_57 = arith.constant dense<0.000000e+00> : vector<4x8xf32>
    %102 = vector.multi_reduction <add>, %101, %cst_57 [2] : vector<4x8x8xf32> to vector<4x8xf32>
    %103 = vector.shape_cast %102 : vector<4x8xf32> to vector<4x8x1xf32>
    %104 = tpu.reciprocal %103 {approx = true} : vector<4x8x1xf32> -> vector<4x8x1xf32>
    %105 = vector.broadcast %104 : vector<4x8x1xf32> to vector<4x8x8xf32>
    %106 = arith.mulf %101, %105 : vector<4x8x8xf32>
    %107 = arith.truncf %106 : vector<4x8x8xf32> to vector<4x8x8xbf16>
    %108 = arith.truncf %92 : vector<4x8x32xf32> to vector<4x8x32xbf16>
    "tpu.trace_start"() <{level = 10 : i32, message = "bqk,bke->bqe"}> : () -> ()
    %cst_58 = arith.constant dense<0.000000e+00> : vector<4x8x32xf32>
    %109 = tpu.matmul %107, %108, %cst_58 {dimension_numbers = #tpu.dot_dimension_numbers<[2], [1], [1], [2], [0, 0, 0, 1, 1, 2], [0], [0]>} : vector<4x8x8xbf16>, vector<4x8x32xbf16>, vector<4x8x32xf32> -> vector<4x8x32xf32>
    "tpu.trace_stop"() : () -> ()
    %110 = arith.truncf %109 : vector<4x8x32xf32> to vector<4x8x32xbf16>
    %c0_59 = arith.constant 0 : index
    %c0_60 = arith.constant 0 : index
    %c0_61 = arith.constant 0 : index
    %c0_62 = arith.constant 0 : index
    %111 = vector.load %arg14[%c0_59, %c0_60, %c0_61, %c0_62] : memref<2x4x32x128xbf16, #tpu.memory_space<vmem>>, vector<1x4x32x128xbf16>
    %112 = vector.shape_cast %111 : vector<1x4x32x128xbf16> to vector<4x32x128xbf16>
    "tpu.trace_start"() <{level = 10 : i32, message = "bse,bed->bsd"}> : () -> ()
    %cst_63 = arith.constant dense<0.000000e+00> : vector<4x8x128xf32>
    %113 = tpu.matmul %110, %112, %cst_63 {dimension_numbers = #tpu.dot_dimension_numbers<[2], [1], [1], [2], [0, 0, 0, 1, 1, 2], [0], [0]>} : vector<4x8x32xbf16>, vector<4x32x128xbf16>, vector<4x8x128xf32> -> vector<4x8x128xf32>
    "tpu.trace_stop"() : () -> ()
    %cst_64 = arith.constant dense<0.000000e+00> : vector<8x128xf32>
    %114 = vector.multi_reduction <add>, %113, %cst_64 [0] : vector<4x8x128xf32> to vector<8x128xf32>
    %c0_65 = arith.constant 0 : index
    %c0_66 = arith.constant 0 : index
    %c0_67 = arith.constant 0 : index
    %115 = vector.load %arg15[%c0_65, %c0_66, %c0_67] : memref<2x1x128xf32, #tpu.memory_space<vmem>>, vector<1x1x128xf32>
    %116 = vector.shape_cast %115 : vector<1x1x128xf32> to vector<1x128xf32>
    %117 = vector.broadcast %116 : vector<1x128xf32> to vector<8x128xf32>
    %118 = arith.addf %114, %117 : vector<8x128xf32>
    %119 = arith.addf %41, %118 : vector<8x128xf32>
    %c0_68 = arith.constant 0 : index
    %c0_69 = arith.constant 0 : index
    %c0_70 = arith.constant 0 : index
    %120 = vector.load %arg16[%c0_68, %c0_69, %c0_70] : memref<2x1x128xf32, #tpu.memory_space<vmem>>, vector<1x1x128xf32>
    %121 = vector.shape_cast %120 : vector<1x1x128xf32> to vector<1x128xf32>
    %c0_71 = arith.constant 0 : index
    %c0_72 = arith.constant 0 : index
    %c0_73 = arith.constant 0 : index
    %122 = vector.load %arg17[%c0_71, %c0_72, %c0_73] : memref<2x1x128xf32, #tpu.memory_space<vmem>>, vector<1x1x128xf32>
    %123 = vector.shape_cast %122 : vector<1x1x128xf32> to vector<1x128xf32>
    %cst_74 = arith.constant dense<0.000000e+00> : vector<8xf32>
    %124 = vector.multi_reduction <add>, %119, %cst_74 [1] : vector<8x128xf32> to vector<8xf32>
    %125 = vector.shape_cast %124 : vector<8xf32> to vector<8x1xf32>
    %cst_75 = arith.constant 1.280000e+02 : f32
    %126 = vector.broadcast %cst_75 : f32 to vector<8x1xf32>
    %127 = arith.divf %125, %126 : vector<8x1xf32>
    %128 = vector.broadcast %127 : vector<8x1xf32> to vector<8x128xf32>
    %129 = arith.subf %119, %128 : vector<8x128xf32>
    %130 = arith.mulf %129, %129 : vector<8x128xf32>
    %cst_76 = arith.constant dense<0.000000e+00> : vector<8xf32>
    %131 = vector.multi_reduction <add>, %130, %cst_76 [1] : vector<8x128xf32> to vector<8xf32>
    %132 = vector.shape_cast %131 : vector<8xf32> to vector<8x1xf32>
    %cst_77 = arith.constant 1.280000e+02 : f32
    %133 = vector.broadcast %cst_77 : f32 to vector<8x1xf32>
    %134 = arith.divf %132, %133 : vector<8x1xf32>
    %135 = vector.broadcast %127 : vector<8x1xf32> to vector<8x128xf32>
    %136 = arith.subf %119, %135 : vector<8x128xf32>
    %cst_78 = arith.constant 9.99999974E-6 : f32
    %137 = vector.broadcast %cst_78 : f32 to vector<8x1xf32>
    %138 = arith.addf %134, %137 : vector<8x1xf32>
    %139 = math.rsqrt %138 : vector<8x1xf32>
    %140 = vector.broadcast %139 : vector<8x1xf32> to vector<8x128xf32>
    %141 = arith.mulf %136, %140 : vector<8x128xf32>
    %142 = vector.broadcast %121 : vector<1x128xf32> to vector<8x128xf32>
    %143 = arith.mulf %141, %142 : vector<8x128xf32>
    %144 = vector.broadcast %123 : vector<1x128xf32> to vector<8x128xf32>
    %145 = arith.addf %143, %144 : vector<8x128xf32>
    %146 = arith.truncf %145 : vector<8x128xf32> to vector<8x128xbf16>
    %c0_79 = arith.constant 0 : index
    %c0_80 = arith.constant 0 : index
    %c0_81 = arith.constant 0 : index
    %147 = vector.load %arg18[%c0_79, %c0_80, %c0_81] : memref<2x128x256xbf16, #tpu.memory_space<vmem>>, vector<1x128x256xbf16>
    %148 = vector.shape_cast %147 : vector<1x128x256xbf16> to vector<128x256xbf16>
    %cst_82 = arith.constant dense<0.000000e+00> : vector<8x256xf32>
    %149 = tpu.matmul %146, %148, %cst_82 {dimension_numbers = #tpu.dot_dimension_numbers<[1], [0], [0], [1], [0, 0, 1, 1], [], []>} : vector<8x128xbf16>, vector<128x256xbf16>, vector<8x256xf32> -> vector<8x256xf32>
    %c0_83 = arith.constant 0 : index
    %c0_84 = arith.constant 0 : index
    %c0_85 = arith.constant 0 : index
    %150 = vector.load %arg19[%c0_83, %c0_84, %c0_85] : memref<2x1x256xf32, #tpu.memory_space<vmem>>, vector<1x1x256xf32>
    %151 = vector.shape_cast %150 : vector<1x1x256xf32> to vector<1x256xf32>
    %152 = vector.broadcast %151 : vector<1x256xf32> to vector<8x256xf32>
    %153 = arith.addf %149, %152 : vector<8x256xf32>
    %cst_86 = arith.constant 1.702000e+00 : f32
    %154 = vector.broadcast %cst_86 : f32 to vector<8x256xf32>
    %155 = arith.mulf %154, %153 : vector<8x256xf32>
    %156 = arith.negf %155 : vector<8x256xf32>
    %157 = math.exp %156 : vector<8x256xf32>
    %cst_87 = arith.constant 1.000000e+00 : f32
    %158 = vector.broadcast %cst_87 : f32 to vector<8x256xf32>
    %159 = arith.addf %158, %157 : vector<8x256xf32>
    %160 = arith.divf %158, %159 : vector<8x256xf32>
    %161 = arith.mulf %153, %160 : vector<8x256xf32>
    %162 = arith.truncf %161 : vector<8x256xf32> to vector<8x256xbf16>
    %c0_88 = arith.constant 0 : index
    %c0_89 = arith.constant 0 : index
    %c0_90 = arith.constant 0 : index
    %163 = vector.load %arg20[%c0_88, %c0_89, %c0_90] : memref<2x256x128xbf16, #tpu.memory_space<vmem>>, vector<1x256x128xbf16>
    %164 = vector.shape_cast %163 : vector<1x256x128xbf16> to vector<256x128xbf16>
    %cst_91 = arith.constant dense<0.000000e+00> : vector<8x128xf32>
    %165 = tpu.matmul %162, %164, %cst_91 {dimension_numbers = #tpu.dot_dimension_numbers<[1], [0], [0], [1], [0, 0, 1, 1], [], []>} : vector<8x256xbf16>, vector<256x128xbf16>, vector<8x128xf32> -> vector<8x128xf32>
    %c0_92 = arith.constant 0 : index
    %c0_93 = arith.constant 0 : index
    %c0_94 = arith.constant 0 : index
    %166 = vector.load %arg21[%c0_92, %c0_93, %c0_94] : memref<2x1x128xf32, #tpu.memory_space<vmem>>, vector<1x1x128xf32>
    %167 = vector.shape_cast %166 : vector<1x1x128xf32> to vector<1x128xf32>
    %168 = vector.broadcast %167 : vector<1x128xf32> to vector<8x128xf32>
    %169 = arith.addf %165, %168 : vector<8x128xf32>
    %170 = arith.addf %119, %169 : vector<8x128xf32>
    %c1 = arith.constant 1 : index
    %c0_95 = arith.constant 0 : index
    %c0_96 = arith.constant 0 : index
    %171 = vector.load %arg6[%c1, %c0_95, %c0_96] : memref<2x1x128xf32, #tpu.memory_space<vmem>>, vector<1x1x128xf32>
    %172 = vector.shape_cast %171 : vector<1x1x128xf32> to vector<1x128xf32>
    %c1_97 = arith.constant 1 : index
    %c0_98 = arith.constant 0 : index
    %c0_99 = arith.constant 0 : index
    %173 = vector.load %arg7[%c1_97, %c0_98, %c0_99] : memref<2x1x128xf32, #tpu.memory_space<vmem>>, vector<1x1x128xf32>
    %174 = vector.shape_cast %173 : vector<1x1x128xf32> to vector<1x128xf32>
    %cst_100 = arith.constant dense<0.000000e+00> : vector<8xf32>
    %175 = vector.multi_reduction <add>, %170, %cst_100 [1] : vector<8x128xf32> to vector<8xf32>
    %176 = vector.shape_cast %175 : vector<8xf32> to vector<8x1xf32>
    %cst_101 = arith.constant 1.280000e+02 : f32
    %177 = vector.broadcast %cst_101 : f32 to vector<8x1xf32>
    %178 = arith.divf %176, %177 : vector<8x1xf32>
    %179 = vector.broadcast %178 : vector<8x1xf32> to vector<8x128xf32>
    %180 = arith.subf %170, %179 : vector<8x128xf32>
    %181 = arith.mulf %180, %180 : vector<8x128xf32>
    %cst_102 = arith.constant dense<0.000000e+00> : vector<8xf32>
    %182 = vector.multi_reduction <add>, %181, %cst_102 [1] : vector<8x128xf32> to vector<8xf32>
    %183 = vector.shape_cast %182 : vector<8xf32> to vector<8x1xf32>
    %cst_103 = arith.constant 1.280000e+02 : f32
    %184 = vector.broadcast %cst_103 : f32 to vector<8x1xf32>
    %185 = arith.divf %183, %184 : vector<8x1xf32>
    %186 = vector.broadcast %178 : vector<8x1xf32> to vector<8x128xf32>
    %187 = arith.subf %170, %186 : vector<8x128xf32>
    %cst_104 = arith.constant 9.99999974E-6 : f32
    %188 = vector.broadcast %cst_104 : f32 to vector<8x1xf32>
    %189 = arith.addf %185, %188 : vector<8x1xf32>
    %190 = math.rsqrt %189 : vector<8x1xf32>
    %191 = vector.broadcast %190 : vector<8x1xf32> to vector<8x128xf32>
    %192 = arith.mulf %187, %191 : vector<8x128xf32>
    %193 = vector.broadcast %172 : vector<1x128xf32> to vector<8x128xf32>
    %194 = arith.mulf %192, %193 : vector<8x128xf32>
    %195 = vector.broadcast %174 : vector<1x128xf32> to vector<8x128xf32>
    %196 = arith.addf %194, %195 : vector<8x128xf32>
    %197 = vector.shape_cast %196 : vector<8x128xf32> to vector<1x8x128xf32>
    %198 = arith.truncf %197 : vector<1x8x128xf32> to vector<1x8x128xbf16>
    %199 = vector.shape_cast %198 : vector<1x8x128xbf16> to vector<1x8x128xbf16>
    %200 = vector.broadcast %199 : vector<1x8x128xbf16> to vector<4x8x128xbf16>
    %c1_105 = arith.constant 1 : index
    %c0_106 = arith.constant 0 : index
    %c0_107 = arith.constant 0 : index
    %c0_108 = arith.constant 0 : index
    %201 = vector.load %arg8[%c1_105, %c0_106, %c0_107, %c0_108] : memref<2x4x128x32xbf16, #tpu.memory_space<vmem>>, vector<1x4x128x32xbf16>
    %202 = vector.shape_cast %201 : vector<1x4x128x32xbf16> to vector<4x128x32xbf16>
    %c1_109 = arith.constant 1 : index
    %c0_110 = arith.constant 0 : index
    %c0_111 = arith.constant 0 : index
    %c0_112 = arith.constant 0 : index
    %203 = vector.load %arg10[%c1_109, %c0_110, %c0_111, %c0_112] : memref<2x4x128x32xbf16, #tpu.memory_space<vmem>>, vector<1x4x128x32xbf16>
    %204 = vector.shape_cast %203 : vector<1x4x128x32xbf16> to vector<4x128x32xbf16>
    %c1_113 = arith.constant 1 : index
    %c0_114 = arith.constant 0 : index
    %c0_115 = arith.constant 0 : index
    %c0_116 = arith.constant 0 : index
    %205 = vector.load %arg12[%c1_113, %c0_114, %c0_115, %c0_116] : memref<2x4x128x32xbf16, #tpu.memory_space<vmem>>, vector<1x4x128x32xbf16>
    %206 = vector.shape_cast %205 : vector<1x4x128x32xbf16> to vector<4x128x32xbf16>
    %c1_117 = arith.constant 1 : index
    %c0_118 = arith.constant 0 : index
    %c0_119 = arith.constant 0 : index
    %c0_120 = arith.constant 0 : index
    %207 = vector.load %arg9[%c1_117, %c0_118, %c0_119, %c0_120] : memref<2x4x1x32xf32, #tpu.memory_space<vmem>>, vector<1x4x1x32xf32>
    %208 = vector.shape_cast %207 : vector<1x4x1x32xf32> to vector<4x1x32xf32>
    %c1_121 = arith.constant 1 : index
    %c0_122 = arith.constant 0 : index
    %c0_123 = arith.constant 0 : index
    %c0_124 = arith.constant 0 : index
    %209 = vector.load %arg11[%c1_121, %c0_122, %c0_123, %c0_124] : memref<2x4x1x32xf32, #tpu.memory_space<vmem>>, vector<1x4x1x32xf32>
    %210 = vector.shape_cast %209 : vector<1x4x1x32xf32> to vector<4x1x32xf32>
    %c1_125 = arith.constant 1 : index
    %c0_126 = arith.constant 0 : index
    %c0_127 = arith.constant 0 : index
    %c0_128 = arith.constant 0 : index
    %211 = vector.load %arg13[%c1_125, %c0_126, %c0_127, %c0_128] : memref<2x4x1x32xf32, #tpu.memory_space<vmem>>, vector<1x4x1x32xf32>
    %212 = vector.shape_cast %211 : vector<1x4x1x32xf32> to vector<4x1x32xf32>
    "tpu.trace_start"() <{level = 10 : i32, message = "bsd,bde->bse"}> : () -> ()
    %cst_129 = arith.constant dense<0.000000e+00> : vector<4x8x32xf32>
    %213 = tpu.matmul %200, %202, %cst_129 {dimension_numbers = #tpu.dot_dimension_numbers<[2], [1], [1], [2], [0, 0, 0, 1, 1, 2], [0], [0]>} : vector<4x8x128xbf16>, vector<4x128x32xbf16>, vector<4x8x32xf32> -> vector<4x8x32xf32>
    "tpu.trace_stop"() : () -> ()
    %214 = vector.broadcast %208 : vector<4x1x32xf32> to vector<4x8x32xf32>
    %215 = arith.addf %213, %214 : vector<4x8x32xf32>
    "tpu.trace_start"() <{level = 10 : i32, message = "bsd,bde->bse"}> : () -> ()
    %cst_130 = arith.constant dense<0.000000e+00> : vector<4x8x32xf32>
    %216 = tpu.matmul %200, %204, %cst_130 {dimension_numbers = #tpu.dot_dimension_numbers<[2], [1], [1], [2], [0, 0, 0, 1, 1, 2], [0], [0]>} : vector<4x8x128xbf16>, vector<4x128x32xbf16>, vector<4x8x32xf32> -> vector<4x8x32xf32>
    "tpu.trace_stop"() : () -> ()
    %217 = vector.broadcast %210 : vector<4x1x32xf32> to vector<4x8x32xf32>
    %218 = arith.addf %216, %217 : vector<4x8x32xf32>
    "tpu.trace_start"() <{level = 10 : i32, message = "bsd,bde->bse"}> : () -> ()
    %cst_131 = arith.constant dense<0.000000e+00> : vector<4x8x32xf32>
    %219 = tpu.matmul %200, %206, %cst_131 {dimension_numbers = #tpu.dot_dimension_numbers<[2], [1], [1], [2], [0, 0, 0, 1, 1, 2], [0], [0]>} : vector<4x8x128xbf16>, vector<4x128x32xbf16>, vector<4x8x32xf32> -> vector<4x8x32xf32>
    "tpu.trace_stop"() : () -> ()
    %220 = vector.broadcast %212 : vector<4x1x32xf32> to vector<4x8x32xf32>
    %221 = arith.addf %219, %220 : vector<4x8x32xf32>
    %222 = arith.truncf %215 : vector<4x8x32xf32> to vector<4x8x32xbf16>
    %223 = arith.truncf %218 : vector<4x8x32xf32> to vector<4x8x32xbf16>
    "tpu.trace_start"() <{level = 10 : i32, message = "bqe,bke->bqk"}> : () -> ()
    %cst_132 = arith.constant dense<0.000000e+00> : vector<4x8x8xf32>
    %224 = tpu.matmul %222, %223, %cst_132 {dimension_numbers = #tpu.dot_dimension_numbers<[2], [2], [1], [1], [0, 0, 0, 1, 1, 1], [0], [0]>} : vector<4x8x32xbf16>, vector<4x8x32xbf16>, vector<4x8x8xf32> -> vector<4x8x8xf32>
    "tpu.trace_stop"() : () -> ()
    %225 = arith.addf %224, %37 : vector<4x8x8xf32>
    %cst_133 = arith.constant dense<0xFF800000> : vector<4x8xf32>
    %226 = vector.multi_reduction <maximumf>, %225, %cst_133 [2] : vector<4x8x8xf32> to vector<4x8xf32>
    %227 = vector.shape_cast %226 : vector<4x8xf32> to vector<4x8x1xf32>
    %228 = vector.broadcast %227 : vector<4x8x1xf32> to vector<4x8x8xf32>
    %229 = arith.subf %225, %228 : vector<4x8x8xf32>
    %230 = math.exp %229 : vector<4x8x8xf32>
    %cst_134 = arith.constant dense<0.000000e+00> : vector<4x8xf32>
    %231 = vector.multi_reduction <add>, %230, %cst_134 [2] : vector<4x8x8xf32> to vector<4x8xf32>
    %232 = vector.shape_cast %231 : vector<4x8xf32> to vector<4x8x1xf32>
    %233 = tpu.reciprocal %232 {approx = true} : vector<4x8x1xf32> -> vector<4x8x1xf32>
    %234 = vector.broadcast %233 : vector<4x8x1xf32> to vector<4x8x8xf32>
    %235 = arith.mulf %230, %234 : vector<4x8x8xf32>
    %236 = arith.truncf %235 : vector<4x8x8xf32> to vector<4x8x8xbf16>
    %237 = arith.truncf %221 : vector<4x8x32xf32> to vector<4x8x32xbf16>
    "tpu.trace_start"() <{level = 10 : i32, message = "bqk,bke->bqe"}> : () -> ()
    %cst_135 = arith.constant dense<0.000000e+00> : vector<4x8x32xf32>
    %238 = tpu.matmul %236, %237, %cst_135 {dimension_numbers = #tpu.dot_dimension_numbers<[2], [1], [1], [2], [0, 0, 0, 1, 1, 2], [0], [0]>} : vector<4x8x8xbf16>, vector<4x8x32xbf16>, vector<4x8x32xf32> -> vector<4x8x32xf32>
    "tpu.trace_stop"() : () -> ()
    %239 = arith.truncf %238 : vector<4x8x32xf32> to vector<4x8x32xbf16>
    %c1_136 = arith.constant 1 : index
    %c0_137 = arith.constant 0 : index
    %c0_138 = arith.constant 0 : index
    %c0_139 = arith.constant 0 : index
    %240 = vector.load %arg14[%c1_136, %c0_137, %c0_138, %c0_139] : memref<2x4x32x128xbf16, #tpu.memory_space<vmem>>, vector<1x4x32x128xbf16>
    %241 = vector.shape_cast %240 : vector<1x4x32x128xbf16> to vector<4x32x128xbf16>
    "tpu.trace_start"() <{level = 10 : i32, message = "bse,bed->bsd"}> : () -> ()
    %cst_140 = arith.constant dense<0.000000e+00> : vector<4x8x128xf32>
    %242 = tpu.matmul %239, %241, %cst_140 {dimension_numbers = #tpu.dot_dimension_numbers<[2], [1], [1], [2], [0, 0, 0, 1, 1, 2], [0], [0]>} : vector<4x8x32xbf16>, vector<4x32x128xbf16>, vector<4x8x128xf32> -> vector<4x8x128xf32>
    "tpu.trace_stop"() : () -> ()
    %cst_141 = arith.constant dense<0.000000e+00> : vector<8x128xf32>
    %243 = vector.multi_reduction <add>, %242, %cst_141 [0] : vector<4x8x128xf32> to vector<8x128xf32>
    %c1_142 = arith.constant 1 : index
    %c0_143 = arith.constant 0 : index
    %c0_144 = arith.constant 0 : index
    %244 = vector.load %arg15[%c1_142, %c0_143, %c0_144] : memref<2x1x128xf32, #tpu.memory_space<vmem>>, vector<1x1x128xf32>
    %245 = vector.shape_cast %244 : vector<1x1x128xf32> to vector<1x128xf32>
    %246 = vector.broadcast %245 : vector<1x128xf32> to vector<8x128xf32>
    %247 = arith.addf %243, %246 : vector<8x128xf32>
    %248 = arith.addf %170, %247 : vector<8x128xf32>
    %c1_145 = arith.constant 1 : index
    %c0_146 = arith.constant 0 : index
    %c0_147 = arith.constant 0 : index
    %249 = vector.load %arg16[%c1_145, %c0_146, %c0_147] : memref<2x1x128xf32, #tpu.memory_space<vmem>>, vector<1x1x128xf32>
    %250 = vector.shape_cast %249 : vector<1x1x128xf32> to vector<1x128xf32>
    %c1_148 = arith.constant 1 : index
    %c0_149 = arith.constant 0 : index
    %c0_150 = arith.constant 0 : index
    %251 = vector.load %arg17[%c1_148, %c0_149, %c0_150] : memref<2x1x128xf32, #tpu.memory_space<vmem>>, vector<1x1x128xf32>
    %252 = vector.shape_cast %251 : vector<1x1x128xf32> to vector<1x128xf32>
    %cst_151 = arith.constant dense<0.000000e+00> : vector<8xf32>
    %253 = vector.multi_reduction <add>, %248, %cst_151 [1] : vector<8x128xf32> to vector<8xf32>
    %254 = vector.shape_cast %253 : vector<8xf32> to vector<8x1xf32>
    %cst_152 = arith.constant 1.280000e+02 : f32
    %255 = vector.broadcast %cst_152 : f32 to vector<8x1xf32>
    %256 = arith.divf %254, %255 : vector<8x1xf32>
    %257 = vector.broadcast %256 : vector<8x1xf32> to vector<8x128xf32>
    %258 = arith.subf %248, %257 : vector<8x128xf32>
    %259 = arith.mulf %258, %258 : vector<8x128xf32>
    %cst_153 = arith.constant dense<0.000000e+00> : vector<8xf32>
    %260 = vector.multi_reduction <add>, %259, %cst_153 [1] : vector<8x128xf32> to vector<8xf32>
    %261 = vector.shape_cast %260 : vector<8xf32> to vector<8x1xf32>
    %cst_154 = arith.constant 1.280000e+02 : f32
    %262 = vector.broadcast %cst_154 : f32 to vector<8x1xf32>
    %263 = arith.divf %261, %262 : vector<8x1xf32>
    %264 = vector.broadcast %256 : vector<8x1xf32> to vector<8x128xf32>
    %265 = arith.subf %248, %264 : vector<8x128xf32>
    %cst_155 = arith.constant 9.99999974E-6 : f32
    %266 = vector.broadcast %cst_155 : f32 to vector<8x1xf32>
    %267 = arith.addf %263, %266 : vector<8x1xf32>
    %268 = math.rsqrt %267 : vector<8x1xf32>
    %269 = vector.broadcast %268 : vector<8x1xf32> to vector<8x128xf32>
    %270 = arith.mulf %265, %269 : vector<8x128xf32>
    %271 = vector.broadcast %250 : vector<1x128xf32> to vector<8x128xf32>
    %272 = arith.mulf %270, %271 : vector<8x128xf32>
    %273 = vector.broadcast %252 : vector<1x128xf32> to vector<8x128xf32>
    %274 = arith.addf %272, %273 : vector<8x128xf32>
    %275 = arith.truncf %274 : vector<8x128xf32> to vector<8x128xbf16>
    %c1_156 = arith.constant 1 : index
    %c0_157 = arith.constant 0 : index
    %c0_158 = arith.constant 0 : index
    %276 = vector.load %arg18[%c1_156, %c0_157, %c0_158] : memref<2x128x256xbf16, #tpu.memory_space<vmem>>, vector<1x128x256xbf16>
    %277 = vector.shape_cast %276 : vector<1x128x256xbf16> to vector<128x256xbf16>
    %cst_159 = arith.constant dense<0.000000e+00> : vector<8x256xf32>
    %278 = tpu.matmul %275, %277, %cst_159 {dimension_numbers = #tpu.dot_dimension_numbers<[1], [0], [0], [1], [0, 0, 1, 1], [], []>} : vector<8x128xbf16>, vector<128x256xbf16>, vector<8x256xf32> -> vector<8x256xf32>
    %c1_160 = arith.constant 1 : index
    %c0_161 = arith.constant 0 : index
    %c0_162 = arith.constant 0 : index
    %279 = vector.load %arg19[%c1_160, %c0_161, %c0_162] : memref<2x1x256xf32, #tpu.memory_space<vmem>>, vector<1x1x256xf32>
    %280 = vector.shape_cast %279 : vector<1x1x256xf32> to vector<1x256xf32>
    %281 = vector.broadcast %280 : vector<1x256xf32> to vector<8x256xf32>
    %282 = arith.addf %278, %281 : vector<8x256xf32>
    %cst_163 = arith.constant 1.702000e+00 : f32
    %283 = vector.broadcast %cst_163 : f32 to vector<8x256xf32>
    %284 = arith.mulf %283, %282 : vector<8x256xf32>
    %285 = arith.negf %284 : vector<8x256xf32>
    %286 = math.exp %285 : vector<8x256xf32>
    %cst_164 = arith.constant 1.000000e+00 : f32
    %287 = vector.broadcast %cst_164 : f32 to vector<8x256xf32>
    %288 = arith.addf %287, %286 : vector<8x256xf32>
    %289 = arith.divf %287, %288 : vector<8x256xf32>
    %290 = arith.mulf %282, %289 : vector<8x256xf32>
    %291 = arith.truncf %290 : vector<8x256xf32> to vector<8x256xbf16>
    %c1_165 = arith.constant 1 : index
    %c0_166 = arith.constant 0 : index
    %c0_167 = arith.constant 0 : index
    %292 = vector.load %arg20[%c1_165, %c0_166, %c0_167] : memref<2x256x128xbf16, #tpu.memory_space<vmem>>, vector<1x256x128xbf16>
    %293 = vector.shape_cast %292 : vector<1x256x128xbf16> to vector<256x128xbf16>
    %cst_168 = arith.constant dense<0.000000e+00> : vector<8x128xf32>
    %294 = tpu.matmul %291, %293, %cst_168 {dimension_numbers = #tpu.dot_dimension_numbers<[1], [0], [0], [1], [0, 0, 1, 1], [], []>} : vector<8x256xbf16>, vector<256x128xbf16>, vector<8x128xf32> -> vector<8x128xf32>
    %c1_169 = arith.constant 1 : index
    %c0_170 = arith.constant 0 : index
    %c0_171 = arith.constant 0 : index
    %295 = vector.load %arg21[%c1_169, %c0_170, %c0_171] : memref<2x1x128xf32, #tpu.memory_space<vmem>>, vector<1x1x128xf32>
    %296 = vector.shape_cast %295 : vector<1x1x128xf32> to vector<1x128xf32>
    %297 = vector.broadcast %296 : vector<1x128xf32> to vector<8x128xf32>
    %298 = arith.addf %294, %297 : vector<8x128xf32>
    %299 = arith.addf %248, %298 : vector<8x128xf32>
    %300 = vector.shape_cast %299 : vector<8x128xf32> to vector<1x8x128xf32>
    %301 = vector.shape_cast %25 : vector<8x128xf32> to vector<1x8x128xf32>
    %302 = tpu.concatenate %300, %301 in 2 : vector<1x8x128xf32>, vector<1x8x128xf32> -> vector<1x8x256xf32>
    %c0_172 = arith.constant 0 : index
    %c0_173 = arith.constant 0 : index
    %c0_174 = arith.constant 0 : index
    %303 = vector.load %arg22[%c0_172, %c0_173, %c0_174] : memref<1x8x256xf32, #tpu.memory_space<vmem>>, vector<1x8x256xf32>
    tpu.vector_store %arg22[%c0_172, %c0_173, %c0_174], %302 {strides = array<i32>} : memref<1x8x256xf32, #tpu.memory_space<vmem>>, vector<1x8x256xf32>,
    return
  }
  func.func @transform_0(%arg0: i32) -> (i32, i32, i32) {
    %c0_i32 = arith.constant 0 : i32
    %c0_i32_0 = arith.constant 0 : i32
    %c0_i32_1 = arith.constant 0 : i32
    return %arg0, %c0_i32, %c0_i32_0 : i32, i32, i32
  }
  func.func @transform_1(%arg0: i32) -> (i32, i32, i32) {
    %c0_i32 = arith.constant 0 : i32
    %c0_i32_0 = arith.constant 0 : i32
    %c0_i32_1 = arith.constant 0 : i32
    return %arg0, %c0_i32, %c0_i32_0 : i32, i32, i32
  }
  func.func @transform_2(%arg0: i32) -> (i32, i32) {
    %c0_i32 = arith.constant 0 : i32
    %c0_i32_0 = arith.constant 0 : i32
    %c0_i32_1 = arith.constant 0 : i32
    return %c0_i32, %c0_i32_0 : i32, i32
  }
  func.func @transform_3(%arg0: i32) -> (i32, i32) {
    %c0_i32 = arith.constant 0 : i32
    %c0_i32_0 = arith.constant 0 : i32
    %c0_i32_1 = arith.constant 0 : i32
    return %c0_i32, %c0_i32_0 : i32, i32
  }
  func.func @transform_4(%arg0: i32) -> (i32, i32) {
    %c0_i32 = arith.constant 0 : i32
    %c0_i32_0 = arith.constant 0 : i32
    %c0_i32_1 = arith.constant 0 : i32
    return %c0_i32, %c0_i32_0 : i32, i32
  }
  func.func @transform_5(%arg0: i32) -> (i32, i32, i32) {
    %c0_i32 = arith.constant 0 : i32
    %c0_i32_0 = arith.constant 0 : i32
    %c0_i32_1 = arith.constant 0 : i32
    %c0_i32_2 = arith.constant 0 : i32
    return %c0_i32, %c0_i32_0, %c0_i32_1 : i32, i32, i32
  }
  func.func @transform_6(%arg0: i32) -> (i32, i32, i32) {
    %c0_i32 = arith.constant 0 : i32
    %c0_i32_0 = arith.constant 0 : i32
    %c0_i32_1 = arith.constant 0 : i32
    %c0_i32_2 = arith.constant 0 : i32
    return %c0_i32, %c0_i32_0, %c0_i32_1 : i32, i32, i32
  }
  func.func @transform_7(%arg0: i32) -> (i32, i32, i32, i32) {
    %c0_i32 = arith.constant 0 : i32
    %c0_i32_0 = arith.constant 0 : i32
    %c0_i32_1 = arith.constant 0 : i32
    %c0_i32_2 = arith.constant 0 : i32
    %c0_i32_3 = arith.constant 0 : i32
    return %c0_i32, %c0_i32_0, %c0_i32_1, %c0_i32_2 : i32, i32, i32, i32
  }
  func.func @transform_8(%arg0: i32) -> (i32, i32, i32, i32) {
    %c0_i32 = arith.constant 0 : i32
    %c0_i32_0 = arith.constant 0 : i32
    %c0_i32_1 = arith.constant 0 : i32
    %c0_i32_2 = arith.constant 0 : i32
    %c0_i32_3 = arith.constant 0 : i32
    return %c0_i32, %c0_i32_0, %c0_i32_1, %c0_i32_2 : i32, i32, i32, i32
  }
  func.func @transform_9(%arg0: i32) -> (i32, i32, i32, i32) {
    %c0_i32 = arith.constant 0 : i32
    %c0_i32_0 = arith.constant 0 : i32
    %c0_i32_1 = arith.constant 0 : i32
    %c0_i32_2 = arith.constant 0 : i32
    %c0_i32_3 = arith.constant 0 : i32
    return %c0_i32, %c0_i32_0, %c0_i32_1, %c0_i32_2 : i32, i32, i32, i32
  }
  func.func @transform_10(%arg0: i32) -> (i32, i32, i32, i32) {
    %c0_i32 = arith.constant 0 : i32
    %c0_i32_0 = arith.constant 0 : i32
    %c0_i32_1 = arith.constant 0 : i32
    %c0_i32_2 = arith.constant 0 : i32
    %c0_i32_3 = arith.constant 0 : i32
    return %c0_i32, %c0_i32_0, %c0_i32_1, %c0_i32_2 : i32, i32, i32, i32
  }
  func.func @transform_11(%arg0: i32) -> (i32, i32, i32, i32) {
    %c0_i32 = arith.constant 0 : i32
    %c0_i32_0 = arith.constant 0 : i32
    %c0_i32_1 = arith.constant 0 : i32
    %c0_i32_2 = arith.constant 0 : i32
    %c0_i32_3 = arith.constant 0 : i32
    return %c0_i32, %c0_i32_0, %c0_i32_1, %c0_i32_2 : i32, i32, i32, i32
  }
  func.func @transform_12(%arg0: i32) -> (i32, i32, i32, i32) {
    %c0_i32 = arith.constant 0 : i32
    %c0_i32_0 = arith.constant 0 : i32
    %c0_i32_1 = arith.constant 0 : i32
    %c0_i32_2 = arith.constant 0 : i32
    %c0_i32_3 = arith.constant 0 : i32
    return %c0_i32, %c0_i32_0, %c0_i32_1, %c0_i32_2 : i32, i32, i32, i32
  }
  func.func @transform_13(%arg0: i32) -> (i32, i32, i32, i32) {
    %c0_i32 = arith.constant 0 : i32
    %c0_i32_0 = arith.constant 0 : i32
    %c0_i32_1 = arith.constant 0 : i32
    %c0_i32_2 = arith.constant 0 : i32
    %c0_i32_3 = arith.constant 0 : i32
    return %c0_i32, %c0_i32_0, %c0_i32_1, %c0_i32_2 : i32, i32, i32, i32
  }
  func.func @transform_14(%arg0: i32) -> (i32, i32, i32) {
    %c0_i32 = arith.constant 0 : i32
    %c0_i32_0 = arith.constant 0 : i32
    %c0_i32_1 = arith.constant 0 : i32
    %c0_i32_2 = arith.constant 0 : i32
    return %c0_i32, %c0_i32_0, %c0_i32_1 : i32, i32, i32
  }
  func.func @transform_15(%arg0: i32) -> (i32, i32, i32) {
    %c0_i32 = arith.constant 0 : i32
    %c0_i32_0 = arith.constant 0 : i32
    %c0_i32_1 = arith.constant 0 : i32
    %c0_i32_2 = arith.constant 0 : i32
    return %c0_i32, %c0_i32_0, %c0_i32_1 : i32, i32, i32
  }
  func.func @transform_16(%arg0: i32) -> (i32, i32, i32) {
    %c0_i32 = arith.constant 0 : i32
    %c0_i32_0 = arith.constant 0 : i32
    %c0_i32_1 = arith.constant 0 : i32
    %c0_i32_2 = arith.constant 0 : i32
    return %c0_i32, %c0_i32_0, %c0_i32_1 : i32, i32, i32
  }
  func.func @transform_17(%arg0: i32) -> (i32, i32, i32) {
    %c0_i32 = arith.constant 0 : i32
    %c0_i32_0 = arith.constant 0 : i32
    %c0_i32_1 = arith.constant 0 : i32
    %c0_i32_2 = arith.constant 0 : i32
    return %c0_i32, %c0_i32_0, %c0_i32_1 : i32, i32, i32
  }
  func.func @transform_18(%arg0: i32) -> (i32, i32, i32) {
    %c0_i32 = arith.constant 0 : i32
    %c0_i32_0 = arith.constant 0 : i32
    %c0_i32_1 = arith.constant 0 : i32
    %c0_i32_2 = arith.constant 0 : i32
    return %c0_i32, %c0_i32_0, %c0_i32_1 : i32, i32, i32
  }
  func.func @transform_19(%arg0: i32) -> (i32, i32, i32) {
    %c0_i32 = arith.constant 0 : i32
    %c0_i32_0 = arith.constant 0 : i32
    %c0_i32_1 = arith.constant 0 : i32
    %c0_i32_2 = arith.constant 0 : i32
    return %c0_i32, %c0_i32_0, %c0_i32_1 : i32, i32, i32
  }
  func.func @transform_20(%arg0: i32) -> (i32, i32, i32) {
    %c0_i32 = arith.constant 0 : i32
    %c0_i32_0 = arith.constant 0 : i32
    %c0_i32_1 = arith.constant 0 : i32
    %c0_i32_2 = arith.constant 0 : i32
    return %c0_i32, %c0_i32_0, %c0_i32_1 : i32, i32, i32
  }
  func.func @transform_21(%arg0: i32) -> (i32, i32, i32) {
    %c0_i32 = arith.constant 0 : i32
    %c0_i32_0 = arith.constant 0 : i32
    %c0_i32_1 = arith.constant 0 : i32
    return %arg0, %c0_i32, %c0_i32_0 : i32, i32, i32
  }
}

</mosaic_0001>

<llo_original>
// kernel: clip_embedder_forward.1
$region0: #{clip_embedder_forward.1}
  #allocation0 [shape = 'u32[]', space=smem, size = 0x4, offset = 0x4, fixed_abs, tag = 'smem constant byte address 0x4 - core index']
  #allocation1 [shape = 'u32[144,128]{1,0:T(1,128)}', space=vmem, size = 0x12000, scoped, tag = 'internal scratch']
  %s0 = inlined_call_operand.vmem [shape: f32[2,1,8], index: 0, kind: input, shape index: {}]
  %s1 = inlined_call_operand.vmem [shape: f32[2,8,128], index: 1, kind: input, shape index: {}]
  %s2 = inlined_call_operand.vmem [shape: f32[8,128], index: 2, kind: input, shape index: {}]
  %s3 = inlined_call_operand.vmem [shape: f32[1,128], index: 3, kind: input, shape index: {}]
  %s4 = inlined_call_operand.vmem [shape: f32[1,128], index: 4, kind: input, shape index: {}]
  %s5 = inlined_call_operand.vmem [shape: f32[2,1,128], index: 5, kind: input, shape index: {}]
  %s6 = inlined_call_operand.vmem [shape: f32[2,1,128], index: 6, kind: input, shape index: {}]
  %s7 = inlined_call_operand.vmem [shape: bf16[2,4,128,32], index: 7, kind: input, shape index: {}]
  %s8 = inlined_call_operand.vmem [shape: f32[2,4,1,32], index: 8, kind: input, shape index: {}]
  %s9 = inlined_call_operand.vmem [shape: bf16[2,4,128,32], index: 9, kind: input, shape index: {}]
  %s10 = inlined_call_operand.vmem [shape: f32[2,4,1,32], index: 10, kind: input, shape index: {}]
  %s11 = inlined_call_operand.vmem [shape: bf16[2,4,128,32], index: 11, kind: input, shape index: {}]
  %s12 = inlined_call_operand.vmem [shape: f32[2,4,1,32], index: 12, kind: input, shape index: {}]
  %s13 = inlined_call_operand.vmem [shape: bf16[2,4,32,128], index: 13, kind: input, shape index: {}]
  %s14 = inlined_call_operand.vmem [shape: f32[2,1,128], index: 14, kind: input, shape index: {}]
  %s15 = inlined_call_operand.vmem [shape: f32[2,1,128], index: 15, kind: input, shape index: {}]
  %s16 = inlined_call_operand.vmem [shape: f32[2,1,128], index: 16, kind: input, shape index: {}]
  %s17 = inlined_call_operand.vmem [shape: bf16[2,128,256], index: 17, kind: input, shape index: {}]
  %s18 = inlined_call_operand.vmem [shape: f32[2,1,256], index: 18, kind: input, shape index: {}]
  %s19 = inlined_call_operand.vmem [shape: bf16[2,256,128], index: 19, kind: input, shape index: {}]
  %s20 = inlined_call_operand.vmem [shape: f32[2,1,128], index: 20, kind: input, shape index: {}]
  %s21 = inlined_call_operand.hbm [shape: f32[2,8,256], index: 21, kind: output, shape index: {}]
  %s22 = sld [smem:[#allocation0]]
  $region117: #{clip_embedder_forward.1} parent=0
    _
  %s24 = ssub.s32 1, %s22
  %s25 = scalar_select 0, %s24, %s22
  $region1: #{clip_embedder_forward.1} parent=0
    #allocation2 [shape = 'u8[16384]{0}', space=vmem, size = 0x4000, scoped, tag = 'output window, operand 0']
    #allocation3 [shape = 's32[2]{0}', space=sflag, size = 0x8, scoped, tag = 'scoped memory for clip_embedder_forward.1']
    %26 = vsyncpa [#allocation3], 0
    %s27 = scalar_lea.sflag [#allocation3], 1
    %28 = vsyncpa %s27, 0
    loop: start=0, step=1, limit=4
    $region2: #{clip_embedder_forward.1} parent=1 // loop_pre_header
      _
    $region3: #{clip_embedder_forward.1} parent=1 // loop_header
      %s30 = sphi 0, %s34
      %p31 = scmp.ge.s32.totalorder %s30, 4
      %s40 = sphi 0, %s42
      %s43 = sphi 0, %s40
      %s44 = sphi 0, %s43
      %s60 = sphi 0, %s44
      %s66 = sphi 0, %s68
      %s69 = sphi 0, %s66
      %s70 = sphi 0, %s69
      %s86 = sphi 0, %s70
      %s90 = sphi 0, %s90
      %s92 = sphi 0, %s90
      %s93 = sphi 0, %s92
      %s107 = sphi 0, %s93
      %s111 = sphi 0, %s111
      %s113 = sphi 0, %s111
      %s114 = sphi 0, %s113
      %s128 = sphi 0, %s114
      %s132 = sphi 0, %s132
      %s134 = sphi 0, %s132
      %s135 = sphi 0, %s134
      %s149 = sphi 0, %s135
      %s153 = sphi 0, %s153
      %s155 = sphi 0, %s153
      %s156 = sphi 0, %s155
      %s170 = sphi 0, %s156
      %s174 = sphi 0, %s174
      %s176 = sphi 0, %s174
      %s177 = sphi 0, %s176
      %s191 = sphi 0, %s177
      %s195 = sphi 0, %s195
      %s197 = sphi 0, %s195
      %s198 = sphi 0, %s197
      %s212 = sphi 0, %s198
      %s216 = sphi 0, %s216
      %s218 = sphi 0, %s216
      %s219 = sphi 0, %s218
      %s233 = sphi 0, %s219
      %s237 = sphi 0, %s237
      %s239 = sphi 0, %s237
      %s240 = sphi 0, %s239
      %s254 = sphi 0, %s240
      %s258 = sphi 0, %s258
      %s260 = sphi 0, %s258
      %s261 = sphi 0, %s260
      %s275 = sphi 0, %s261
      %s279 = sphi 0, %s279
      %s281 = sphi 0, %s279
      %s282 = sphi 0, %s281
      %s296 = sphi 0, %s282
      %s300 = sphi 0, %s300
      %s302 = sphi 0, %s300
      %s303 = sphi 0, %s302
      %s317 = sphi 0, %s303
      %s321 = sphi 0, %s321
      %s323 = sphi 0, %s321
      %s324 = sphi 0, %s323
      %s338 = sphi 0, %s324
      %s342 = sphi 0, %s342
      %s344 = sphi 0, %s342
      %s345 = sphi 0, %s344
      %s359 = sphi 0, %s345
      %s363 = sphi 0, %s363
      %s365 = sphi 0, %s363
      %s366 = sphi 0, %s365
      %s380 = sphi 0, %s366
      %s384 = sphi 0, %s384
      %s386 = sphi 0, %s384
      %s387 = sphi 0, %s386
      %s401 = sphi 0, %s387
      %s405 = sphi 0, %s405
      %s407 = sphi 0, %s405
      %s408 = sphi 0, %s407
      %s422 = sphi 0, %s408
      %s426 = sphi 0, %s426
      %s428 = sphi 0, %s426
      %s429 = sphi 0, %s428
      %s443 = sphi 0, %s429
      %s447 = sphi 0, %s447
      %s449 = sphi 0, %s447
      %s450 = sphi 0, %s449
      %s464 = sphi 0, %s450
      %s468 = sphi 0, %s468
      %s470 = sphi 0, %s468
      %s471 = sphi 0, %s470
      %s485 = sphi 0, %s471
      %s491 = sphi 0, %s493
      %s494 = sphi 0, %s491
      %s495 = sphi 0, %s494
      %s511 = sphi 0, %s495
    $region4: #{clip_embedder_forward.1} parent=1 // loop_header_branch
      %33 = sbr.rel (%p31) target = $region8
    $region5: #{clip_embedder_forward.1} parent=1 // loop_body
      %s35 = ssub.s32 %s30, 1
      %s36 = ssub.s32 %s30, 2
      %s37 = sadd.s32 %s30, 1
      %s38 = ssub.s32 %s30, %s37
      %p39 = scmp.eq.s32.totalorder %s38, 0
      %s41 = sadd.s32 %s40, 1
      %s42 = scalar_select %p39, %s40, %s41
      %p45 = pneg %p39
      %p46 = scmp.eq.s32.totalorder %s30, 1
      %p47 = por %p45, %p46
      %p48 = scmp.ne.s32.totalorder %s40, %s43
      %p49 = scmp.eq.s32.totalorder %s30, 0
      %p50 = por %p48, %p49
      %p51 = scmp.ne.s32.totalorder %s40, %s43
      %p52 = scmp.eq.s32.totalorder %s35, 1
      %p53 = por %p51, %p52
      %p54 = scmp.ne.s32.totalorder %s43, %s44
      %p55 = scmp.eq.s32.totalorder %s35, 0
      %p56 = por %p54, %p55
      %p57 = scmp.ne.s32.totalorder %s43, %s44
      %p58 = scmp.eq.s32.totalorder %s36, 1
      %p59 = por %p57, %p58
      %p61 = scmp.ne.s32.totalorder %s44, %s60
      %p62 = scmp.eq.s32.totalorder %s36, 0
      %p63 = por %p61, %p62
      %s64 = ssub.s32 %s30, %s37
      %p65 = scmp.eq.s32.totalorder %s64, 0
      %s67 = sadd.s32 %s66, 1
      %s68 = scalar_select %p65, %s66, %s67
      %p71 = pneg %p65
      %p72 = scmp.eq.s32.totalorder %s30, 1
      %p73 = por %p71, %p72
      %p74 = scmp.ne.s32.totalorder %s66, %s69
      %p75 = scmp.eq.s32.totalorder %s30, 0
      %p76 = por %p74, %p75
      %p77 = scmp.ne.s32.totalorder %s66, %s69
      %p78 = scmp.eq.s32.totalorder %s35, 1
      %p79 = por %p77, %p78
      %p80 = scmp.ne.s32.totalorder %s69, %s70
      %p81 = scmp.eq.s32.totalorder %s35, 0
      %p82 = por %p80, %p81
      %p83 = scmp.ne.s32.totalorder %s69, %s70
      %p84 = scmp.eq.s32.totalorder %s36, 1
      %p85 = por %p83, %p84
      %p87 = scmp.ne.s32.totalorder %s70, %s86
      %p88 = scmp.eq.s32.totalorder %s36, 0
      %p89 = por %p87, %p88
      %s91 = sadd.s32 %s90, 1
      %p94 = scmp.eq.s32.totalorder %s30, 1
      %p95 = scmp.ne.s32.totalorder %s90, %s92
      %p96 = scmp.eq.s32.totalorder %s30, 0
      %p97 = por %p95, %p96
      %p98 = scmp.ne.s32.totalorder %s90, %s92
      %p99 = scmp.eq.s32.totalorder %s35, 1
      %p100 = por %p98, %p99
      %p101 = scmp.ne.s32.totalorder %s92, %s93
      %p102 = scmp.eq.s32.totalorder %s35, 0
      %p103 = por %p101, %p102
      %p104 = scmp.ne.s32.totalorder %s92, %s93
      %p105 = scmp.eq.s32.totalorder %s36, 1
      %p106 = por %p104, %p105
      %p108 = scmp.ne.s32.totalorder %s93, %s107
      %p109 = scmp.eq.s32.totalorder %s36, 0
      %p110 = por %p108, %p109
      %s112 = sadd.s32 %s111, 1
      %p115 = scmp.eq.s32.totalorder %s30, 1
      %p116 = scmp.ne.s32.totalorder %s111, %s113
      %p117 = scmp.eq.s32.totalorder %s30, 0
      %p118 = por %p116, %p117
      %p119 = scmp.ne.s32.totalorder %s111, %s113
      %p120 = scmp.eq.s32.totalorder %s35, 1
      %p121 = por %p119, %p120
      %p122 = scmp.ne.s32.totalorder %s113, %s114
      %p123 = scmp.eq.s32.totalorder %s35, 0
      %p124 = por %p122, %p123
      %p125 = scmp.ne.s32.totalorder %s113, %s114
      %p126 = scmp.eq.s32.totalorder %s36, 1
      %p127 = por %p125, %p126
      %p129 = scmp.ne.s32.totalorder %s114, %s128
      %p130 = scmp.eq.s32.totalorder %s36, 0
      %p131 = por %p129, %p130
      %s133 = sadd.s32 %s132, 1
      %p136 = scmp.eq.s32.totalorder %s30, 1
      %p137 = scmp.ne.s32.totalorder %s132, %s134
      %p138 = scmp.eq.s32.totalorder %s30, 0
      %p139 = por %p137, %p138
      %p140 = scmp.ne.s32.totalorder %s132, %s134
      %p141 = scmp.eq.s32.totalorder %s35, 1
      %p142 = por %p140, %p141
      %p143 = scmp.ne.s32.totalorder %s134, %s135
      %p144 = scmp.eq.s32.totalorder %s35, 0
      %p145 = por %p143, %p144
      %p146 = scmp.ne.s32.totalorder %s134, %s135
      %p147 = scmp.eq.s32.totalorder %s36, 1
      %p148 = por %p146, %p147
      %p150 = scmp.ne.s32.totalorder %s135, %s149
      %p151 = scmp.eq.s32.totalorder %s36, 0
      %p152 = por %p150, %p151
      %s154 = sadd.s32 %s153, 1
      %p157 = scmp.eq.s32.totalorder %s30, 1
      %p158 = scmp.ne.s32.totalorder %s153, %s155
      %p159 = scmp.eq.s32.totalorder %s30, 0
      %p160 = por %p158, %p159
      %p161 = scmp.ne.s32.totalorder %s153, %s155
      %p162 = scmp.eq.s32.totalorder %s35, 1
      %p163 = por %p161, %p162
      %p164 = scmp.ne.s32.totalorder %s155, %s156
      %p165 = scmp.eq.s32.totalorder %s35, 0
      %p166 = por %p164, %p165
      %p167 = scmp.ne.s32.totalorder %s155, %s156
      %p168 = scmp.eq.s32.totalorder %s36, 1
      %p169 = por %p167, %p168
      %p171 = scmp.ne.s32.totalorder %s156, %s170
      %p172 = scmp.eq.s32.totalorder %s36, 0
      %p173 = por %p171, %p172
      %s175 = sadd.s32 %s174, 1
      %p178 = scmp.eq.s32.totalorder %s30, 1
      %p179 = scmp.ne.s32.totalorder %s174, %s176
      %p180 = scmp.eq.s32.totalorder %s30, 0
      %p181 = por %p179, %p180
      %p182 = scmp.ne.s32.totalorder %s174, %s176
      %p183 = scmp.eq.s32.totalorder %s35, 1
      %p184 = por %p182, %p183
      %p185 = scmp.ne.s32.totalorder %s176, %s177
      %p186 = scmp.eq.s32.totalorder %s35, 0
      %p187 = por %p185, %p186
      %p188 = scmp.ne.s32.totalorder %s176, %s177
      %p189 = scmp.eq.s32.totalorder %s36, 1
      %p190 = por %p188, %p189
      %p192 = scmp.ne.s32.totalorder %s177, %s191
      %p193 = scmp.eq.s32.totalorder %s36, 0
      %p194 = por %p192, %p193
      %s196 = sadd.s32 %s195, 1
      %p199 = scmp.eq.s32.totalorder %s30, 1
      %p200 = scmp.ne.s32.totalorder %s195, %s197
      %p201 = scmp.eq.s32.totalorder %s30, 0
      %p202 = por %p200, %p201
      %p203 = scmp.ne.s32.totalorder %s195, %s197
      %p204 = scmp.eq.s32.totalorder %s35, 1
      %p205 = por %p203, %p204
      %p206 = scmp.ne.s32.totalorder %s197, %s198
      %p207 = scmp.eq.s32.totalorder %s35, 0
      %p208 = por %p206, %p207
      %p209 = scmp.ne.s32.totalorder %s197, %s198
      %p210 = scmp.eq.s32.totalorder %s36, 1
      %p211 = por %p209, %p210
      %p213 = scmp.ne.s32.totalorder %s198, %s212
      %p214 = scmp.eq.s32.totalorder %s36, 0
      %p215 = por %p213, %p214
      %s217 = sadd.s32 %s216, 1
      %p220 = scmp.eq.s32.totalorder %s30, 1
      %p221 = scmp.ne.s32.totalorder %s216, %s218
      %p222 = scmp.eq.s32.totalorder %s30, 0
      %p223 = por %p221, %p222
      %p224 = scmp.ne.s32.totalorder %s216, %s218
      %p225 = scmp.eq.s32.totalorder %s35, 1
      %p226 = por %p224, %p225
      %p227 = scmp.ne.s32.totalorder %s218, %s219
      %p228 = scmp.eq.s32.totalorder %s35, 0
      %p229 = por %p227, %p228
      %p230 = scmp.ne.s32.totalorder %s218, %s219
      %p231 = scmp.eq.s32.totalorder %s36, 1
      %p232 = por %p230, %p231
      %p234 = scmp.ne.s32.totalorder %s219, %s233
      %p235 = scmp.eq.s32.totalorder %s36, 0
      %p236 = por %p234, %p235
      %s238 = sadd.s32 %s237, 1
      %p241 = scmp.eq.s32.totalorder %s30, 1
      %p242 = scmp.ne.s32.totalorder %s237, %s239
      %p243 = scmp.eq.s32.totalorder %s30, 0
      %p244 = por %p242, %p243
      %p245 = scmp.ne.s32.totalorder %s237, %s239
      %p246 = scmp.eq.s32.totalorder %s35, 1
      %p247 = por %p245, %p246
      %p248 = scmp.ne.s32.totalorder %s239, %s240
      %p249 = scmp.eq.s32.totalorder %s35, 0
      %p250 = por %p248, %p249
      %p251 = scmp.ne.s32.totalorder %s239, %s240
      %p252 = scmp.eq.s32.totalorder %s36, 1
      %p253 = por %p251, %p252
      %p255 = scmp.ne.s32.totalorder %s240, %s254
      %p256 = scmp.eq.s32.totalorder %s36, 0
      %p257 = por %p255, %p256
      %s259 = sadd.s32 %s258, 1
      %p262 = scmp.eq.s32.totalorder %s30, 1
      %p263 = scmp.ne.s32.totalorder %s258, %s260
      %p264 = scmp.eq.s32.totalorder %s30, 0
      %p265 = por %p263, %p264
      %p266 = scmp.ne.s32.totalorder %s258, %s260
      %p267 = scmp.eq.s32.totalorder %s35, 1
      %p268 = por %p266, %p267
      %p269 = scmp.ne.s32.totalorder %s260, %s261
      %p270 = scmp.eq.s32.totalorder %s35, 0
      %p271 = por %p269, %p270
      %p272 = scmp.ne.s32.totalorder %s260, %s261
      %p273 = scmp.eq.s32.totalorder %s36, 1
      %p274 = por %p272, %p273
      %p276 = scmp.ne.s32.totalorder %s261, %s275
      %p277 = scmp.eq.s32.totalorder %s36, 0
      %p278 = por %p276, %p277
      %s280 = sadd.s32 %s279, 1
      %p283 = scmp.eq.s32.totalorder %s30, 1
      %p284 = scmp.ne.s32.totalorder %s279, %s281
      %p285 = scmp.eq.s32.totalorder %s30, 0
      %p286 = por %p284, %p285
      %p287 = scmp.ne.s32.totalorder %s279, %s281
      %p288 = scmp.eq.s32.totalorder %s35, 1
      %p289 = por %p287, %p288
      %p290 = scmp.ne.s32.totalorder %s281, %s282
      %p291 = scmp.eq.s32.totalorder %s35, 0
      %p292 = por %p290, %p291
      %p293 = scmp.ne.s32.totalorder %s281, %s282
      %p294 = scmp.eq.s32.totalorder %s36, 1
      %p295 = por %p293, %p294
      %p297 = scmp.ne.s32.totalorder %s282, %s296
      %p298 = scmp.eq.s32.totalorder %s36, 0
      %p299 = por %p297, %p298
      %s301 = sadd.s32 %s300, 1
      %p304 = scmp.eq.s32.totalorder %s30, 1
      %p305 = scmp.ne.s32.totalorder %s300, %s302
      %p306 = scmp.eq.s32.totalorder %s30, 0
      %p307 = por %p305, %p306
      %p308 = scmp.ne.s32.totalorder %s300, %s302
      %p309 = scmp.eq.s32.totalorder %s35, 1
      %p310 = por %p308, %p309
      %p311 = scmp.ne.s32.totalorder %s302, %s303
      %p312 = scmp.eq.s32.totalorder %s35, 0
      %p313 = por %p311, %p312
      %p314 = scmp.ne.s32.totalorder %s302, %s303
      %p315 = scmp.eq.s32.totalorder %s36, 1
      %p316 = por %p314, %p315
      %p318 = scmp.ne.s32.totalorder %s303, %s317
      %p319 = scmp.eq.s32.totalorder %s36, 0
      %p320 = por %p318, %p319
      %s322 = sadd.s32 %s321, 1
      %p325 = scmp.eq.s32.totalorder %s30, 1
      %p326 = scmp.ne.s32.totalorder %s321, %s323
      %p327 = scmp.eq.s32.totalorder %s30, 0
      %p328 = por %p326, %p327
      %p329 = scmp.ne.s32.totalorder %s321, %s323
      %p330 = scmp.eq.s32.totalorder %s35, 1
      %p331 = por %p329, %p330
      %p332 = scmp.ne.s32.totalorder %s323, %s324
      %p333 = scmp.eq.s32.totalorder %s35, 0
      %p334 = por %p332, %p333
      %p335 = scmp.ne.s32.totalorder %s323, %s324
      %p336 = scmp.eq.s32.totalorder %s36, 1
      %p337 = por %p335, %p336
      %p339 = scmp.ne.s32.totalorder %s324, %s338
      %p340 = scmp.eq.s32.totalorder %s36, 0
      %p341 = por %p339, %p340
      %s343 = sadd.s32 %s342, 1
      %p346 = scmp.eq.s32.totalorder %s30, 1
      %p347 = scmp.ne.s32.totalorder %s342, %s344
      %p348 = scmp.eq.s32.totalorder %s30, 0
      %p349 = por %p347, %p348
      %p350 = scmp.ne.s32.totalorder %s342, %s344
      %p351 = scmp.eq.s32.totalorder %s35, 1
      %p352 = por %p350, %p351
      %p353 = scmp.ne.s32.totalorder %s344, %s345
      %p354 = scmp.eq.s32.totalorder %s35, 0
      %p355 = por %p353, %p354
      %p356 = scmp.ne.s32.totalorder %s344, %s345
      %p357 = scmp.eq.s32.totalorder %s36, 1
      %p358 = por %p356, %p357
      %p360 = scmp.ne.s32.totalorder %s345, %s359
      %p361 = scmp.eq.s32.totalorder %s36, 0
      %p362 = por %p360, %p361
      %s364 = sadd.s32 %s363, 1
      %p367 = scmp.eq.s32.totalorder %s30, 1
      %p368 = scmp.ne.s32.totalorder %s363, %s365
      %p369 = scmp.eq.s32.totalorder %s30, 0
      %p370 = por %p368, %p369
      %p371 = scmp.ne.s32.totalorder %s363, %s365
      %p372 = scmp.eq.s32.totalorder %s35, 1
      %p373 = por %p371, %p372
      %p374 = scmp.ne.s32.totalorder %s365, %s366
      %p375 = scmp.eq.s32.totalorder %s35, 0
      %p376 = por %p374, %p375
      %p377 = scmp.ne.s32.totalorder %s365, %s366
      %p378 = scmp.eq.s32.totalorder %s36, 1
      %p379 = por %p377, %p378
      %p381 = scmp.ne.s32.totalorder %s366, %s380
      %p382 = scmp.eq.s32.totalorder %s36, 0
      %p383 = por %p381, %p382
      %s385 = sadd.s32 %s384, 1
      %p388 = scmp.eq.s32.totalorder %s30, 1
      %p389 = scmp.ne.s32.totalorder %s384, %s386
      %p390 = scmp.eq.s32.totalorder %s30, 0
      %p391 = por %p389, %p390
      %p392 = scmp.ne.s32.totalorder %s384, %s386
      %p393 = scmp.eq.s32.totalorder %s35, 1
      %p394 = por %p392, %p393
      %p395 = scmp.ne.s32.totalorder %s386, %s387
      %p396 = scmp.eq.s32.totalorder %s35, 0
      %p397 = por %p395, %p396
      %p398 = scmp.ne.s32.totalorder %s386, %s387
      %p399 = scmp.eq.s32.totalorder %s36, 1
      %p400 = por %p398, %p399
      %p402 = scmp.ne.s32.totalorder %s387, %s401
      %p403 = scmp.eq.s32.totalorder %s36, 0
      %p404 = por %p402, %p403
      %s406 = sadd.s32 %s405, 1
      %p409 = scmp.eq.s32.totalorder %s30, 1
      %p410 = scmp.ne.s32.totalorder %s405, %s407
      %p411 = scmp.eq.s32.totalorder %s30, 0
      %p412 = por %p410, %p411
      %p413 = scmp.ne.s32.totalorder %s405, %s407
      %p414 = scmp.eq.s32.totalorder %s35, 1
      %p415 = por %p413, %p414
      %p416 = scmp.ne.s32.totalorder %s407, %s408
      %p417 = scmp.eq.s32.totalorder %s35, 0
      %p418 = por %p416, %p417
      %p419 = scmp.ne.s32.totalorder %s407, %s408
      %p420 = scmp.eq.s32.totalorder %s36, 1
      %p421 = por %p419, %p420
      %p423 = scmp.ne.s32.totalorder %s408, %s422
      %p424 = scmp.eq.s32.totalorder %s36, 0
      %p425 = por %p423, %p424
      %s427 = sadd.s32 %s426, 1
      %p430 = scmp.eq.s32.totalorder %s30, 1
      %p431 = scmp.ne.s32.totalorder %s426, %s428
      %p432 = scmp.eq.s32.totalorder %s30, 0
      %p433 = por %p431, %p432
      %p434 = scmp.ne.s32.totalorder %s426, %s428
      %p435 = scmp.eq.s32.totalorder %s35, 1
      %p436 = por %p434, %p435
      %p437 = scmp.ne.s32.totalorder %s428, %s429
      %p438 = scmp.eq.s32.totalorder %s35, 0
      %p439 = por %p437, %p438
      %p440 = scmp.ne.s32.totalorder %s428, %s429
      %p441 = scmp.eq.s32.totalorder %s36, 1
      %p442 = por %p440, %p441
      %p444 = scmp.ne.s32.totalorder %s429, %s443
      %p445 = scmp.eq.s32.totalorder %s36, 0
      %p446 = por %p444, %p445
      %s448 = sadd.s32 %s447, 1
      %p451 = scmp.eq.s32.totalorder %s30, 1
      %p452 = scmp.ne.s32.totalorder %s447, %s449
      %p453 = scmp.eq.s32.totalorder %s30, 0
      %p454 = por %p452, %p453
      %p455 = scmp.ne.s32.totalorder %s447, %s449
      %p456 = scmp.eq.s32.totalorder %s35, 1
      %p457 = por %p455, %p456
      %p458 = scmp.ne.s32.totalorder %s449, %s450
      %p459 = scmp.eq.s32.totalorder %s35, 0
      %p460 = por %p458, %p459
      %p461 = scmp.ne.s32.totalorder %s449, %s450
      %p462 = scmp.eq.s32.totalorder %s36, 1
      %p463 = por %p461, %p462
      %p465 = scmp.ne.s32.totalorder %s450, %s464
      %p466 = scmp.eq.s32.totalorder %s36, 0
      %p467 = por %p465, %p466
      %s469 = sadd.s32 %s468, 1
      %p472 = scmp.eq.s32.totalorder %s30, 1
      %p473 = scmp.ne.s32.totalorder %s468, %s470
      %p474 = scmp.eq.s32.totalorder %s30, 0
      %p475 = por %p473, %p474
      %p476 = scmp.ne.s32.totalorder %s468, %s470
      %p477 = scmp.eq.s32.totalorder %s35, 1
      %p478 = por %p476, %p477
      %p479 = scmp.ne.s32.totalorder %s470, %s471
      %p480 = scmp.eq.s32.totalorder %s35, 0
      %p481 = por %p479, %p480
      %p482 = scmp.ne.s32.totalorder %s470, %s471
      %p483 = scmp.eq.s32.totalorder %s36, 1
      %p484 = por %p482, %p483
      %p486 = scmp.ne.s32.totalorder %s471, %s485
      %p487 = scmp.eq.s32.totalorder %s36, 0
      %p488 = por %p486, %p487
      %s489 = ssub.s32 %s30, %s37
      %p490 = scmp.eq.s32.totalorder %s489, 0
      %s492 = sadd.s32 %s491, 1
      %s493 = scalar_select %p490, %s491, %s492
      %p496 = pneg %p490
      %p497 = scmp.eq.s32.totalorder %s30, 1
      %p498 = por %p496, %p497
      %p499 = scmp.ne.s32.totalorder %s491, %s494
      %p500 = scmp.eq.s32.totalorder %s30, 0
      %p501 = por %p499, %p500
      %p502 = scmp.ne.s32.totalorder %s491, %s494
      %p503 = scmp.eq.s32.totalorder %s35, 1
      %p504 = por %p502, %p503
      %p505 = scmp.ne.s32.totalorder %s494, %s495
      %p506 = scmp.eq.s32.totalorder %s35, 0
      %p507 = por %p505, %p506
      %p508 = scmp.ne.s32.totalorder %s494, %s495
      %p509 = scmp.eq.s32.totalorder %s36, 1
      %p510 = por %p508, %p509
      %p512 = scmp.ne.s32.totalorder %s495, %s511
      %p513 = scmp.eq.s32.totalorder %s36, 0
      %p514 = por %p512, %p513
      %p515 = scmp.le.s32.totalorder 1, %s30
      %p516 = scmp.lt.s32.totalorder %s30, 3
      %p517 = pnand %p515, %p516
      %p518 = pneg %p517
      // Predicated region
      $region9: #{clip_embedder_forward.1} parent=5 // pred_check
        _
      $region10: #{clip_embedder_forward.1} parent=5 // pred_check_branch
        %520 = sbr.rel (%p517) target = $region12
      $region11: #{clip_embedder_forward.1} parent=5 // pred_region
        %s521 = ssub.s32 %s30, 1
        // Predicated region
        $region13: #{clip_embedder_forward.1} parent=11 // pred_check
          %p522 = pneg %p103
        $region14: #{clip_embedder_forward.1} parent=11 // pred_check_branch
          %524 = sbr.rel (%p522) target = $region16
        $region15: #{clip_embedder_forward.1} parent=11 // pred_region
          _
        $region16: #{clip_embedder_forward.1} parent=11 // pred_fallthru
          _
        // Predicated region
        $region17: #{clip_embedder_forward.1} parent=11 // pred_check
          %p525 = pneg %p124
        $region18: #{clip_embedder_forward.1} parent=11 // pred_check_branch
          %527 = sbr.rel (%p525) target = $region20
        $region19: #{clip_embedder_forward.1} parent=11 // pred_region
          _
        $region20: #{clip_embedder_forward.1} parent=11 // pred_fallthru
          _
        // Predicated region
        $region21: #{clip_embedder_forward.1} parent=11 // pred_check
          %p528 = pneg %p145
        $region22: #{clip_embedder_forward.1} parent=11 // pred_check_branch
          %530 = sbr.rel (%p528) target = $region24
        $region23: #{clip_embedder_forward.1} parent=11 // pred_region
          _
        $region24: #{clip_embedder_forward.1} parent=11 // pred_fallthru
          _
        // Predicated region
        $region25: #{clip_embedder_forward.1} parent=11 // pred_check
          %p531 = pneg %p166
        $region26: #{clip_embedder_forward.1} parent=11 // pred_check_branch
          %533 = sbr.rel (%p531) target = $region28
        $region27: #{clip_embedder_forward.1} parent=11 // pred_region
          _
        $region28: #{clip_embedder_forward.1} parent=11 // pred_fallthru
          _
        // Predicated region
        $region29: #{clip_embedder_forward.1} parent=11 // pred_check
          %p534 = pneg %p187
        $region30: #{clip_embedder_forward.1} parent=11 // pred_check_branch
          %536 = sbr.rel (%p534) target = $region32
        $region31: #{clip_embedder_forward.1} parent=11 // pred_region
          _
        $region32: #{clip_embedder_forward.1} parent=11 // pred_fallthru
          _
        // Predicated region
        $region33: #{clip_embedder_forward.1} parent=11 // pred_check
          %p537 = pneg %p208
        $region34: #{clip_embedder_forward.1} parent=11 // pred_check_branch
          %539 = sbr.rel (%p537) target = $region36
        $region35: #{clip_embedder_forward.1} parent=11 // pred_region
          _
        $region36: #{clip_embedder_forward.1} parent=11 // pred_fallthru
          _
        // Predicated region
        $region37: #{clip_embedder_forward.1} parent=11 // pred_check
          %p540 = pneg %p229
        $region38: #{clip_embedder_forward.1} parent=11 // pred_check_branch
          %542 = sbr.rel (%p540) target = $region40
        $region39: #{clip_embedder_forward.1} parent=11 // pred_region
          _
        $region40: #{clip_embedder_forward.1} parent=11 // pred_fallthru
          _
        // Predicated region
        $region41: #{clip_embedder_forward.1} parent=11 // pred_check
          %p543 = pneg %p250
        $region42: #{clip_embedder_forward.1} parent=11 // pred_check_branch
          %545 = sbr.rel (%p543) target = $region44
        $region43: #{clip_embedder_forward.1} parent=11 // pred_region
          _
        $region44: #{clip_embedder_forward.1} parent=11 // pred_fallthru
          _
        // Predicated region
        $region45: #{clip_embedder_forward.1} parent=11 // pred_check
          %p546 = pneg %p271
        $region46: #{clip_embedder_forward.1} parent=11 // pred_check_branch
          %548 = sbr.rel (%p546) target = $region48
        $region47: #{clip_embedder_forward.1} parent=11 // pred_region
          _
        $region48: #{clip_embedder_forward.1} parent=11 // pred_fallthru
          _
        // Predicated region
        $region49: #{clip_embedder_forward.1} parent=11 // pred_check
          %p549 = pneg %p292
        $region50: #{clip_embedder_forward.1} parent=11 // pred_check_branch
          %551 = sbr.rel (%p549) target = $region52
        $region51: #{clip_embedder_forward.1} parent=11 // pred_region
          _
        $region52: #{clip_embedder_forward.1} parent=11 // pred_fallthru
          _
        // Predicated region
        $region53: #{clip_embedder_forward.1} parent=11 // pred_check
          %p552 = pneg %p313
        $region54: #{clip_embedder_forward.1} parent=11 // pred_check_branch
          %554 = sbr.rel (%p552) target = $region56
        $region55: #{clip_embedder_forward.1} parent=11 // pred_region
          _
        $region56: #{clip_embedder_forward.1} parent=11 // pred_fallthru
          _
        // Predicated region
        $region57: #{clip_embedder_forward.1} parent=11 // pred_check
          %p555 = pneg %p334
        $region58: #{clip_embedder_forward.1} parent=11 // pred_check_branch
          %557 = sbr.rel (%p555) target = $region60
        $region59: #{clip_embedder_forward.1} parent=11 // pred_region
          _
        $region60: #{clip_embedder_forward.1} parent=11 // pred_fallthru
          _
        // Predicated region
        $region61: #{clip_embedder_forward.1} parent=11 // pred_check
          %p558 = pneg %p355
        $region62: #{clip_embedder_forward.1} parent=11 // pred_check_branch
          %560 = sbr.rel (%p558) target = $region64
        $region63: #{clip_embedder_forward.1} parent=11 // pred_region
          _
        $region64: #{clip_embedder_forward.1} parent=11 // pred_fallthru
          _
        // Predicated region
        $region65: #{clip_embedder_forward.1} parent=11 // pred_check
          %p561 = pneg %p376
        $region66: #{clip_embedder_forward.1} parent=11 // pred_check_branch
          %563 = sbr.rel (%p561) target = $region68
        $region67: #{clip_embedder_forward.1} parent=11 // pred_region
          _
        $region68: #{clip_embedder_forward.1} parent=11 // pred_fallthru
          _
        // Predicated region
        $region69: #{clip_embedder_forward.1} parent=11 // pred_check
          %p564 = pneg %p397
        $region70: #{clip_embedder_forward.1} parent=11 // pred_check_branch
          %566 = sbr.rel (%p564) target = $region72
        $region71: #{clip_embedder_forward.1} parent=11 // pred_region
          _
        $region72: #{clip_embedder_forward.1} parent=11 // pred_fallthru
          _
        // Predicated region
        $region73: #{clip_embedder_forward.1} parent=11 // pred_check
          %p567 = pneg %p418
        $region74: #{clip_embedder_forward.1} parent=11 // pred_check_branch
          %569 = sbr.rel (%p567) target = $region76
        $region75: #{clip_embedder_forward.1} parent=11 // pred_region
          _
        $region76: #{clip_embedder_forward.1} parent=11 // pred_fallthru
          _
        // Predicated region
        $region77: #{clip_embedder_forward.1} parent=11 // pred_check
          %p570 = pneg %p439
        $region78: #{clip_embedder_forward.1} parent=11 // pred_check_branch
          %572 = sbr.rel (%p570) target = $region80
        $region79: #{clip_embedder_forward.1} parent=11 // pred_region
          _
        $region80: #{clip_embedder_forward.1} parent=11 // pred_fallthru
          _
        // Predicated region
        $region81: #{clip_embedder_forward.1} parent=11 // pred_check
          %p573 = pneg %p460
        $region82: #{clip_embedder_forward.1} parent=11 // pred_check_branch
          %575 = sbr.rel (%p573) target = $region84
        $region83: #{clip_embedder_forward.1} parent=11 // pred_region
          _
        $region84: #{clip_embedder_forward.1} parent=11 // pred_fallthru
          _
        // Predicated region
        $region85: #{clip_embedder_forward.1} parent=11 // pred_check
          %p576 = pneg %p481
        $region86: #{clip_embedder_forward.1} parent=11 // pred_check_branch
          %578 = sbr.rel (%p576) target = $region88
        $region87: #{clip_embedder_forward.1} parent=11 // pred_region
          _
        $region88: #{clip_embedder_forward.1} parent=11 // pred_fallthru
          _
      $region12: #{clip_embedder_forward.1} parent=5 // pred_fallthru
        _
      %p579 = scmp.lt.s32.totalorder %s30, 2
      // Predicated region
      $region89: #{clip_embedder_forward.1} parent=5 // pred_check
        %p580 = pneg %p579
      $region90: #{clip_embedder_forward.1} parent=5 // pred_check_branch
        %582 = sbr.rel (%p580) target = $region92
      $region91: #{clip_embedder_forward.1} parent=5 // pred_region
        // Predicated region
        $region93: #{clip_embedder_forward.1} parent=91 // pred_check
          %p583 = pneg %p50
        $region94: #{clip_embedder_forward.1} parent=91 // pred_check_branch
          %585 = sbr.rel (%p583) target = $region96
        $region95: #{clip_embedder_forward.1} parent=91 // pred_region
          %p586 = scmp.lt.s32.totalorder %s30, 1
          %s587 = scalar_select %p586, %s30, 1
          %s588 = scalar_lea.vmem %s0, %s587
        $region96: #{clip_embedder_forward.1} parent=91 // pred_fallthru
          _
        // Predicated region
        $region97: #{clip_embedder_forward.1} parent=91 // pred_check
          %p589 = pneg %p76
        $region98: #{clip_embedder_forward.1} parent=91 // pred_check_branch
          %591 = sbr.rel (%p589) target = $region100
        $region99: #{clip_embedder_forward.1} parent=91 // pred_region
          %p592 = scmp.lt.s32.totalorder %s30, 1
          %s593 = scalar_select %p592, %s30, 1
          %s594 = smul.addr %s593, 8
          %s595 = scalar_lea.vmem %s1, %s594
        $region100: #{clip_embedder_forward.1} parent=91 // pred_fallthru
          _
      $region92: #{clip_embedder_forward.1} parent=5 // pred_fallthru
        _
      %p596 = scmp.le.s32.totalorder 1, %s30
      %p597 = scmp.lt.s32.totalorder %s30, 3
      %p598 = pnand %p596, %p597
      %p599 = pneg %p598
      // Predicated region
      $region101: #{clip_embedder_forward.1} parent=5 // pred_check
        _
      $region102: #{clip_embedder_forward.1} parent=5 // pred_check_branch
        %601 = sbr.rel (%p598) target = $region104
      $region103: #{clip_embedder_forward.1} parent=5 // pred_region
        %s602 = ssub.s32 %s30, 1
        %p603 = scmp.lt.s32.totalorder %s35, 1
        %s604 = scalar_select %p603, %s35, 1
        %s605 = scalar_lea.vmem %s0, %s604
        %p606 = pneg %p56
        %p607 = pneg %p53
        %p608 = scmp.lt.s32.totalorder %s35, 1
        %s609 = scalar_select %p608, %s35, 1
        %s610 = smul.addr %s609, 8
        %s611 = scalar_lea.vmem %s1, %s610
        %p612 = pneg %p82
        %p613 = pneg %p79
        %p614 = pneg %p103
        %p615 = pneg %p100
        %p616 = pneg %p124
        %p617 = pneg %p121
        %p618 = pneg %p145
        %p619 = pneg %p142
        %p620 = pneg %p166
        %p621 = pneg %p163
        %p622 = pneg %p187
        %p623 = pneg %p184
        %p624 = pneg %p208
        %p625 = pneg %p205
        %p626 = pneg %p229
        %p627 = pneg %p226
        %p628 = pneg %p250
        %p629 = pneg %p247
        %p630 = pneg %p271
        %p631 = pneg %p268
        %p632 = pneg %p292
        %p633 = pneg %p289
        %p634 = pneg %p313
        %p635 = pneg %p310
        %p636 = pneg %p334
        %p637 = pneg %p331
        %p638 = pneg %p355
        %p639 = pneg %p352
        %p640 = pneg %p376
        %p641 = pneg %p373
        %p642 = pneg %p397
        %p643 = pneg %p394
        %p644 = pneg %p418
        %p645 = pneg %p415
        %p646 = pneg %p439
        %p647 = pneg %p436
        %p648 = pneg %p460
        %p649 = pneg %p457
        %p650 = pneg %p481
        %p651 = pneg %p478
        %p652 = pneg %p507
        %p653 = pneg %p504
        %s654 = sand.u32 %s494, 1
        %s655 = scalar_lea.sflag [#allocation3], %s654
        %s656 = sand.u32 %s494, 1
        %s657 = smul.addr %s656, 16
        %s658 = scalar_lea.vmem [#allocation2], %s657
        %p659 = scmp.lt.s32.totalorder %s35, 1
        %s660 = scalar_select %p659, %s35, 1
        %s661 = scalar_lea.vmem %s0, %s660
        %p662 = scmp.lt.s32.totalorder %s35, 1
        %s663 = scalar_select %p662, %s35, 1
        %s664 = smul.addr %s663, 8
        %s665 = scalar_lea.vmem %s1, %s664
        %v667 = vld [vmem:[%s665] sm:$0xff]
        %v668 = vld [vmem:[%s3] sm:$0x1]
        %v669 = vld [vmem:[%s4] sm:$0x1]
        %670 = vadd.xlane.f32.xlu0 %v667
        %v671 = vpop.xlane.xlu0 %670
        %v672 = vrcp.pop 128.0
        %v673 = vmul.f32 %v671, %v672
        %v674 = vsub.f32 %v667, %v673
        %v675 = vmul.f32 %v674, %v674
        %676 = vadd.xlane.f32.xlu0 %v675
        %v677 = vpop.xlane.xlu0 %676
        %v678 = vmul.f32 %v677, %v672
        %v679 = vadd.f32 %v678, 1e-05
        %v680 = vrsqrt.pop %v679
        %v681 = vmul.f32 %v674, %v680
        %v683 = vlaneseq
        %v684 = vshrl.u32 %v683, 7
        %v685 = vsub.s32 0, %v684
        %v686 = vrot.slane %v668, %v685
        %v688 = vmul.f32 %v681, %v686
        %v690 = vlaneseq
        %v691 = vshrl.u32 %v690, 7
        %v692 = vsub.s32 0, %v691
        %v693 = vrot.slane %v669, %v692
        %v695 = vadd.f32 %v688, %v693
        %v696 = vlaneseq
        %v697 = vshrl.u32 %v696, 7
        %v698 = vlaneseq
        %v699 = vand.u32 %v698, 127
        %vm700 = vcmp.gt.s32.totalorder %v699, %v697
        %v701 = vsel %vm700, -1e+09, 0.0
        %v702 = vld [vmem:[%s661] sm:$0x1]
        %v704 = vlaneseq
        %v705 = vshrl.u32 %v704, 7
        %v706 = vsub.s32 0, %v705
        %v707 = vrot.slane %v702, %v706
        %v709 = vadd.f32 %v701, %v707
        %v710 = vld [vmem:[%s2] sm:$0xff]
        %v711 = vadd.f32 %v667, %v710
        %v712 = vld [vmem:[%s5] sm:$0x1]
        %v713 = vld [vmem:[%s6] sm:$0x1]
        %714 = vadd.xlane.f32.xlu0 %v711
        %v715 = vpop.xlane.xlu0 %714
        %v716 = vmul.f32 %v715, %v672
        %v717 = vsub.f32 %v711, %v716
        %v718 = vmul.f32 %v717, %v717
        %719 = vadd.xlane.f32.xlu0 %v718
        %v720 = vpop.xlane.xlu0 %719
        %v721 = vmul.f32 %v720, %v672
        %v722 = vadd.f32 %v721, 1e-05
        %v723 = vrsqrt.pop %v722
        %v724 = vmul.f32 %v717, %v723
        %v726 = vlaneseq
        %v727 = vshrl.u32 %v726, 7
        %v728 = vsub.s32 0, %v727
        %v729 = vrot.slane %v712, %v728
        %v731 = vmul.f32 %v724, %v729
        %v733 = vlaneseq
        %v734 = vshrl.u32 %v733, 7
        %v735 = vsub.s32 0, %v734
        %v736 = vrot.slane %v713, %v735
        %v738 = vadd.f32 %v731, %v736
        %v739 = vpack.c.bf16 %v738, %v738
        %v740 = vld [vmem:[%s7] sm:$0xf]
        %v741 = vld [vmem:[%s7 + $0x4] sm:$0xf]
        %v742 = vld [vmem:[%s7 + $0x8] sm:$0xf]
        %v743 = vld [vmem:[%s7 + $0xc] sm:$0xf]
        %v744 = vld [vmem:[%s7 + $0x10] sm:$0xf]
        %v745 = vld [vmem:[%s7 + $0x14] sm:$0xf]
        %v746 = vld [vmem:[%s7 + $0x18] sm:$0xf]
        %v747 = vld [vmem:[%s7 + $0x1c] sm:$0xf]
        %v748 = vld [vmem:[%s7 + $0x20] sm:$0xf]
        %v749 = vld [vmem:[%s7 + $0x24] sm:$0xf]
        %v750 = vld [vmem:[%s7 + $0x28] sm:$0xf]
        %v751 = vld [vmem:[%s7 + $0x2c] sm:$0xf]
        %v752 = vld [vmem:[%s7 + $0x30] sm:$0xf]
        %v753 = vld [vmem:[%s7 + $0x34] sm:$0xf]
        %v754 = vld [vmem:[%s7 + $0x38] sm:$0xf]
        %v755 = vld [vmem:[%s7 + $0x3c] sm:$0xf]
        %v756 = vld [vmem:[%s7 + $0x40] sm:$0xf]
        %v757 = vld [vmem:[%s7 + $0x44] sm:$0xf]
        %v758 = vld [vmem:[%s7 + $0x48] sm:$0xf]
        %v759 = vld [vmem:[%s7 + $0x4c] sm:$0xf]
        %v760 = vld [vmem:[%s7 + $0x50] sm:$0xf]
        %v761 = vld [vmem:[%s7 + $0x54] sm:$0xf]
        %v762 = vld [vmem:[%s7 + $0x58] sm:$0xf]
        %v763 = vld [vmem:[%s7 + $0x5c] sm:$0xf]
        %v764 = vld [vmem:[%s7 + $0x60] sm:$0xf]
        %v765 = vld [vmem:[%s7 + $0x64] sm:$0xf]
        %v766 = vld [vmem:[%s7 + $0x68] sm:$0xf]
        %v767 = vld [vmem:[%s7 + $0x6c] sm:$0xf]
        %v768 = vld [vmem:[%s7 + $0x70] sm:$0xf]
        %v769 = vld [vmem:[%s7 + $0x74] sm:$0xf]
        %v770 = vld [vmem:[%s7 + $0x78] sm:$0xf]
        %v771 = vld [vmem:[%s7 + $0x7c] sm:$0xf]
        %v772 = vld [vmem:[%s7 + $0x80] sm:$0xf]
        %v773 = vld [vmem:[%s7 + $0x84] sm:$0xf]
        %v774 = vld [vmem:[%s7 + $0x88] sm:$0xf]
        %v775 = vld [vmem:[%s7 + $0x8c] sm:$0xf]
        %v776 = vld [vmem:[%s7 + $0x90] sm:$0xf]
        %v777 = vld [vmem:[%s7 + $0x94] sm:$0xf]
        %v778 = vld [vmem:[%s7 + $0x98] sm:$0xf]
        %v779 = vld [vmem:[%s7 + $0x9c] sm:$0xf]
        %v780 = vld [vmem:[%s7 + $0xa0] sm:$0xf]
        %v781 = vld [vmem:[%s7 + $0xa4] sm:$0xf]
        %v782 = vld [vmem:[%s7 + $0xa8] sm:$0xf]
        %v783 = vld [vmem:[%s7 + $0xac] sm:$0xf]
        %v784 = vld [vmem:[%s7 + $0xb0] sm:$0xf]
        %v785 = vld [vmem:[%s7 + $0xb4] sm:$0xf]
        %v786 = vld [vmem:[%s7 + $0xb8] sm:$0xf]
        %v787 = vld [vmem:[%s7 + $0xbc] sm:$0xf]
        %v788 = vld [vmem:[%s7 + $0xc0] sm:$0xf]
        %v789 = vld [vmem:[%s7 + $0xc4] sm:$0xf]
        %v790 = vld [vmem:[%s7 + $0xc8] sm:$0xf]
        %v791 = vld [vmem:[%s7 + $0xcc] sm:$0xf]
        %v792 = vld [vmem:[%s7 + $0xd0] sm:$0xf]
        %v793 = vld [vmem:[%s7 + $0xd4] sm:$0xf]
        %v794 = vld [vmem:[%s7 + $0xd8] sm:$0xf]
        %v795 = vld [vmem:[%s7 + $0xdc] sm:$0xf]
        %v796 = vld [vmem:[%s7 + $0xe0] sm:$0xf]
        %v797 = vld [vmem:[%s7 + $0xe4] sm:$0xf]
        %v798 = vld [vmem:[%s7 + $0xe8] sm:$0xf]
        %v799 = vld [vmem:[%s7 + $0xec] sm:$0xf]
        %v800 = vld [vmem:[%s7 + $0xf0] sm:$0xf]
        %v801 = vld [vmem:[%s7 + $0xf4] sm:$0xf]
        %v802 = vld [vmem:[%s7 + $0xf8] sm:$0xf]
        %v803 = vld [vmem:[%s7 + $0xfc] sm:$0xf]
        %v804 = vld [vmem:[%s9] sm:$0xf]
        %v805 = vld [vmem:[%s9 + $0x4] sm:$0xf]
        %v806 = vld [vmem:[%s9 + $0x8] sm:$0xf]
        %v807 = vld [vmem:[%s9 + $0xc] sm:$0xf]
        %v808 = vld [vmem:[%s9 + $0x10] sm:$0xf]
        %v809 = vld [vmem:[%s9 + $0x14] sm:$0xf]
        %v810 = vld [vmem:[%s9 + $0x18] sm:$0xf]
        %v811 = vld [vmem:[%s9 + $0x1c] sm:$0xf]
        %v812 = vld [vmem:[%s9 + $0x20] sm:$0xf]
        %v813 = vld [vmem:[%s9 + $0x24] sm:$0xf]
        %v814 = vld [vmem:[%s9 + $0x28] sm:$0xf]
        %v815 = vld [vmem:[%s9 + $0x2c] sm:$0xf]
        %v816 = vld [vmem:[%s9 + $0x30] sm:$0xf]
        %v817 = vld [vmem:[%s9 + $0x34] sm:$0xf]
        %v818 = vld [vmem:[%s9 + $0x38] sm:$0xf]
        %v819 = vld [vmem:[%s9 + $0x3c] sm:$0xf]
        %v820 = vld [vmem:[%s9 + $0x40] sm:$0xf]
        %v821 = vld [vmem:[%s9 + $0x44] sm:$0xf]
        %v822 = vld [vmem:[%s9 + $0x48] sm:$0xf]
        %v823 = vld [vmem:[%s9 + $0x4c] sm:$0xf]
        %v824 = vld [vmem:[%s9 + $0x50] sm:$0xf]
        %v825 = vld [vmem:[%s9 + $0x54] sm:$0xf]
        %v826 = vld [vmem:[%s9 + $0x58] sm:$0xf]
        %v827 = vld [vmem:[%s9 + $0x5c] sm:$0xf]
        %v828 = vld [vmem:[%s9 + $0x60] sm:$0xf]
        %v829 = vld [vmem:[%s9 + $0x64] sm:$0xf]
        %v830 = vld [vmem:[%s9 + $0x68] sm:$0xf]
        %v831 = vld [vmem:[%s9 + $0x6c] sm:$0xf]
        %v832 = vld [vmem:[%s9 + $0x70] sm:$0xf]
        %v833 = vld [vmem:[%s9 + $0x74] sm:$0xf]
        %v834 = vld [vmem:[%s9 + $0x78] sm:$0xf]
        %v835 = vld [vmem:[%s9 + $0x7c] sm:$0xf]
        %v836 = vld [vmem:[%s9 + $0x80] sm:$0xf]
        %v837 = vld [vmem:[%s9 + $0x84] sm:$0xf]
        %v838 = vld [vmem:[%s9 + $0x88] sm:$0xf]
        %v839 = vld [vmem:[%s9 + $0x8c] sm:$0xf]
        %v840 = vld [vmem:[%s9 + $0x90] sm:$0xf]
        %v841 = vld [vmem:[%s9 + $0x94] sm:$0xf]
        %v842 = vld [vmem:[%s9 + $0x98] sm:$0xf]
        %v843 = vld [vmem:[%s9 + $0x9c] sm:$0xf]
        %v844 = vld [vmem:[%s9 + $0xa0] sm:$0xf]
        %v845 = vld [vmem:[%s9 + $0xa4] sm:$0xf]
        %v846 = vld [vmem:[%s9 + $0xa8] sm:$0xf]
        %v847 = vld [vmem:[%s9 + $0xac] sm:$0xf]
        %v848 = vld [vmem:[%s9 + $0xb0] sm:$0xf]
        %v849 = vld [vmem:[%s9 + $0xb4] sm:$0xf]
        %v850 = vld [vmem:[%s9 + $0xb8] sm:$0xf]
        %v851 = vld [vmem:[%s9 + $0xbc] sm:$0xf]
        %v852 = vld [vmem:[%s9 + $0xc0] sm:$0xf]
        %v853 = vld [vmem:[%s9 + $0xc4] sm:$0xf]
        %v854 = vld [vmem:[%s9 + $0xc8] sm:$0xf]
        %v855 = vld [vmem:[%s9 + $0xcc] sm:$0xf]
        %v856 = vld [vmem:[%s9 + $0xd0] sm:$0xf]
        %v857 = vld [vmem:[%s9 + $0xd4] sm:$0xf]
        %v858 = vld [vmem:[%s9 + $0xd8] sm:$0xf]
        %v859 = vld [vmem:[%s9 + $0xdc] sm:$0xf]
        %v860 = vld [vmem:[%s9 + $0xe0] sm:$0xf]
        %v861 = vld [vmem:[%s9 + $0xe4] sm:$0xf]
        %v862 = vld [vmem:[%s9 + $0xe8] sm:$0xf]
        %v863 = vld [vmem:[%s9 + $0xec] sm:$0xf]
        %v864 = vld [vmem:[%s9 + $0xf0] sm:$0xf]
        %v865 = vld [vmem:[%s9 + $0xf4] sm:$0xf]
        %v866 = vld [vmem:[%s9 + $0xf8] sm:$0xf]
        %v867 = vld [vmem:[%s9 + $0xfc] sm:$0xf]
        %v868 = vld [vmem:[%s11] sm:$0xf]
        %v869 = vld [vmem:[%s11 + $0x4] sm:$0xf]
        %v870 = vld [vmem:[%s11 + $0x8] sm:$0xf]
        %v871 = vld [vmem:[%s11 + $0xc] sm:$0xf]
        %v872 = vld [vmem:[%s11 + $0x10] sm:$0xf]
        %v873 = vld [vmem:[%s11 + $0x14] sm:$0xf]
        %v874 = vld [vmem:[%s11 + $0x18] sm:$0xf]
        %v875 = vld [vmem:[%s11 + $0x1c] sm:$0xf]
        %v876 = vld [vmem:[%s11 + $0x20] sm:$0xf]
        %v877 = vld [vmem:[%s11 + $0x24] sm:$0xf]
        %v878 = vld [vmem:[%s11 + $0x28] sm:$0xf]
        %v879 = vld [vmem:[%s11 + $0x2c] sm:$0xf]
        %v880 = vld [vmem:[%s11 + $0x30] sm:$0xf]
        %v881 = vld [vmem:[%s11 + $0x34] sm:$0xf]
        %v882 = vld [vmem:[%s11 + $0x38] sm:$0xf]
        %v883 = vld [vmem:[%s11 + $0x3c] sm:$0xf]
        %v884 = vld [vmem:[%s11 + $0x40] sm:$0xf]
        %v885 = vld [vmem:[%s11 + $0x44] sm:$0xf]
        %v886 = vld [vmem:[%s11 + $0x48] sm:$0xf]
        %v887 = vld [vmem:[%s11 + $0x4c] sm:$0xf]
        %v888 = vld [vmem:[%s11 + $0x50] sm:$0xf]
        %v889 = vld [vmem:[%s11 + $0x54] sm:$0xf]
        %v890 = vld [vmem:[%s11 + $0x58] sm:$0xf]
        %v891 = vld [vmem:[%s11 + $0x5c] sm:$0xf]
        %v892 = vld [vmem:[%s11 + $0x60] sm:$0xf]
        %v893 = vld [vmem:[%s11 + $0x64] sm:$0xf]
        %v894 = vld [vmem:[%s11 + $0x68] sm:$0xf]
        %v895 = vld [vmem:[%s11 + $0x6c] sm:$0xf]
        %v896 = vld [vmem:[%s11 + $0x70] sm:$0xf]
        %v897 = vld [vmem:[%s11 + $0x74] sm:$0xf]
        %v898 = vld [vmem:[%s11 + $0x78] sm:$0xf]
        %v899 = vld [vmem:[%s11 + $0x7c] sm:$0xf]
        %v900 = vld [vmem:[%s11 + $0x80] sm:$0xf]
        %v901 = vld [vmem:[%s11 + $0x84] sm:$0xf]
        %v902 = vld [vmem:[%s11 + $0x88] sm:$0xf]
        %v903 = vld [vmem:[%s11 + $0x8c] sm:$0xf]
        %v904 = vld [vmem:[%s11 + $0x90] sm:$0xf]
        %v905 = vld [vmem:[%s11 + $0x94] sm:$0xf]
        %v906 = vld [vmem:[%s11 + $0x98] sm:$0xf]
        %v907 = vld [vmem:[%s11 + $0x9c] sm:$0xf]
        %v908 = vld [vmem:[%s11 + $0xa0] sm:$0xf]
        %v909 = vld [vmem:[%s11 + $0xa4] sm:$0xf]
        %v910 = vld [vmem:[%s11 + $0xa8] sm:$0xf]
        %v911 = vld [vmem:[%s11 + $0xac] sm:$0xf]
        %v912 = vld [vmem:[%s11 + $0xb0] sm:$0xf]
        %v913 = vld [vmem:[%s11 + $0xb4] sm:$0xf]
        %v914 = vld [vmem:[%s11 + $0xb8] sm:$0xf]
        %v915 = vld [vmem:[%s11 + $0xbc] sm:$0xf]
        %v916 = vld [vmem:[%s11 + $0xc0] sm:$0xf]
        %v917 = vld [vmem:[%s11 + $0xc4] sm:$0xf]
        %v918 = vld [vmem:[%s11 + $0xc8] sm:$0xf]
        %v919 = vld [vmem:[%s11 + $0xcc] sm:$0xf]
        %v920 = vld [vmem:[%s11 + $0xd0] sm:$0xf]
        %v921 = vld [vmem:[%s11 + $0xd4] sm:$0xf]
        %v922 = vld [vmem:[%s11 + $0xd8] sm:$0xf]
        %v923 = vld [vmem:[%s11 + $0xdc] sm:$0xf]
        %v924 = vld [vmem:[%s11 + $0xe0] sm:$0xf]
        %v925 = vld [vmem:[%s11 + $0xe4] sm:$0xf]
        %v926 = vld [vmem:[%s11 + $0xe8] sm:$0xf]
        %v927 = vld [vmem:[%s11 + $0xec] sm:$0xf]
        %v928 = vld [vmem:[%s11 + $0xf0] sm:$0xf]
        %v929 = vld [vmem:[%s11 + $0xf4] sm:$0xf]
        %v930 = vld [vmem:[%s11 + $0xf8] sm:$0xf]
        %v931 = vld [vmem:[%s11 + $0xfc] sm:$0xf]
        %v932 = vld [vmem:[%s8] sm:$0x1]
        %v933 = vld [vmem:[%s8 + $0x1] sm:$0x1]
        %v934 = vld [vmem:[%s8 + $0x2] sm:$0x1]
        %v935 = vld [vmem:[%s8 + $0x3] sm:$0x1]
        %v936 = vld [vmem:[%s10] sm:$0x1]
        %v937 = vld [vmem:[%s10 + $0x1] sm:$0x1]
        %v938 = vld [vmem:[%s10 + $0x2] sm:$0x1]
        %v939 = vld [vmem:[%s10 + $0x3] sm:$0x1]
        %v940 = vld [vmem:[%s12] sm:$0x1]
        %v941 = vld [vmem:[%s12 + $0x1] sm:$0x1]
        %v942 = vld [vmem:[%s12 + $0x2] sm:$0x1]
        %v943 = vld [vmem:[%s12 + $0x3] sm:$0x1]
        %v948 = vlaneseq
        %v949 = vshrl.u32 %v948, 7
        %v950 = vsub.s32 0, %v949
        %v951 = vrot.slane %v932, %v950
        %v952 = vlaneseq
        %v953 = vshrl.u32 %v952, 7
        %v954 = vsub.s32 0, %v953
        %v955 = vrot.slane %v933, %v954
        %v956 = vlaneseq
        %v957 = vshrl.u32 %v956, 7
        %v958 = vsub.s32 0, %v957
        %v959 = vrot.slane %v934, %v958
        %v960 = vlaneseq
        %v961 = vshrl.u32 %v960, 7
        %v962 = vsub.s32 0, %v961
        %v963 = vrot.slane %v935, %v962
        %v984 = vunpack.c.l.b16 %v740
        %v985 = vunpack.c.l.b16 %v741
        %v986 = vunpack.c.l.b16 %v742
        %v987 = vunpack.c.l.b16 %v743
        %v988 = vunpack.c.l.b16 %v744
        %v989 = vunpack.c.l.b16 %v745
        %v990 = vunpack.c.l.b16 %v746
        %v991 = vunpack.c.l.b16 %v747
        %v992 = vunpack.c.l.b16 %v748
        %v993 = vunpack.c.l.b16 %v749
        %v994 = vunpack.c.l.b16 %v750
        %v995 = vunpack.c.l.b16 %v751
        %v996 = vunpack.c.l.b16 %v752
        %v997 = vunpack.c.l.b16 %v753
        %v998 = vunpack.c.l.b16 %v754
        %v999 = vunpack.c.l.b16 %v755
        %v1000 = vpack.c.b16 %v985, %v984
        %v1001 = vpack.c.b16 %v987, %v986
        %v1002 = vpack.c.b16 %v989, %v988
        %v1003 = vpack.c.b16 %v991, %v990
        %v1004 = vpack.c.b16 %v993, %v992
        %v1005 = vpack.c.b16 %v995, %v994
        %v1006 = vpack.c.b16 %v997, %v996
        %v1007 = vpack.c.b16 %v999, %v998
        %1016 = vmatprep.subr.bf16.mxu0 0
        %1017 = vmatpush1.bf16.msra.mxu0 %v1000
        %1018 = vmatprep.subr.bf16.mxu0 0
        %1019 = vmatpush1.bf16.msra.mxu0 %v1001
        %1020 = vmatprep.subr.bf16.mxu0 0
        %1021 = vmatpush1.bf16.msra.mxu0 %v1002
        %1022 = vmatprep.subr.bf16.mxu0 0
        %1023 = vmatpush1.bf16.msra.mxu0 %v1003
        %1024 = vmatprep.subr.bf16.mxu0 0
        %1025 = vmatpush1.bf16.msra.mxu0 %v1004
        %1026 = vmatprep.subr.bf16.mxu0 0
        %1027 = vmatpush1.bf16.msra.mxu0 %v1005
        %1028 = vmatprep.subr.bf16.mxu0 0
        %1029 = vmatpush1.bf16.msra.mxu0 %v1006
        %1030 = vmatprep.subr.bf16.mxu0 0
        %1031 = vmatpush1.bf16.msra.mxu0 %v1007
        %1032 = vmatprep.subr.bf16.mxu0 0
        %1033 = vmatpush1.bf16.msra.mxu0 0
        %1034 = vmatprep.subr.bf16.mxu0 0
        %1035 = vmatpush1.bf16.msra.mxu0 0
        %1036 = vmatprep.subr.bf16.mxu0 0
        %1037 = vmatpush1.bf16.msra.mxu0 0
        %1038 = vmatprep.subr.bf16.mxu0 0
        %1039 = vmatpush1.bf16.msra.mxu0 0
        %1040 = vmatprep.subr.bf16.mxu0 0
        %1041 = vmatpush1.bf16.msra.mxu0 0
        %1042 = vmatprep.subr.bf16.mxu0 0
        %1043 = vmatpush1.bf16.msra.mxu0 0
        %1044 = vmatprep.subr.bf16.mxu0 0
        %1045 = vmatpush1.bf16.msra.mxu0 0
        %1046 = vmatprep.subr.bf16.mxu0 0
        %1047 = vmatpush1.bf16.msra.mxu0 0
        %1048 = vmatprep.mubr.bf16.mxu0 0
        %1049 = vmatmul.mubr.bf16.gmra.mrb[0].mxu0 %v739
        %v1050 = vpop.f32.mrb[0].mxu0
        %v1051 = vadd.f32 %v951, %v1050
        %v1052 = vpop.f32.mrb[0].mxu0
        %v1053 = vpop.f32.mrb[0].mxu0
        %v1054 = vpop.f32.mrb[0].mxu0
        %1055 = vdwg.mxu0
        %v1072 = vunpack.c.l.b16 %v756
        %v1073 = vunpack.c.l.b16 %v757
        %v1074 = vunpack.c.l.b16 %v758
        %v1075 = vunpack.c.l.b16 %v759
        %v1076 = vunpack.c.l.b16 %v760
        %v1077 = vunpack.c.l.b16 %v761
        %v1078 = vunpack.c.l.b16 %v762
        %v1079 = vunpack.c.l.b16 %v763
        %v1080 = vunpack.c.l.b16 %v764
        %v1081 = vunpack.c.l.b16 %v765
        %v1082 = vunpack.c.l.b16 %v766
        %v1083 = vunpack.c.l.b16 %v767
        %v1084 = vunpack.c.l.b16 %v768
        %v1085 = vunpack.c.l.b16 %v769
        %v1086 = vunpack.c.l.b16 %v770
        %v1087 = vunpack.c.l.b16 %v771
        %v1088 = vpack.c.b16 %v1073, %v1072
        %v1089 = vpack.c.b16 %v1075, %v1074
        %v1090 = vpack.c.b16 %v1077, %v1076
        %v1091 = vpack.c.b16 %v1079, %v1078
        %v1092 = vpack.c.b16 %v1081, %v1080
        %v1093 = vpack.c.b16 %v1083, %v1082
        %v1094 = vpack.c.b16 %v1085, %v1084
        %v1095 = vpack.c.b16 %v1087, %v1086
        %1104 = vmatprep.subr.bf16.mxu0 0
        %1105 = vmatpush1.bf16.msra.mxu0 %v1088
        %1106 = vmatprep.subr.bf16.mxu0 0
        %1107 = vmatpush1.bf16.msra.mxu0 %v1089
        %1108 = vmatprep.subr.bf16.mxu0 0
        %1109 = vmatpush1.bf16.msra.mxu0 %v1090
        %1110 = vmatprep.subr.bf16.mxu0 0
        %1111 = vmatpush1.bf16.msra.mxu0 %v1091
        %1112 = vmatprep.subr.bf16.mxu0 0
        %1113 = vmatpush1.bf16.msra.mxu0 %v1092
        %1114 = vmatprep.subr.bf16.mxu0 0
        %1115 = vmatpush1.bf16.msra.mxu0 %v1093
        %1116 = vmatprep.subr.bf16.mxu0 0
        %1117 = vmatpush1.bf16.msra.mxu0 %v1094
        %1118 = vmatprep.subr.bf16.mxu0 0
        %1119 = vmatpush1.bf16.msra.mxu0 %v1095
        %1120 = vmatprep.subr.bf16.mxu0 0
        %1121 = vmatpush1.bf16.msra.mxu0 0
        %1122 = vmatprep.subr.bf16.mxu0 0
        %1123 = vmatpush1.bf16.msra.mxu0 0
        %1124 = vmatprep.subr.bf16.mxu0 0
        %1125 = vmatpush1.bf16.msra.mxu0 0
        %1126 = vmatprep.subr.bf16.mxu0 0
        %1127 = vmatpush1.bf16.msra.mxu0 0
        %1128 = vmatprep.subr.bf16.mxu0 0
        %1129 = vmatpush1.bf16.msra.mxu0 0
        %1130 = vmatprep.subr.bf16.mxu0 0
        %1131 = vmatpush1.bf16.msra.mxu0 0
        %1132 = vmatprep.subr.bf16.mxu0 0
        %1133 = vmatpush1.bf16.msra.mxu0 0
        %1134 = vmatprep.subr.bf16.mxu0 0
        %1135 = vmatpush1.bf16.msra.mxu0 0
        %1136 = vmatprep.mubr.bf16.mxu0 0
        %1137 = vmatmul.mubr.bf16.gmra.mrb[0].mxu0 %v739
        %v1138 = vpop.f32.mrb[0].mxu0
        %v1139 = vadd.f32 %v955, %v1138
        %v1140 = vpop.f32.mrb[0].mxu0
        %v1141 = vpop.f32.mrb[0].mxu0
        %v1142 = vpop.f32.mrb[0].mxu0
        %1143 = vdwg.mxu0
        %v1160 = vunpack.c.l.b16 %v772
        %v1161 = vunpack.c.l.b16 %v773
        %v1162 = vunpack.c.l.b16 %v774
        %v1163 = vunpack.c.l.b16 %v775
        %v1164 = vunpack.c.l.b16 %v776
        %v1165 = vunpack.c.l.b16 %v777
        %v1166 = vunpack.c.l.b16 %v778
        %v1167 = vunpack.c.l.b16 %v779
        %v1168 = vunpack.c.l.b16 %v780
        %v1169 = vunpack.c.l.b16 %v781
        %v1170 = vunpack.c.l.b16 %v782
        %v1171 = vunpack.c.l.b16 %v783
        %v1172 = vunpack.c.l.b16 %v784
        %v1173 = vunpack.c.l.b16 %v785
        %v1174 = vunpack.c.l.b16 %v786
        %v1175 = vunpack.c.l.b16 %v787
        %v1176 = vpack.c.b16 %v1161, %v1160
        %v1177 = vpack.c.b16 %v1163, %v1162
        %v1178 = vpack.c.b16 %v1165, %v1164
        %v1179 = vpack.c.b16 %v1167, %v1166
        %v1180 = vpack.c.b16 %v1169, %v1168
        %v1181 = vpack.c.b16 %v1171, %v1170
        %v1182 = vpack.c.b16 %v1173, %v1172
        %v1183 = vpack.c.b16 %v1175, %v1174
        %1192 = vmatprep.subr.bf16.mxu0 0
        %1193 = vmatpush1.bf16.msra.mxu0 %v1176
        %1194 = vmatprep.subr.bf16.mxu0 0
        %1195 = vmatpush1.bf16.msra.mxu0 %v1177
        %1196 = vmatprep.subr.bf16.mxu0 0
        %1197 = vmatpush1.bf16.msra.mxu0 %v1178
        %1198 = vmatprep.subr.bf16.mxu0 0
        %1199 = vmatpush1.bf16.msra.mxu0 %v1179
        %1200 = vmatprep.subr.bf16.mxu0 0
        %1201 = vmatpush1.bf16.msra.mxu0 %v1180
        %1202 = vmatprep.subr.bf16.mxu0 0
        %1203 = vmatpush1.bf16.msra.mxu0 %v1181
        %1204 = vmatprep.subr.bf16.mxu0 0
        %1205 = vmatpush1.bf16.msra.mxu0 %v1182
        %1206 = vmatprep.subr.bf16.mxu0 0
        %1207 = vmatpush1.bf16.msra.mxu0 %v1183
        %1208 = vmatprep.subr.bf16.mxu0 0
        %1209 = vmatpush1.bf16.msra.mxu0 0
        %1210 = vmatprep.subr.bf16.mxu0 0
        %1211 = vmatpush1.bf16.msra.mxu0 0
        %1212 = vmatprep.subr.bf16.mxu0 0
        %1213 = vmatpush1.bf16.msra.mxu0 0
        %1214 = vmatprep.subr.bf16.mxu0 0
        %1215 = vmatpush1.bf16.msra.mxu0 0
        %1216 = vmatprep.subr.bf16.mxu0 0
        %1217 = vmatpush1.bf16.msra.mxu0 0
        %1218 = vmatprep.subr.bf16.mxu0 0
        %1219 = vmatpush1.bf16.msra.mxu0 0
        %1220 = vmatprep.subr.bf16.mxu0 0
        %1221 = vmatpush1.bf16.msra.mxu0 0
        %1222 = vmatprep.subr.bf16.mxu0 0
        %1223 = vmatpush1.bf16.msra.mxu0 0
        %1224 = vmatprep.mubr.bf16.mxu0 0
        %1225 = vmatmul.mubr.bf16.gmra.mrb[0].mxu0 %v739
        %v1226 = vpop.f32.mrb[0].mxu0
        %v1227 = vadd.f32 %v959, %v1226
        %v1228 = vpop.f32.mrb[0].mxu0
        %v1229 = vpop.f32.mrb[0].mxu0
        %v1230 = vpop.f32.mrb[0].mxu0
        %1231 = vdwg.mxu0
        %v1248 = vunpack.c.l.b16 %v788
        %v1249 = vunpack.c.l.b16 %v789
        %v1250 = vunpack.c.l.b16 %v790
        %v1251 = vunpack.c.l.b16 %v791
        %v1252 = vunpack.c.l.b16 %v792
        %v1253 = vunpack.c.l.b16 %v793
        %v1254 = vunpack.c.l.b16 %v794
        %v1255 = vunpack.c.l.b16 %v795
        %v1256 = vunpack.c.l.b16 %v796
        %v1257 = vunpack.c.l.b16 %v797
        %v1258 = vunpack.c.l.b16 %v798
        %v1259 = vunpack.c.l.b16 %v799
        %v1260 = vunpack.c.l.b16 %v800
        %v1261 = vunpack.c.l.b16 %v801
        %v1262 = vunpack.c.l.b16 %v802
        %v1263 = vunpack.c.l.b16 %v803
        %v1264 = vpack.c.b16 %v1249, %v1248
        %v1265 = vpack.c.b16 %v1251, %v1250
        %v1266 = vpack.c.b16 %v1253, %v1252
        %v1267 = vpack.c.b16 %v1255, %v1254
        %v1268 = vpack.c.b16 %v1257, %v1256
        %v1269 = vpack.c.b16 %v1259, %v1258
        %v1270 = vpack.c.b16 %v1261, %v1260
        %v1271 = vpack.c.b16 %v1263, %v1262
        %1280 = vmatprep.subr.bf16.mxu0 0
        %1281 = vmatpush1.bf16.msra.mxu0 %v1264
        %1282 = vmatprep.subr.bf16.mxu0 0
        %1283 = vmatpush1.bf16.msra.mxu0 %v1265
        %1284 = vmatprep.subr.bf16.mxu0 0
        %1285 = vmatpush1.bf16.msra.mxu0 %v1266
        %1286 = vmatprep.subr.bf16.mxu0 0
        %1287 = vmatpush1.bf16.msra.mxu0 %v1267
        %1288 = vmatprep.subr.bf16.mxu0 0
        %1289 = vmatpush1.bf16.msra.mxu0 %v1268
        %1290 = vmatprep.subr.bf16.mxu0 0
        %1291 = vmatpush1.bf16.msra.mxu0 %v1269
        %1292 = vmatprep.subr.bf16.mxu0 0
        %1293 = vmatpush1.bf16.msra.mxu0 %v1270
        %1294 = vmatprep.subr.bf16.mxu0 0
        %1295 = vmatpush1.bf16.msra.mxu0 %v1271
        %1296 = vmatprep.subr.bf16.mxu0 0
        %1297 = vmatpush1.bf16.msra.mxu0 0
        %1298 = vmatprep.subr.bf16.mxu0 0
        %1299 = vmatpush1.bf16.msra.mxu0 0
        %1300 = vmatprep.subr.bf16.mxu0 0
        %1301 = vmatpush1.bf16.msra.mxu0 0
        %1302 = vmatprep.subr.bf16.mxu0 0
        %1303 = vmatpush1.bf16.msra.mxu0 0
        %1304 = vmatprep.subr.bf16.mxu0 0
        %1305 = vmatpush1.bf16.msra.mxu0 0
        %1306 = vmatprep.subr.bf16.mxu0 0
        %1307 = vmatpush1.bf16.msra.mxu0 0
        %1308 = vmatprep.subr.bf16.mxu0 0
        %1309 = vmatpush1.bf16.msra.mxu0 0
        %1310 = vmatprep.subr.bf16.mxu0 0
        %1311 = vmatpush1.bf16.msra.mxu0 0
        %1312 = vmatprep.mubr.bf16.mxu0 0
        %1313 = vmatmul.mubr.bf16.gmra.mrb[0].mxu0 %v739
        %v1314 = vpop.f32.mrb[0].mxu0
        %v1315 = vadd.f32 %v963, %v1314
        %v1316 = vpop.f32.mrb[0].mxu0
        %v1317 = vpop.f32.mrb[0].mxu0
        %v1318 = vpop.f32.mrb[0].mxu0
        %1319 = vdwg.mxu0
        %v1324 = vlaneseq
        %v1325 = vshrl.u32 %v1324, 7
        %v1326 = vsub.s32 0, %v1325
        %v1327 = vrot.slane %v936, %v1326
        %v1328 = vlaneseq
        %v1329 = vshrl.u32 %v1328, 7
        %v1330 = vsub.s32 0, %v1329
        %v1331 = vrot.slane %v937, %v1330
        %v1332 = vlaneseq
        %v1333 = vshrl.u32 %v1332, 7
        %v1334 = vsub.s32 0, %v1333
        %v1335 = vrot.slane %v938, %v1334
        %v1336 = vlaneseq
        %v1337 = vshrl.u32 %v1336, 7
        %v1338 = vsub.s32 0, %v1337
        %v1339 = vrot.slane %v939, %v1338
        %v1360 = vunpack.c.l.b16 %v804
        %v1361 = vunpack.c.l.b16 %v805
        %v1362 = vunpack.c.l.b16 %v806
        %v1363 = vunpack.c.l.b16 %v807
        %v1364 = vunpack.c.l.b16 %v808
        %v1365 = vunpack.c.l.b16 %v809
        %v1366 = vunpack.c.l.b16 %v810
        %v1367 = vunpack.c.l.b16 %v811
        %v1368 = vunpack.c.l.b16 %v812
        %v1369 = vunpack.c.l.b16 %v813
        %v1370 = vunpack.c.l.b16 %v814
        %v1371 = vunpack.c.l.b16 %v815
        %v1372 = vunpack.c.l.b16 %v816
        %v1373 = vunpack.c.l.b16 %v817
        %v1374 = vunpack.c.l.b16 %v818
        %v1375 = vunpack.c.l.b16 %v819
        %v1376 = vpack.c.b16 %v1361, %v1360
        %v1377 = vpack.c.b16 %v1363, %v1362
        %v1378 = vpack.c.b16 %v1365, %v1364
        %v1379 = vpack.c.b16 %v1367, %v1366
        %v1380 = vpack.c.b16 %v1369, %v1368
        %v1381 = vpack.c.b16 %v1371, %v1370
        %v1382 = vpack.c.b16 %v1373, %v1372
        %v1383 = vpack.c.b16 %v1375, %v1374
        %1392 = vmatprep.subr.bf16.mxu0 0
        %1393 = vmatpush1.bf16.msra.mxu0 %v1376
        %1394 = vmatprep.subr.bf16.mxu0 0
        %1395 = vmatpush1.bf16.msra.mxu0 %v1377
        %1396 = vmatprep.subr.bf16.mxu0 0
        %1397 = vmatpush1.bf16.msra.mxu0 %v1378
        %1398 = vmatprep.subr.bf16.mxu0 0
        %1399 = vmatpush1.bf16.msra.mxu0 %v1379
        %1400 = vmatprep.subr.bf16.mxu0 0
        %1401 = vmatpush1.bf16.msra.mxu0 %v1380
        %1402 = vmatprep.subr.bf16.mxu0 0
        %1403 = vmatpush1.bf16.msra.mxu0 %v1381
        %1404 = vmatprep.subr.bf16.mxu0 0
        %1405 = vmatpush1.bf16.msra.mxu0 %v1382
        %1406 = vmatprep.subr.bf16.mxu0 0
        %1407 = vmatpush1.bf16.msra.mxu0 %v1383
        %1408 = vmatprep.subr.bf16.mxu0 0
        %1409 = vmatpush1.bf16.msra.mxu0 0
        %1410 = vmatprep.subr.bf16.mxu0 0
        %1411 = vmatpush1.bf16.msra.mxu0 0
        %1412 = vmatprep.subr.bf16.mxu0 0
        %1413 = vmatpush1.bf16.msra.mxu0 0
        %1414 = vmatprep.subr.bf16.mxu0 0
        %1415 = vmatpush1.bf16.msra.mxu0 0
        %1416 = vmatprep.subr.bf16.mxu0 0
        %1417 = vmatpush1.bf16.msra.mxu0 0
        %1418 = vmatprep.subr.bf16.mxu0 0
        %1419 = vmatpush1.bf16.msra.mxu0 0
        %1420 = vmatprep.subr.bf16.mxu0 0
        %1421 = vmatpush1.bf16.msra.mxu0 0
        %1422 = vmatprep.subr.bf16.mxu0 0
        %1423 = vmatpush1.bf16.msra.mxu0 0
        %1424 = vmatprep.mubr.bf16.mxu0 0
        %1425 = vmatmul.mubr.bf16.gmra.mrb[0].mxu0 %v739
        %v1426 = vpop.f32.mrb[0].mxu0
        %v1427 = vadd.f32 %v1327, %v1426
        %v1428 = vpop.f32.mrb[0].mxu0
        %v1429 = vpop.f32.mrb[0].mxu0
        %v1430 = vpop.f32.mrb[0].mxu0
        %1431 = vdwg.mxu0
        %v1448 = vunpack.c.l.b16 %v820
        %v1449 = vunpack.c.l.b16 %v821
        %v1450 = vunpack.c.l.b16 %v822
        %v1451 = vunpack.c.l.b16 %v823
        %v1452 = vunpack.c.l.b16 %v824
        %v1453 = vunpack.c.l.b16 %v825
        %v1454 = vunpack.c.l.b16 %v826
        %v1455 = vunpack.c.l.b16 %v827
        %v1456 = vunpack.c.l.b16 %v828
        %v1457 = vunpack.c.l.b16 %v829
        %v1458 = vunpack.c.l.b16 %v830
        %v1459 = vunpack.c.l.b16 %v831
        %v1460 = vunpack.c.l.b16 %v832
        %v1461 = vunpack.c.l.b16 %v833
        %v1462 = vunpack.c.l.b16 %v834
        %v1463 = vunpack.c.l.b16 %v835
        %v1464 = vpack.c.b16 %v1449, %v1448
        %v1465 = vpack.c.b16 %v1451, %v1450
        %v1466 = vpack.c.b16 %v1453, %v1452
        %v1467 = vpack.c.b16 %v1455, %v1454
        %v1468 = vpack.c.b16 %v1457, %v1456
        %v1469 = vpack.c.b16 %v1459, %v1458
        %v1470 = vpack.c.b16 %v1461, %v1460
        %v1471 = vpack.c.b16 %v1463, %v1462
        %1480 = vmatprep.subr.bf16.mxu0 0
        %1481 = vmatpush1.bf16.msra.mxu0 %v1464
        %1482 = vmatprep.subr.bf16.mxu0 0
        %1483 = vmatpush1.bf16.msra.mxu0 %v1465
        %1484 = vmatprep.subr.bf16.mxu0 0
        %1485 = vmatpush1.bf16.msra.mxu0 %v1466
        %1486 = vmatprep.subr.bf16.mxu0 0
        %1487 = vmatpush1.bf16.msra.mxu0 %v1467
        %1488 = vmatprep.subr.bf16.mxu0 0
        %1489 = vmatpush1.bf16.msra.mxu0 %v1468
        %1490 = vmatprep.subr.bf16.mxu0 0
        %1491 = vmatpush1.bf16.msra.mxu0 %v1469
        %1492 = vmatprep.subr.bf16.mxu0 0
        %1493 = vmatpush1.bf16.msra.mxu0 %v1470
        %1494 = vmatprep.subr.bf16.mxu0 0
        %1495 = vmatpush1.bf16.msra.mxu0 %v1471
        %1496 = vmatprep.subr.bf16.mxu0 0
        %1497 = vmatpush1.bf16.msra.mxu0 0
        %1498 = vmatprep.subr.bf16.mxu0 0
        %1499 = vmatpush1.bf16.msra.mxu0 0
        %1500 = vmatprep.subr.bf16.mxu0 0
        %1501 = vmatpush1.bf16.msra.mxu0 0
        %1502 = vmatprep.subr.bf16.mxu0 0
        %1503 = vmatpush1.bf16.msra.mxu0 0
        %1504 = vmatprep.subr.bf16.mxu0 0
        %1505 = vmatpush1.bf16.msra.mxu0 0
        %1506 = vmatprep.subr.bf16.mxu0 0
        %1507 = vmatpush1.bf16.msra.mxu0 0
        %1508 = vmatprep.subr.bf16.mxu0 0
        %1509 = vmatpush1.bf16.msra.mxu0 0
        %1510 = vmatprep.subr.bf16.mxu0 0
        %1511 = vmatpush1.bf16.msra.mxu0 0
        %1512 = vmatprep.mubr.bf16.mxu0 0
        %1513 = vmatmul.mubr.bf16.gmra.mrb[0].mxu0 %v739
        %v1514 = vpop.f32.mrb[0].mxu0
        %v1515 = vadd.f32 %v1331, %v1514
        %v1516 = vpop.f32.mrb[0].mxu0
        %v1517 = vpop.f32.mrb[0].mxu0
        %v1518 = vpop.f32.mrb[0].mxu0
        %1519 = vdwg.mxu0
        %v1536 = vunpack.c.l.b16 %v836
        %v1537 = vunpack.c.l.b16 %v837
        %v1538 = vunpack.c.l.b16 %v838
        %v1539 = vunpack.c.l.b16 %v839
        %v1540 = vunpack.c.l.b16 %v840
        %v1541 = vunpack.c.l.b16 %v841
        %v1542 = vunpack.c.l.b16 %v842
        %v1543 = vunpack.c.l.b16 %v843
        %v1544 = vunpack.c.l.b16 %v844
        %v1545 = vunpack.c.l.b16 %v845
        %v1546 = vunpack.c.l.b16 %v846
        %v1547 = vunpack.c.l.b16 %v847
        %v1548 = vunpack.c.l.b16 %v848
        %v1549 = vunpack.c.l.b16 %v849
        %v1550 = vunpack.c.l.b16 %v850
        %v1551 = vunpack.c.l.b16 %v851
        %v1552 = vpack.c.b16 %v1537, %v1536
        %v1553 = vpack.c.b16 %v1539, %v1538
        %v1554 = vpack.c.b16 %v1541, %v1540
        %v1555 = vpack.c.b16 %v1543, %v1542
        %v1556 = vpack.c.b16 %v1545, %v1544
        %v1557 = vpack.c.b16 %v1547, %v1546
        %v1558 = vpack.c.b16 %v1549, %v1548
        %v1559 = vpack.c.b16 %v1551, %v1550
        %1568 = vmatprep.subr.bf16.mxu0 0
        %1569 = vmatpush1.bf16.msra.mxu0 %v1552
        %1570 = vmatprep.subr.bf16.mxu0 0
        %1571 = vmatpush1.bf16.msra.mxu0 %v1553
        %1572 = vmatprep.subr.bf16.mxu0 0
        %1573 = vmatpush1.bf16.msra.mxu0 %v1554
        %1574 = vmatprep.subr.bf16.mxu0 0
        %1575 = vmatpush1.bf16.msra.mxu0 %v1555
        %1576 = vmatprep.subr.bf16.mxu0 0
        %1577 = vmatpush1.bf16.msra.mxu0 %v1556
        %1578 = vmatprep.subr.bf16.mxu0 0
        %1579 = vmatpush1.bf16.msra.mxu0 %v1557
        %1580 = vmatprep.subr.bf16.mxu0 0
        %1581 = vmatpush1.bf16.msra.mxu0 %v1558
        %1582 = vmatprep.subr.bf16.mxu0 0
        %1583 = vmatpush1.bf16.msra.mxu0 %v1559
        %1584 = vmatprep.subr.bf16.mxu0 0
        %1585 = vmatpush1.bf16.msra.mxu0 0
        %1586 = vmatprep.subr.bf16.mxu0 0
        %1587 = vmatpush1.bf16.msra.mxu0 0
        %1588 = vmatprep.subr.bf16.mxu0 0
        %1589 = vmatpush1.bf16.msra.mxu0 0
        %1590 = vmatprep.subr.bf16.mxu0 0
        %1591 = vmatpush1.bf16.msra.mxu0 0
        %1592 = vmatprep.subr.bf16.mxu0 0
        %1593 = vmatpush1.bf16.msra.mxu0 0
        %1594 = vmatprep.subr.bf16.mxu0 0
        %1595 = vmatpush1.bf16.msra.mxu0 0
        %1596 = vmatprep.subr.bf16.mxu0 0
        %1597 = vmatpush1.bf16.msra.mxu0 0
        %1598 = vmatprep.subr.bf16.mxu0 0
        %1599 = vmatpush1.bf16.msra.mxu0 0
        %1600 = vmatprep.mubr.bf16.mxu0 0
        %1601 = vmatmul.mubr.bf16.gmra.mrb[0].mxu0 %v739
        %v1602 = vpop.f32.mrb[0].mxu0
        %v1603 = vadd.f32 %v1335, %v1602
        %v1604 = vpop.f32.mrb[0].mxu0
        %v1605 = vpop.f32.mrb[0].mxu0
        %v1606 = vpop.f32.mrb[0].mxu0
        %1607 = vdwg.mxu0
        %v1624 = vunpack.c.l.b16 %v852
        %v1625 = vunpack.c.l.b16 %v853
        %v1626 = vunpack.c.l.b16 %v854
        %v1627 = vunpack.c.l.b16 %v855
        %v1628 = vunpack.c.l.b16 %v856
        %v1629 = vunpack.c.l.b16 %v857
        %v1630 = vunpack.c.l.b16 %v858
        %v1631 = vunpack.c.l.b16 %v859
        %v1632 = vunpack.c.l.b16 %v860
        %v1633 = vunpack.c.l.b16 %v861
        %v1634 = vunpack.c.l.b16 %v862
        %v1635 = vunpack.c.l.b16 %v863
        %v1636 = vunpack.c.l.b16 %v864
        %v1637 = vunpack.c.l.b16 %v865
        %v1638 = vunpack.c.l.b16 %v866
        %v1639 = vunpack.c.l.b16 %v867
        %v1640 = vpack.c.b16 %v1625, %v1624
        %v1641 = vpack.c.b16 %v1627, %v1626
        %v1642 = vpack.c.b16 %v1629, %v1628
        %v1643 = vpack.c.b16 %v1631, %v1630
        %v1644 = vpack.c.b16 %v1633, %v1632
        %v1645 = vpack.c.b16 %v1635, %v1634
        %v1646 = vpack.c.b16 %v1637, %v1636
        %v1647 = vpack.c.b16 %v1639, %v1638
        %1656 = vmatprep.subr.bf16.mxu0 0
        %1657 = vmatpush1.bf16.msra.mxu0 %v1640
        %1658 = vmatprep.subr.bf16.mxu0 0
        %1659 = vmatpush1.bf16.msra.mxu0 %v1641
        %1660 = vmatprep.subr.bf16.mxu0 0
        %1661 = vmatpush1.bf16.msra.mxu0 %v1642
        %1662 = vmatprep.subr.bf16.mxu0 0
        %1663 = vmatpush1.bf16.msra.mxu0 %v1643
        %1664 = vmatprep.subr.bf16.mxu0 0
        %1665 = vmatpush1.bf16.msra.mxu0 %v1644
        %1666 = vmatprep.subr.bf16.mxu0 0
        %1667 = vmatpush1.bf16.msra.mxu0 %v1645
        %1668 = vmatprep.subr.bf16.mxu0 0
        %1669 = vmatpush1.bf16.msra.mxu0 %v1646
        %1670 = vmatprep.subr.bf16.mxu0 0
        %1671 = vmatpush1.bf16.msra.mxu0 %v1647
        %1672 = vmatprep.subr.bf16.mxu0 0
        %1673 = vmatpush1.bf16.msra.mxu0 0
        %1674 = vmatprep.subr.bf16.mxu0 0
        %1675 = vmatpush1.bf16.msra.mxu0 0
        %1676 = vmatprep.subr.bf16.mxu0 0
        %1677 = vmatpush1.bf16.msra.mxu0 0
        %1678 = vmatprep.subr.bf16.mxu0 0
        %1679 = vmatpush1.bf16.msra.mxu0 0
        %1680 = vmatprep.subr.bf16.mxu0 0
        %1681 = vmatpush1.bf16.msra.mxu0 0
        %1682 = vmatprep.subr.bf16.mxu0 0
        %1683 = vmatpush1.bf16.msra.mxu0 0
        %1684 = vmatprep.subr.bf16.mxu0 0
        %1685 = vmatpush1.bf16.msra.mxu0 0
        %1686 = vmatprep.subr.bf16.mxu0 0
        %1687 = vmatpush1.bf16.msra.mxu0 0
        %1688 = vmatprep.mubr.bf16.mxu0 0
        %1689 = vmatmul.mubr.bf16.gmra.mrb[0].mxu0 %v739
        %v1690 = vpop.f32.mrb[0].mxu0
        %v1691 = vadd.f32 %v1339, %v1690
        %v1692 = vpop.f32.mrb[0].mxu0
        %v1693 = vpop.f32.mrb[0].mxu0
        %v1694 = vpop.f32.mrb[0].mxu0
        %1695 = vdwg.mxu0
        %v1700 = vlaneseq
        %v1701 = vshrl.u32 %v1700, 7
        %v1702 = vsub.s32 0, %v1701
        %v1703 = vrot.slane %v940, %v1702
        %v1704 = vlaneseq
        %v1705 = vshrl.u32 %v1704, 7
        %v1706 = vsub.s32 0, %v1705
        %v1707 = vrot.slane %v941, %v1706
        %v1708 = vlaneseq
        %v1709 = vshrl.u32 %v1708, 7
        %v1710 = vsub.s32 0, %v1709
        %v1711 = vrot.slane %v942, %v1710
        %v1712 = vlaneseq
        %v1713 = vshrl.u32 %v1712, 7
        %v1714 = vsub.s32 0, %v1713
        %v1715 = vrot.slane %v943, %v1714
        %v1736 = vunpack.c.l.b16 %v868
        %v1737 = vunpack.c.l.b16 %v869
        %v1738 = vunpack.c.l.b16 %v870
        %v1739 = vunpack.c.l.b16 %v871
        %v1740 = vunpack.c.l.b16 %v872
        %v1741 = vunpack.c.l.b16 %v873
        %v1742 = vunpack.c.l.b16 %v874
        %v1743 = vunpack.c.l.b16 %v875
        %v1744 = vunpack.c.l.b16 %v876
        %v1745 = vunpack.c.l.b16 %v877
        %v1746 = vunpack.c.l.b16 %v878
        %v1747 = vunpack.c.l.b16 %v879
        %v1748 = vunpack.c.l.b16 %v880
        %v1749 = vunpack.c.l.b16 %v881
        %v1750 = vunpack.c.l.b16 %v882
        %v1751 = vunpack.c.l.b16 %v883
        %v1752 = vpack.c.b16 %v1737, %v1736
        %v1753 = vpack.c.b16 %v1739, %v1738
        %v1754 = vpack.c.b16 %v1741, %v1740
        %v1755 = vpack.c.b16 %v1743, %v1742
        %v1756 = vpack.c.b16 %v1745, %v1744
        %v1757 = vpack.c.b16 %v1747, %v1746
        %v1758 = vpack.c.b16 %v1749, %v1748
        %v1759 = vpack.c.b16 %v1751, %v1750
        %1768 = vmatprep.subr.bf16.mxu0 0
        %1769 = vmatpush1.bf16.msra.mxu0 %v1752
        %1770 = vmatprep.subr.bf16.mxu0 0
        %1771 = vmatpush1.bf16.msra.mxu0 %v1753
        %1772 = vmatprep.subr.bf16.mxu0 0
        %1773 = vmatpush1.bf16.msra.mxu0 %v1754
        %1774 = vmatprep.subr.bf16.mxu0 0
        %1775 = vmatpush1.bf16.msra.mxu0 %v1755
        %1776 = vmatprep.subr.bf16.mxu0 0
        %1777 = vmatpush1.bf16.msra.mxu0 %v1756
        %1778 = vmatprep.subr.bf16.mxu0 0
        %1779 = vmatpush1.bf16.msra.mxu0 %v1757
        %1780 = vmatprep.subr.bf16.mxu0 0
        %1781 = vmatpush1.bf16.msra.mxu0 %v1758
        %1782 = vmatprep.subr.bf16.mxu0 0
        %1783 = vmatpush1.bf16.msra.mxu0 %v1759
        %1784 = vmatprep.subr.bf16.mxu0 0
        %1785 = vmatpush1.bf16.msra.mxu0 0
        %1786 = vmatprep.subr.bf16.mxu0 0
        %1787 = vmatpush1.bf16.msra.mxu0 0
        %1788 = vmatprep.subr.bf16.mxu0 0
        %1789 = vmatpush1.bf16.msra.mxu0 0
        %1790 = vmatprep.subr.bf16.mxu0 0
        %1791 = vmatpush1.bf16.msra.mxu0 0
        %1792 = vmatprep.subr.bf16.mxu0 0
        %1793 = vmatpush1.bf16.msra.mxu0 0
        %1794 = vmatprep.subr.bf16.mxu0 0
        %1795 = vmatpush1.bf16.msra.mxu0 0
        %1796 = vmatprep.subr.bf16.mxu0 0
        %1797 = vmatpush1.bf16.msra.mxu0 0
        %1798 = vmatprep.subr.bf16.mxu0 0
        %1799 = vmatpush1.bf16.msra.mxu0 0
        %1800 = vmatprep.mubr.bf16.mxu0 0
        %1801 = vmatmul.mubr.bf16.gmra.mrb[0].mxu0 %v739
        %v1802 = vpop.f32.mrb[0].mxu0
        %v1803 = vadd.f32 %v1703, %v1802
        %v1804 = vpop.f32.mrb[0].mxu0
        %v1805 = vpop.f32.mrb[0].mxu0
        %v1806 = vpop.f32.mrb[0].mxu0
        %1807 = vdwg.mxu0
        %v1824 = vunpack.c.l.b16 %v884
        %v1825 = vunpack.c.l.b16 %v885
        %v1826 = vunpack.c.l.b16 %v886
        %v1827 = vunpack.c.l.b16 %v887
        %v1828 = vunpack.c.l.b16 %v888
        %v1829 = vunpack.c.l.b16 %v889
        %v1830 = vunpack.c.l.b16 %v890
        %v1831 = vunpack.c.l.b16 %v891
        %v1832 = vunpack.c.l.b16 %v892
        %v1833 = vunpack.c.l.b16 %v893
        %v1834 = vunpack.c.l.b16 %v894
        %v1835 = vunpack.c.l.b16 %v895
        %v1836 = vunpack.c.l.b16 %v896
        %v1837 = vunpack.c.l.b16 %v897
        %v1838 = vunpack.c.l.b16 %v898
        %v1839 = vunpack.c.l.b16 %v899
        %v1840 = vpack.c.b16 %v1825, %v1824
        %v1841 = vpack.c.b16 %v1827, %v1826
        %v1842 = vpack.c.b16 %v1829, %v1828
        %v1843 = vpack.c.b16 %v1831, %v1830
        %v1844 = vpack.c.b16 %v1833, %v1832
        %v1845 = vpack.c.b16 %v1835, %v1834
        %v1846 = vpack.c.b16 %v1837, %v1836
        %v1847 = vpack.c.b16 %v1839, %v1838
        %1856 = vmatprep.subr.bf16.mxu0 0
        %1857 = vmatpush1.bf16.msra.mxu0 %v1840
        %1858 = vmatprep.subr.bf16.mxu0 0
        %1859 = vmatpush1.bf16.msra.mxu0 %v1841
        %1860 = vmatprep.subr.bf16.mxu0 0
        %1861 = vmatpush1.bf16.msra.mxu0 %v1842
        %1862 = vmatprep.subr.bf16.mxu0 0
        %1863 = vmatpush1.bf16.msra.mxu0 %v1843
        %1864 = vmatprep.subr.bf16.mxu0 0
        %1865 = vmatpush1.bf16.msra.mxu0 %v1844
        %1866 = vmatprep.subr.bf16.mxu0 0
        %1867 = vmatpush1.bf16.msra.mxu0 %v1845
        %1868 = vmatprep.subr.bf16.mxu0 0
        %1869 = vmatpush1.bf16.msra.mxu0 %v1846
        %1870 = vmatprep.subr.bf16.mxu0 0
        %1871 = vmatpush1.bf16.msra.mxu0 %v1847
        %1872 = vmatprep.subr.bf16.mxu0 0
        %1873 = vmatpush1.bf16.msra.mxu0 0
        %1874 = vmatprep.subr.bf16.mxu0 0
        %1875 = vmatpush1.bf16.msra.mxu0 0
        %1876 = vmatprep.subr.bf16.mxu0 0
        %1877 = vmatpush1.bf16.msra.mxu0 0
        %1878 = vmatprep.subr.bf16.mxu0 0
        %1879 = vmatpush1.bf16.msra.mxu0 0
        %1880 = vmatprep.subr.bf16.mxu0 0
        %1881 = vmatpush1.bf16.msra.mxu0 0
        %1882 = vmatprep.subr.bf16.mxu0 0
        %1883 = vmatpush1.bf16.msra.mxu0 0
        %1884 = vmatprep.subr.bf16.mxu0 0
        %1885 = vmatpush1.bf16.msra.mxu0 0
        %1886 = vmatprep.subr.bf16.mxu0 0
        %1887 = vmatpush1.bf16.msra.mxu0 0
        %1888 = vmatprep.mubr.bf16.mxu0 0
        %1889 = vmatmul.mubr.bf16.gmra.mrb[0].mxu0 %v739
        %v1890 = vpop.f32.mrb[0].mxu0
        %v1891 = vadd.f32 %v1707, %v1890
        %v1892 = vpop.f32.mrb[0].mxu0
        %v1893 = vpop.f32.mrb[0].mxu0
        %v1894 = vpop.f32.mrb[0].mxu0
        %1895 = vdwg.mxu0
        %v1912 = vunpack.c.l.b16 %v900
        %v1913 = vunpack.c.l.b16 %v901
        %v1914 = vunpack.c.l.b16 %v902
        %v1915 = vunpack.c.l.b16 %v903
        %v1916 = vunpack.c.l.b16 %v904
        %v1917 = vunpack.c.l.b16 %v905
        %v1918 = vunpack.c.l.b16 %v906
        %v1919 = vunpack.c.l.b16 %v907
        %v1920 = vunpack.c.l.b16 %v908
        %v1921 = vunpack.c.l.b16 %v909
        %v1922 = vunpack.c.l.b16 %v910
        %v1923 = vunpack.c.l.b16 %v911
        %v1924 = vunpack.c.l.b16 %v912
        %v1925 = vunpack.c.l.b16 %v913
        %v1926 = vunpack.c.l.b16 %v914
        %v1927 = vunpack.c.l.b16 %v915
        %v1928 = vpack.c.b16 %v1913, %v1912
        %v1929 = vpack.c.b16 %v1915, %v1914
        %v1930 = vpack.c.b16 %v1917, %v1916
        %v1931 = vpack.c.b16 %v1919, %v1918
        %v1932 = vpack.c.b16 %v1921, %v1920
        %v1933 = vpack.c.b16 %v1923, %v1922
        %v1934 = vpack.c.b16 %v1925, %v1924
        %v1935 = vpack.c.b16 %v1927, %v1926
        %1944 = vmatprep.subr.bf16.mxu0 0
        %1945 = vmatpush1.bf16.msra.mxu0 %v1928
        %1946 = vmatprep.subr.bf16.mxu0 0
        %1947 = vmatpush1.bf16.msra.mxu0 %v1929
        %1948 = vmatprep.subr.bf16.mxu0 0
        %1949 = vmatpush1.bf16.msra.mxu0 %v1930
        %1950 = vmatprep.subr.bf16.mxu0 0
        %1951 = vmatpush1.bf16.msra.mxu0 %v1931
        %1952 = vmatprep.subr.bf16.mxu0 0
        %1953 = vmatpush1.bf16.msra.mxu0 %v1932
        %1954 = vmatprep.subr.bf16.mxu0 0
        %1955 = vmatpush1.bf16.msra.mxu0 %v1933
        %1956 = vmatprep.subr.bf16.mxu0 0
        %1957 = vmatpush1.bf16.msra.mxu0 %v1934
        %1958 = vmatprep.subr.bf16.mxu0 0
        %1959 = vmatpush1.bf16.msra.mxu0 %v1935
        %1960 = vmatprep.subr.bf16.mxu0 0
        %1961 = vmatpush1.bf16.msra.mxu0 0
        %1962 = vmatprep.subr.bf16.mxu0 0
        %1963 = vmatpush1.bf16.msra.mxu0 0
        %1964 = vmatprep.subr.bf16.mxu0 0
        %1965 = vmatpush1.bf16.msra.mxu0 0
        %1966 = vmatprep.subr.bf16.mxu0 0
        %1967 = vmatpush1.bf16.msra.mxu0 0
        %1968 = vmatprep.subr.bf16.mxu0 0
        %1969 = vmatpush1.bf16.msra.mxu0 0
        %1970 = vmatprep.subr.bf16.mxu0 0
        %1971 = vmatpush1.bf16.msra.mxu0 0
        %1972 = vmatprep.subr.bf16.mxu0 0
        %1973 = vmatpush1.bf16.msra.mxu0 0
        %1974 = vmatprep.subr.bf16.mxu0 0
        %1975 = vmatpush1.bf16.msra.mxu0 0
        %1976 = vmatprep.mubr.bf16.mxu0 0
        %1977 = vmatmul.mubr.bf16.gmra.mrb[0].mxu0 %v739
        %v1978 = vpop.f32.mrb[0].mxu0
        %v1979 = vadd.f32 %v1711, %v1978
        %v1980 = vpop.f32.mrb[0].mxu0
        %v1981 = vpop.f32.mrb[0].mxu0
        %v1982 = vpop.f32.mrb[0].mxu0
        %1983 = vdwg.mxu0
        %v2000 = vunpack.c.l.b16 %v916
        %v2001 = vunpack.c.l.b16 %v917
        %v2002 = vunpack.c.l.b16 %v918
        %v2003 = vunpack.c.l.b16 %v919
        %v2004 = vunpack.c.l.b16 %v920
        %v2005 = vunpack.c.l.b16 %v921
        %v2006 = vunpack.c.l.b16 %v922
        %v2007 = vunpack.c.l.b16 %v923
        %v2008 = vunpack.c.l.b16 %v924
        %v2009 = vunpack.c.l.b16 %v925
        %v2010 = vunpack.c.l.b16 %v926
        %v2011 = vunpack.c.l.b16 %v927
        %v2012 = vunpack.c.l.b16 %v928
        %v2013 = vunpack.c.l.b16 %v929
        %v2014 = vunpack.c.l.b16 %v930
        %v2015 = vunpack.c.l.b16 %v931
        %v2016 = vpack.c.b16 %v2001, %v2000
        %v2017 = vpack.c.b16 %v2003, %v2002
        %v2018 = vpack.c.b16 %v2005, %v2004
        %v2019 = vpack.c.b16 %v2007, %v2006
        %v2020 = vpack.c.b16 %v2009, %v2008
        %v2021 = vpack.c.b16 %v2011, %v2010
        %v2022 = vpack.c.b16 %v2013, %v2012
        %v2023 = vpack.c.b16 %v2015, %v2014
        %2032 = vmatprep.subr.bf16.mxu0 0
        %2033 = vmatpush1.bf16.msra.mxu0 %v2016
        %2034 = vmatprep.subr.bf16.mxu0 0
        %2035 = vmatpush1.bf16.msra.mxu0 %v2017
        %2036 = vmatprep.subr.bf16.mxu0 0
        %2037 = vmatpush1.bf16.msra.mxu0 %v2018
        %2038 = vmatprep.subr.bf16.mxu0 0
        %2039 = vmatpush1.bf16.msra.mxu0 %v2019
        %2040 = vmatprep.subr.bf16.mxu0 0
        %2041 = vmatpush1.bf16.msra.mxu0 %v2020
        %2042 = vmatprep.subr.bf16.mxu0 0
        %2043 = vmatpush1.bf16.msra.mxu0 %v2021
        %2044 = vmatprep.subr.bf16.mxu0 0
        %2045 = vmatpush1.bf16.msra.mxu0 %v2022
        %2046 = vmatprep.subr.bf16.mxu0 0
        %2047 = vmatpush1.bf16.msra.mxu0 %v2023
        %2048 = vmatprep.subr.bf16.mxu0 0
        %2049 = vmatpush1.bf16.msra.mxu0 0
        %2050 = vmatprep.subr.bf16.mxu0 0
        %2051 = vmatpush1.bf16.msra.mxu0 0
        %2052 = vmatprep.subr.bf16.mxu0 0
        %2053 = vmatpush1.bf16.msra.mxu0 0
        %2054 = vmatprep.subr.bf16.mxu0 0
        %2055 = vmatpush1.bf16.msra.mxu0 0
        %2056 = vmatprep.subr.bf16.mxu0 0
        %2057 = vmatpush1.bf16.msra.mxu0 0
        %2058 = vmatprep.subr.bf16.mxu0 0
        %2059 = vmatpush1.bf16.msra.mxu0 0
        %2060 = vmatprep.subr.bf16.mxu0 0
        %2061 = vmatpush1.bf16.msra.mxu0 0
        %2062 = vmatprep.subr.bf16.mxu0 0
        %2063 = vmatpush1.bf16.msra.mxu0 0
        %2064 = vmatprep.mubr.bf16.mxu0 0
        %2065 = vmatmul.mubr.bf16.gmra.mrb[0].mxu0 %v739
        %v2066 = vpop.f32.mrb[0].mxu0
        %v2067 = vadd.f32 %v1715, %v2066
        %v2068 = vpop.f32.mrb[0].mxu0
        %v2069 = vpop.f32.mrb[0].mxu0
        %v2070 = vpop.f32.mrb[0].mxu0
        %2071 = vdwg.mxu0
        %v2072 = vpack.c.bf16 %v1051, %v1051
        %v2073 = vpack.c.bf16 %v1139, %v1139
        %v2074 = vpack.c.bf16 %v1227, %v1227
        %v2075 = vpack.c.bf16 %v1315, %v1315
        %v2076 = vpack.c.bf16 %v1427, %v1427
        %v2077 = vpack.c.bf16 %v1515, %v1515
        %v2078 = vpack.c.bf16 %v1603, %v1603
        %v2079 = vpack.c.bf16 %v1691, %v1691
        %vm2080 = vcmask 261120
        %v2082 = vsel %vm2080, %v2072, 0
        %v2085 = vsel %vm2080, %v2076, 0
        %2087 = vmatprep.subr.bf16.mxu0 0
        %2088 = vmatpush1.bf16.xpose.msra.mxu0 %v2085
        %2089 = vmatprep.subr.bf16.mxu0 0
        %2090 = vmatpush1.bf16.xpose.msra.mxu0 0
        %2091 = vmatprep.subr.bf16.mxu0 0
        %2092 = vmatpush1.bf16.xpose.msra.mxu0 0
        %2093 = vmatprep.subr.bf16.mxu0 0
        %2094 = vmatpush1.bf16.xpose.msra.mxu0 0
        %2095 = vmatprep.subr.bf16.mxu0 0
        %2096 = vmatpush1.bf16.xpose.msra.mxu0 0
        %2097 = vmatprep.subr.bf16.mxu0 0
        %2098 = vmatpush1.bf16.xpose.msra.mxu0 0
        %2099 = vmatprep.subr.bf16.mxu0 0
        %2100 = vmatpush1.bf16.xpose.msra.mxu0 0
        %2101 = vmatprep.subr.bf16.mxu0 0
        %2102 = vmatpush1.bf16.xpose.msra.mxu0 0
        %2103 = vmatprep.subr.bf16.mxu0 0
        %2104 = vmatpush1.bf16.xpose.msra.mxu0 0
        %2105 = vmatprep.subr.bf16.mxu0 0
        %2106 = vmatpush1.bf16.xpose.msra.mxu0 0
        %2107 = vmatprep.subr.bf16.mxu0 0
        %2108 = vmatpush1.bf16.xpose.msra.mxu0 0
        %2109 = vmatprep.subr.bf16.mxu0 0
        %2110 = vmatpush1.bf16.xpose.msra.mxu0 0
        %2111 = vmatprep.subr.bf16.mxu0 0
        %2112 = vmatpush1.bf16.xpose.msra.mxu0 0
        %2113 = vmatprep.subr.bf16.mxu0 0
        %2114 = vmatpush1.bf16.xpose.msra.mxu0 0
        %2115 = vmatprep.subr.bf16.mxu0 0
        %2116 = vmatpush1.bf16.xpose.msra.mxu0 0
        %2117 = vmatprep.subr.bf16.mxu0 0
        %2118 = vmatpush1.bf16.xpose.msra.mxu0 0
        %2119 = vmatprep.mubr.bf16.mxu0 0
        %2120 = vmatmul.mubr.bf16.gmra.mrb[0].mxu0 %v2082
        %v2121 = vpop.f32.mrb[0].mxu0
        %v2122 = vadd.f32 %v709, %v2121
        %v2123 = vpop.f32.mrb[0].mxu0
        %v2124 = vpop.f32.mrb[0].mxu0
        %v2125 = vpop.f32.mrb[0].mxu0
        %2126 = vdwg.mxu0
        %v2128 = vsel %vm2080, %v2073, 0
        %v2131 = vsel %vm2080, %v2077, 0
        %2133 = vmatprep.subr.bf16.mxu0 0
        %2134 = vmatpush1.bf16.xpose.msra.mxu0 %v2131
        %2135 = vmatprep.subr.bf16.mxu0 0
        %2136 = vmatpush1.bf16.xpose.msra.mxu0 0
        %2137 = vmatprep.subr.bf16.mxu0 0
        %2138 = vmatpush1.bf16.xpose.msra.mxu0 0
        %2139 = vmatprep.subr.bf16.mxu0 0
        %2140 = vmatpush1.bf16.xpose.msra.mxu0 0
        %2141 = vmatprep.subr.bf16.mxu0 0
        %2142 = vmatpush1.bf16.xpose.msra.mxu0 0
        %2143 = vmatprep.subr.bf16.mxu0 0
        %2144 = vmatpush1.bf16.xpose.msra.mxu0 0
        %2145 = vmatprep.subr.bf16.mxu0 0
        %2146 = vmatpush1.bf16.xpose.msra.mxu0 0
        %2147 = vmatprep.subr.bf16.mxu0 0
        %2148 = vmatpush1.bf16.xpose.msra.mxu0 0
        %2149 = vmatprep.subr.bf16.mxu0 0
        %2150 = vmatpush1.bf16.xpose.msra.mxu0 0
        %2151 = vmatprep.subr.bf16.mxu0 0
        %2152 = vmatpush1.bf16.xpose.msra.mxu0 0
        %2153 = vmatprep.subr.bf16.mxu0 0
        %2154 = vmatpush1.bf16.xpose.msra.mxu0 0
        %2155 = vmatprep.subr.bf16.mxu0 0
        %2156 = vmatpush1.bf16.xpose.msra.mxu0 0
        %2157 = vmatprep.subr.bf16.mxu0 0
        %2158 = vmatpush1.bf16.xpose.msra.mxu0 0
        %2159 = vmatprep.subr.bf16.mxu0 0
        %2160 = vmatpush1.bf16.xpose.msra.mxu0 0
        %2161 = vmatprep.subr.bf16.mxu0 0
        %2162 = vmatpush1.bf16.xpose.msra.mxu0 0
        %2163 = vmatprep.subr.bf16.mxu0 0
        %2164 = vmatpush1.bf16.xpose.msra.mxu0 0
        %2165 = vmatprep.mubr.bf16.mxu0 0
        %2166 = vmatmul.mubr.bf16.gmra.mrb[0].mxu0 %v2128
        %v2167 = vpop.f32.mrb[0].mxu0
        %v2168 = vadd.f32 %v709, %v2167
        %v2169 = vpop.f32.mrb[0].mxu0
        %v2170 = vpop.f32.mrb[0].mxu0
        %v2171 = vpop.f32.mrb[0].mxu0
        %2172 = vdwg.mxu0
        %v2174 = vsel %vm2080, %v2074, 0
        %v2177 = vsel %vm2080, %v2078, 0
        %2179 = vmatprep.subr.bf16.mxu0 0
        %2180 = vmatpush1.bf16.xpose.msra.mxu0 %v2177
        %2181 = vmatprep.subr.bf16.mxu0 0
        %2182 = vmatpush1.bf16.xpose.msra.mxu0 0
        %2183 = vmatprep.subr.bf16.mxu0 0
        %2184 = vmatpush1.bf16.xpose.msra.mxu0 0
        %2185 = vmatprep.subr.bf16.mxu0 0
        %2186 = vmatpush1.bf16.xpose.msra.mxu0 0
        %2187 = vmatprep.subr.bf16.mxu0 0
        %2188 = vmatpush1.bf16.xpose.msra.mxu0 0
        %2189 = vmatprep.subr.bf16.mxu0 0
        %2190 = vmatpush1.bf16.xpose.msra.mxu0 0
        %2191 = vmatprep.subr.bf16.mxu0 0
        %2192 = vmatpush1.bf16.xpose.msra.mxu0 0
        %2193 = vmatprep.subr.bf16.mxu0 0
        %2194 = vmatpush1.bf16.xpose.msra.mxu0 0
        %2195 = vmatprep.subr.bf16.mxu0 0
        %2196 = vmatpush1.bf16.xpose.msra.mxu0 0
        %2197 = vmatprep.subr.bf16.mxu0 0
        %2198 = vmatpush1.bf16.xpose.msra.mxu0 0
        %2199 = vmatprep.subr.bf16.mxu0 0
        %2200 = vmatpush1.bf16.xpose.msra.mxu0 0
        %2201 = vmatprep.subr.bf16.mxu0 0
        %2202 = vmatpush1.bf16.xpose.msra.mxu0 0
        %2203 = vmatprep.subr.bf16.mxu0 0
        %2204 = vmatpush1.bf16.xpose.msra.mxu0 0
        %2205 = vmatprep.subr.bf16.mxu0 0
        %2206 = vmatpush1.bf16.xpose.msra.mxu0 0
        %2207 = vmatprep.subr.bf16.mxu0 0
        %2208 = vmatpush1.bf16.xpose.msra.mxu0 0
        %2209 = vmatprep.subr.bf16.mxu0 0
        %2210 = vmatpush1.bf16.xpose.msra.mxu0 0
        %2211 = vmatprep.mubr.bf16.mxu0 0
        %2212 = vmatmul.mubr.bf16.gmra.mrb[0].mxu0 %v2174
        %v2213 = vpop.f32.mrb[0].mxu0
        %v2214 = vadd.f32 %v709, %v2213
        %v2215 = vpop.f32.mrb[0].mxu0
        %v2216 = vpop.f32.mrb[0].mxu0
        %v2217 = vpop.f32.mrb[0].mxu0
        %2218 = vdwg.mxu0
        %v2220 = vsel %vm2080, %v2075, 0
        %v2223 = vsel %vm2080, %v2079, 0
        %2225 = vmatprep.subr.bf16.mxu0 0
        %2226 = vmatpush1.bf16.xpose.msra.mxu0 %v2223
        %2227 = vmatprep.subr.bf16.mxu0 0
        %2228 = vmatpush1.bf16.xpose.msra.mxu0 0
        %2229 = vmatprep.subr.bf16.mxu0 0
        %2230 = vmatpush1.bf16.xpose.msra.mxu0 0
        %2231 = vmatprep.subr.bf16.mxu0 0
        %2232 = vmatpush1.bf16.xpose.msra.mxu0 0
        %2233 = vmatprep.subr.bf16.mxu0 0
        %2234 = vmatpush1.bf16.xpose.msra.mxu0 0
        %2235 = vmatprep.subr.bf16.mxu0 0
        %2236 = vmatpush1.bf16.xpose.msra.mxu0 0
        %2237 = vmatprep.subr.bf16.mxu0 0
        %2238 = vmatpush1.bf16.xpose.msra.mxu0 0
        %2239 = vmatprep.subr.bf16.mxu0 0
        %2240 = vmatpush1.bf16.xpose.msra.mxu0 0
        %2241 = vmatprep.subr.bf16.mxu0 0
        %2242 = vmatpush1.bf16.xpose.msra.mxu0 0
        %2243 = vmatprep.subr.bf16.mxu0 0
        %2244 = vmatpush1.bf16.xpose.msra.mxu0 0
        %2245 = vmatprep.subr.bf16.mxu0 0
        %2246 = vmatpush1.bf16.xpose.msra.mxu0 0
        %2247 = vmatprep.subr.bf16.mxu0 0
        %2248 = vmatpush1.bf16.xpose.msra.mxu0 0
        %2249 = vmatprep.subr.bf16.mxu0 0
        %2250 = vmatpush1.bf16.xpose.msra.mxu0 0
        %2251 = vmatprep.subr.bf16.mxu0 0
        %2252 = vmatpush1.bf16.xpose.msra.mxu0 0
        %2253 = vmatprep.subr.bf16.mxu0 0
        %2254 = vmatpush1.bf16.xpose.msra.mxu0 0
        %2255 = vmatprep.subr.bf16.mxu0 0
        %2256 = vmatpush1.bf16.xpose.msra.mxu0 0
        %2257 = vmatprep.mubr.bf16.mxu0 0
        %2258 = vmatmul.mubr.bf16.gmra.mrb[0].mxu0 %v2220
        %v2259 = vpop.f32.mrb[0].mxu0
        %v2260 = vadd.f32 %v709, %v2259
        %v2261 = vpop.f32.mrb[0].mxu0
        %v2262 = vpop.f32.mrb[0].mxu0
        %v2263 = vpop.f32.mrb[0].mxu0
        %2264 = vdwg.mxu0
        %vm2265 = vcmask 64512
        %v2266 = vsel %vm2265, %v2122, -inf
        %2267 = vmax.xlane.f32.xlu0 %v2266
        %v2268 = vpop.xlane.xlu0 %2267
        %v2269 = vsel %vm2265, %v2168, -inf
        %2270 = vmax.xlane.f32.xlu0 %v2269
        %v2271 = vpop.xlane.xlu0 %2270
        %v2272 = vsel %vm2265, %v2214, -inf
        %2273 = vmax.xlane.f32.xlu0 %v2272
        %v2274 = vpop.xlane.xlu0 %2273
        %v2275 = vsel %vm2265, %v2260, -inf
        %2276 = vmax.xlane.f32.xlu0 %v2275
        %v2277 = vpop.xlane.xlu0 %2276
        %v2278 = vsub.f32 %v2122, %v2268
        %v2279 = vsub.f32 %v2168, %v2271
        %v2280 = vsub.f32 %v2214, %v2274
        %v2281 = vsub.f32 %v2260, %v2277
        %v2282 = vmul.f32 %v2278, 1.442695
        %v2283 = vpow.pop %v2282
        %v2284 = vmul.f32 %v2279, 1.442695
        %v2285 = vpow.pop %v2284
        %v2286 = vmul.f32 %v2280, 1.442695
        %v2287 = vpow.pop %v2286
        %v2288 = vmul.f32 %v2281, 1.442695
        %v2289 = vpow.pop %v2288
        %v2290 = vsel %vm2265, %v2283, 0.0
        %2291 = vadd.xlane.f32.xlu0 %v2290
        %v2292 = vpop.xlane.xlu0 %2291
        %v2293 = vsel %vm2265, %v2285, 0.0
        %2294 = vadd.xlane.f32.xlu0 %v2293
        %v2295 = vpop.xlane.xlu0 %2294
        %v2296 = vsel %vm2265, %v2287, 0.0
        %2297 = vadd.xlane.f32.xlu0 %v2296
        %v2298 = vpop.xlane.xlu0 %2297
        %v2299 = vsel %vm2265, %v2289, 0.0
        %2300 = vadd.xlane.f32.xlu0 %v2299
        %v2301 = vpop.xlane.xlu0 %2300
        %v2302 = vrcp.pop %v2292
        %v2303 = vrcp.pop %v2295
        %v2304 = vrcp.pop %v2298
        %v2305 = vrcp.pop %v2301
        %v2306 = vmul.f32 %v2283, %v2302
        %v2307 = vmul.f32 %v2285, %v2303
        %v2308 = vmul.f32 %v2287, %v2304
        %v2309 = vmul.f32 %v2289, %v2305
        %v2310 = vpack.c.bf16 %v2306, %v2306
        %v2311 = vpack.c.bf16 %v2307, %v2307
        %v2312 = vpack.c.bf16 %v2308, %v2308
        %v2313 = vpack.c.bf16 %v2309, %v2309
        %v2314 = vpack.c.bf16 %v1803, %v1803
        %v2315 = vpack.c.bf16 %v1891, %v1891
        %v2316 = vpack.c.bf16 %v1979, %v1979
        %v2317 = vpack.c.bf16 %v2067, %v2067
        %v2319 = vsel %vm2265, %v2310, 0
        %vm2321 = vcmask 1043456
        %v2323 = vsel %vm2321, %v2314, 0
        %2325 = vmatprep.subr.bf16.mxu0 0
        %2326 = vmatpush1.bf16.msra.mxu0 %v2323
        %2327 = vmatprep.subr.bf16.mxu0 0
        %2328 = vmatpush1.bf16.msra.mxu0 0
        %2329 = vmatprep.subr.bf16.mxu0 0
        %2330 = vmatpush1.bf16.msra.mxu0 0
        %2331 = vmatprep.subr.bf16.mxu0 0
        %2332 = vmatpush1.bf16.msra.mxu0 0
        %2333 = vmatprep.subr.bf16.mxu0 0
        %2334 = vmatpush1.bf16.msra.mxu0 0
        %2335 = vmatprep.subr.bf16.mxu0 0
        %2336 = vmatpush1.bf16.msra.mxu0 0
        %2337 = vmatprep.subr.bf16.mxu0 0
        %2338 = vmatpush1.bf16.msra.mxu0 0
        %2339 = vmatprep.subr.bf16.mxu0 0
        %2340 = vmatpush1.bf16.msra.mxu0 0
        %2341 = vmatprep.subr.bf16.mxu0 0
        %2342 = vmatpush1.bf16.msra.mxu0 0
        %2343 = vmatprep.subr.bf16.mxu0 0
        %2344 = vmatpush1.bf16.msra.mxu0 0
        %2345 = vmatprep.subr.bf16.mxu0 0
        %2346 = vmatpush1.bf16.msra.mxu0 0
        %2347 = vmatprep.subr.bf16.mxu0 0
        %2348 = vmatpush1.bf16.msra.mxu0 0
        %2349 = vmatprep.subr.bf16.mxu0 0
        %2350 = vmatpush1.bf16.msra.mxu0 0
        %2351 = vmatprep.subr.bf16.mxu0 0
        %2352 = vmatpush1.bf16.msra.mxu0 0
        %2353 = vmatprep.subr.bf16.mxu0 0
        %2354 = vmatpush1.bf16.msra.mxu0 0
        %2355 = vmatprep.subr.bf16.mxu0 0
        %2356 = vmatpush1.bf16.msra.mxu0 0
        %2357 = vmatprep.mubr.bf16.mxu0 0
        %2358 = vmatmul.mubr.bf16.gmra.mrb[0].mxu0 %v2319
        %v2359 = vpop.f32.mrb[0].mxu0
        %v2360 = vadd.f32 0.0, %v2359
        %v2361 = vpop.f32.mrb[0].mxu0
        %v2362 = vpop.f32.mrb[0].mxu0
        %v2363 = vpop.f32.mrb[0].mxu0
        %2364 = vdwg.mxu0
        %v2366 = vsel %vm2265, %v2311, 0
        %v2369 = vsel %vm2321, %v2315, 0
        %2371 = vmatprep.subr.bf16.mxu0 0
        %2372 = vmatpush1.bf16.msra.mxu0 %v2369
        %2373 = vmatprep.subr.bf16.mxu0 0
        %2374 = vmatpush1.bf16.msra.mxu0 0
        %2375 = vmatprep.subr.bf16.mxu0 0
        %2376 = vmatpush1.bf16.msra.mxu0 0
        %2377 = vmatprep.subr.bf16.mxu0 0
        %2378 = vmatpush1.bf16.msra.mxu0 0
        %2379 = vmatprep.subr.bf16.mxu0 0
        %2380 = vmatpush1.bf16.msra.mxu0 0
        %2381 = vmatprep.subr.bf16.mxu0 0
        %2382 = vmatpush1.bf16.msra.mxu0 0
        %2383 = vmatprep.subr.bf16.mxu0 0
        %2384 = vmatpush1.bf16.msra.mxu0 0
        %2385 = vmatprep.subr.bf16.mxu0 0
        %2386 = vmatpush1.bf16.msra.mxu0 0
        %2387 = vmatprep.subr.bf16.mxu0 0
        %2388 = vmatpush1.bf16.msra.mxu0 0
        %2389 = vmatprep.subr.bf16.mxu0 0
        %2390 = vmatpush1.bf16.msra.mxu0 0
        %2391 = vmatprep.subr.bf16.mxu0 0
        %2392 = vmatpush1.bf16.msra.mxu0 0
        %2393 = vmatprep.subr.bf16.mxu0 0
        %2394 = vmatpush1.bf16.msra.mxu0 0
        %2395 = vmatprep.subr.bf16.mxu0 0
        %2396 = vmatpush1.bf16.msra.mxu0 0
        %2397 = vmatprep.subr.bf16.mxu0 0
        %2398 = vmatpush1.bf16.msra.mxu0 0
        %2399 = vmatprep.subr.bf16.mxu0 0
        %2400 = vmatpush1.bf16.msra.mxu0 0
        %2401 = vmatprep.subr.bf16.mxu0 0
        %2402 = vmatpush1.bf16.msra.mxu0 0
        %2403 = vmatprep.mubr.bf16.mxu0 0
        %2404 = vmatmul.mubr.bf16.gmra.mrb[0].mxu0 %v2366
        %v2405 = vpop.f32.mrb[0].mxu0
        %v2406 = vadd.f32 0.0, %v2405
        %v2407 = vpop.f32.mrb[0].mxu0
        %v2408 = vpop.f32.mrb[0].mxu0
        %v2409 = vpop.f32.mrb[0].mxu0
        %2410 = vdwg.mxu0
        %v2412 = vsel %vm2265, %v2312, 0
        %v2415 = vsel %vm2321, %v2316, 0
        %2417 = vmatprep.subr.bf16.mxu0 0
        %2418 = vmatpush1.bf16.msra.mxu0 %v2415
        %2419 = vmatprep.subr.bf16.mxu0 0
        %2420 = vmatpush1.bf16.msra.mxu0 0
        %2421 = vmatprep.subr.bf16.mxu0 0
        %2422 = vmatpush1.bf16.msra.mxu0 0
        %2423 = vmatprep.subr.bf16.mxu0 0
        %2424 = vmatpush1.bf16.msra.mxu0 0
        %2425 = vmatprep.subr.bf16.mxu0 0
        %2426 = vmatpush1.bf16.msra.mxu0 0
        %2427 = vmatprep.subr.bf16.mxu0 0
        %2428 = vmatpush1.bf16.msra.mxu0 0
        %2429 = vmatprep.subr.bf16.mxu0 0
        %2430 = vmatpush1.bf16.msra.mxu0 0
        %2431 = vmatprep.subr.bf16.mxu0 0
        %2432 = vmatpush1.bf16.msra.mxu0 0
        %2433 = vmatprep.subr.bf16.mxu0 0
        %2434 = vmatpush1.bf16.msra.mxu0 0
        %2435 = vmatprep.subr.bf16.mxu0 0
        %2436 = vmatpush1.bf16.msra.mxu0 0
        %2437 = vmatprep.subr.bf16.mxu0 0
        %2438 = vmatpush1.bf16.msra.mxu0 0
        %2439 = vmatprep.subr.bf16.mxu0 0
        %2440 = vmatpush1.bf16.msra.mxu0 0
        %2441 = vmatprep.subr.bf16.mxu0 0
        %2442 = vmatpush1.bf16.msra.mxu0 0
        %2443 = vmatprep.subr.bf16.mxu0 0
        %2444 = vmatpush1.bf16.msra.mxu0 0
        %2445 = vmatprep.subr.bf16.mxu0 0
        %2446 = vmatpush1.bf16.msra.mxu0 0
        %2447 = vmatprep.subr.bf16.mxu0 0
        %2448 = vmatpush1.bf16.msra.mxu0 0
        %2449 = vmatprep.mubr.bf16.mxu0 0
        %2450 = vmatmul.mubr.bf16.gmra.mrb[0].mxu0 %v2412
        %v2451 = vpop.f32.mrb[0].mxu0
        %v2452 = vadd.f32 0.0, %v2451
        %v2453 = vpop.f32.mrb[0].mxu0
        %v2454 = vpop.f32.mrb[0].mxu0
        %v2455 = vpop.f32.mrb[0].mxu0
        %2456 = vdwg.mxu0
        %v2458 = vsel %vm2265, %v2313, 0
        %v2461 = vsel %vm2321, %v2317, 0
        %2463 = vmatprep.subr.bf16.mxu0 0
        %2464 = vmatpush1.bf16.msra.mxu0 %v2461
        %2465 = vmatprep.subr.bf16.mxu0 0
        %2466 = vmatpush1.bf16.msra.mxu0 0
        %2467 = vmatprep.subr.bf16.mxu0 0
        %2468 = vmatpush1.bf16.msra.mxu0 0
        %2469 = vmatprep.subr.bf16.mxu0 0
        %2470 = vmatpush1.bf16.msra.mxu0 0
        %2471 = vmatprep.subr.bf16.mxu0 0
        %2472 = vmatpush1.bf16.msra.mxu0 0
        %2473 = vmatprep.subr.bf16.mxu0 0
        %2474 = vmatpush1.bf16.msra.mxu0 0
        %2475 = vmatprep.subr.bf16.mxu0 0
        %2476 = vmatpush1.bf16.msra.mxu0 0
        %2477 = vmatprep.subr.bf16.mxu0 0
        %2478 = vmatpush1.bf16.msra.mxu0 0
        %2479 = vmatprep.subr.bf16.mxu0 0
        %2480 = vmatpush1.bf16.msra.mxu0 0
        %2481 = vmatprep.subr.bf16.mxu0 0
        %2482 = vmatpush1.bf16.msra.mxu0 0
        %2483 = vmatprep.subr.bf16.mxu0 0
        %2484 = vmatpush1.bf16.msra.mxu0 0
        %2485 = vmatprep.subr.bf16.mxu0 0
        %2486 = vmatpush1.bf16.msra.mxu0 0
        %2487 = vmatprep.subr.bf16.mxu0 0
        %2488 = vmatpush1.bf16.msra.mxu0 0
        %2489 = vmatprep.subr.bf16.mxu0 0
        %2490 = vmatpush1.bf16.msra.mxu0 0
        %2491 = vmatprep.subr.bf16.mxu0 0
        %2492 = vmatpush1.bf16.msra.mxu0 0
        %2493 = vmatprep.subr.bf16.mxu0 0
        %2494 = vmatpush1.bf16.msra.mxu0 0
        %2495 = vmatprep.mubr.bf16.mxu0 0
        %2496 = vmatmul.mubr.bf16.gmra.mrb[0].mxu0 %v2458
        %v2497 = vpop.f32.mrb[0].mxu0
        %v2498 = vadd.f32 0.0, %v2497
        %v2499 = vpop.f32.mrb[0].mxu0
        %v2500 = vpop.f32.mrb[0].mxu0
        %v2501 = vpop.f32.mrb[0].mxu0
        %2502 = vdwg.mxu0
        %v2503 = vpack.c.bf16 %v2360, %v2360
        %v2504 = vpack.c.bf16 %v2406, %v2406
        %v2505 = vpack.c.bf16 %v2452, %v2452
        %v2506 = vpack.c.bf16 %v2498, %v2498
        %v2507 = vld [vmem:[%s13] sm:$0xf]
        %v2508 = vld [vmem:[%s13 + $0x4] sm:$0xf]
        %v2509 = vld [vmem:[%s13 + $0x8] sm:$0xf]
        %v2510 = vld [vmem:[%s13 + $0xc] sm:$0xf]
        %v2511 = vld [vmem:[%s13 + $0x10] sm:$0xf]
        %v2512 = vld [vmem:[%s13 + $0x14] sm:$0xf]
        %v2513 = vld [vmem:[%s13 + $0x18] sm:$0xf]
        %v2514 = vld [vmem:[%s13 + $0x1c] sm:$0xf]
        %v2515 = vld [vmem:[%s13 + $0x20] sm:$0xf]
        %v2516 = vld [vmem:[%s13 + $0x24] sm:$0xf]
        %v2517 = vld [vmem:[%s13 + $0x28] sm:$0xf]
        %v2518 = vld [vmem:[%s13 + $0x2c] sm:$0xf]
        %v2519 = vld [vmem:[%s13 + $0x30] sm:$0xf]
        %v2520 = vld [vmem:[%s13 + $0x34] sm:$0xf]
        %v2521 = vld [vmem:[%s13 + $0x38] sm:$0xf]
        %v2522 = vld [vmem:[%s13 + $0x3c] sm:$0xf]
        %v2527 = vunpack.c.l.b16 %v2507
        %v2528 = vunpack.c.l.b16 %v2508
        %v2529 = vunpack.c.l.b16 %v2509
        %v2530 = vunpack.c.l.b16 %v2510
        %v2531 = vpack.c.b16 %v2528, %v2527
        %v2532 = vpack.c.b16 %v2530, %v2529
        %v2536 = vsel %vm2080, %v2503, 0
        %2538 = vmatprep.subr.bf16.mxu0 0
        %2539 = vmatpush1.bf16.msra.mxu0 %v2531
        %2540 = vmatprep.subr.bf16.mxu0 0
        %2541 = vmatpush1.bf16.msra.mxu0 %v2532
        %2542 = vmatprep.subr.bf16.mxu0 0
        %2543 = vmatpush1.bf16.msra.mxu0 0
        %2544 = vmatprep.subr.bf16.mxu0 0
        %2545 = vmatpush1.bf16.msra.mxu0 0
        %2546 = vmatprep.subr.bf16.mxu0 0
        %2547 = vmatpush1.bf16.msra.mxu0 0
        %2548 = vmatprep.subr.bf16.mxu0 0
        %2549 = vmatpush1.bf16.msra.mxu0 0
        %2550 = vmatprep.subr.bf16.mxu0 0
        %2551 = vmatpush1.bf16.msra.mxu0 0
        %2552 = vmatprep.subr.bf16.mxu0 0
        %2553 = vmatpush1.bf16.msra.mxu0 0
        %2554 = vmatprep.subr.bf16.mxu0 0
        %2555 = vmatpush1.bf16.msra.mxu0 0
        %2556 = vmatprep.subr.bf16.mxu0 0
        %2557 = vmatpush1.bf16.msra.mxu0 0
        %2558 = vmatprep.subr.bf16.mxu0 0
        %2559 = vmatpush1.bf16.msra.mxu0 0
        %2560 = vmatprep.subr.bf16.mxu0 0
        %2561 = vmatpush1.bf16.msra.mxu0 0
        %2562 = vmatprep.subr.bf16.mxu0 0
        %2563 = vmatpush1.bf16.msra.mxu0 0
        %2564 = vmatprep.subr.bf16.mxu0 0
        %2565 = vmatpush1.bf16.msra.mxu0 0
        %2566 = vmatprep.subr.bf16.mxu0 0
        %2567 = vmatpush1.bf16.msra.mxu0 0
        %2568 = vmatprep.subr.bf16.mxu0 0
        %2569 = vmatpush1.bf16.msra.mxu0 0
        %2570 = vmatprep.mubr.bf16.mxu0 0
        %2571 = vmatmul.mubr.bf16.gmra.mrb[0].mxu0 %v2536
        %v2572 = vpop.f32.mrb[0].mxu0
        %v2573 = vadd.f32 0.0, %v2572
        %v2574 = vpop.f32.mrb[0].mxu0
        %v2575 = vpop.f32.mrb[0].mxu0
        %v2576 = vpop.f32.mrb[0].mxu0
        %2577 = vdwg.mxu0
        %v2582 = vunpack.c.l.b16 %v2511
        %v2583 = vunpack.c.l.b16 %v2512
        %v2584 = vunpack.c.l.b16 %v2513
        %v2585 = vunpack.c.l.b16 %v2514
        %v2586 = vpack.c.b16 %v2583, %v2582
        %v2587 = vpack.c.b16 %v2585, %v2584
        %v2591 = vsel %vm2080, %v2504, 0
        %2593 = vmatprep.subr.bf16.mxu0 0
        %2594 = vmatpush1.bf16.msra.mxu0 %v2586
        %2595 = vmatprep.subr.bf16.mxu0 0
        %2596 = vmatpush1.bf16.msra.mxu0 %v2587
        %2597 = vmatprep.subr.bf16.mxu0 0
        %2598 = vmatpush1.bf16.msra.mxu0 0
        %2599 = vmatprep.subr.bf16.mxu0 0
        %2600 = vmatpush1.bf16.msra.mxu0 0
        %2601 = vmatprep.subr.bf16.mxu0 0
        %2602 = vmatpush1.bf16.msra.mxu0 0
        %2603 = vmatprep.subr.bf16.mxu0 0
        %2604 = vmatpush1.bf16.msra.mxu0 0
        %2605 = vmatprep.subr.bf16.mxu0 0
        %2606 = vmatpush1.bf16.msra.mxu0 0
        %2607 = vmatprep.subr.bf16.mxu0 0
        %2608 = vmatpush1.bf16.msra.mxu0 0
        %2609 = vmatprep.subr.bf16.mxu0 0
        %2610 = vmatpush1.bf16.msra.mxu0 0
        %2611 = vmatprep.subr.bf16.mxu0 0
        %2612 = vmatpush1.bf16.msra.mxu0 0
        %2613 = vmatprep.subr.bf16.mxu0 0
        %2614 = vmatpush1.bf16.msra.mxu0 0
        %2615 = vmatprep.subr.bf16.mxu0 0
        %2616 = vmatpush1.bf16.msra.mxu0 0
        %2617 = vmatprep.subr.bf16.mxu0 0
        %2618 = vmatpush1.bf16.msra.mxu0 0
        %2619 = vmatprep.subr.bf16.mxu0 0
        %2620 = vmatpush1.bf16.msra.mxu0 0
        %2621 = vmatprep.subr.bf16.mxu0 0
        %2622 = vmatpush1.bf16.msra.mxu0 0
        %2623 = vmatprep.subr.bf16.mxu0 0
        %2624 = vmatpush1.bf16.msra.mxu0 0
        %2625 = vmatprep.mubr.bf16.mxu0 0
        %2626 = vmatmul.mubr.bf16.gmra.mrb[0].mxu0 %v2591
        %v2627 = vpop.f32.mrb[0].mxu0
        %v2628 = vadd.f32 0.0, %v2627
        %v2629 = vpop.f32.mrb[0].mxu0
        %v2630 = vpop.f32.mrb[0].mxu0
        %v2631 = vpop.f32.mrb[0].mxu0
        %2632 = vdwg.mxu0
        %v2637 = vunpack.c.l.b16 %v2515
        %v2638 = vunpack.c.l.b16 %v2516
        %v2639 = vunpack.c.l.b16 %v2517
        %v2640 = vunpack.c.l.b16 %v2518
        %v2641 = vpack.c.b16 %v2638, %v2637
        %v2642 = vpack.c.b16 %v2640, %v2639
        %v2646 = vsel %vm2080, %v2505, 0
        %2648 = vmatprep.subr.bf16.mxu0 0
        %2649 = vmatpush1.bf16.msra.mxu0 %v2641
        %2650 = vmatprep.subr.bf16.mxu0 0
        %2651 = vmatpush1.bf16.msra.mxu0 %v2642
        %2652 = vmatprep.subr.bf16.mxu0 0
        %2653 = vmatpush1.bf16.msra.mxu0 0
        %2654 = vmatprep.subr.bf16.mxu0 0
        %2655 = vmatpush1.bf16.msra.mxu0 0
        %2656 = vmatprep.subr.bf16.mxu0 0
        %2657 = vmatpush1.bf16.msra.mxu0 0
        %2658 = vmatprep.subr.bf16.mxu0 0
        %2659 = vmatpush1.bf16.msra.mxu0 0
        %2660 = vmatprep.subr.bf16.mxu0 0
        %2661 = vmatpush1.bf16.msra.mxu0 0
        %2662 = vmatprep.subr.bf16.mxu0 0
        %2663 = vmatpush1.bf16.msra.mxu0 0
        %2664 = vmatprep.subr.bf16.mxu0 0
        %2665 = vmatpush1.bf16.msra.mxu0 0
        %2666 = vmatprep.subr.bf16.mxu0 0
        %2667 = vmatpush1.bf16.msra.mxu0 0
        %2668 = vmatprep.subr.bf16.mxu0 0
        %2669 = vmatpush1.bf16.msra.mxu0 0
        %2670 = vmatprep.subr.bf16.mxu0 0
        %2671 = vmatpush1.bf16.msra.mxu0 0
        %2672 = vmatprep.subr.bf16.mxu0 0
        %2673 = vmatpush1.bf16.msra.mxu0 0
        %2674 = vmatprep.subr.bf16.mxu0 0
        %2675 = vmatpush1.bf16.msra.mxu0 0
        %2676 = vmatprep.subr.bf16.mxu0 0
        %2677 = vmatpush1.bf16.msra.mxu0 0
        %2678 = vmatprep.subr.bf16.mxu0 0
        %2679 = vmatpush1.bf16.msra.mxu0 0
        %2680 = vmatprep.mubr.bf16.mxu0 0
        %2681 = vmatmul.mubr.bf16.gmra.mrb[0].mxu0 %v2646
        %v2682 = vpop.f32.mrb[0].mxu0
        %v2683 = vadd.f32 0.0, %v2682
        %v2684 = vpop.f32.mrb[0].mxu0
        %v2685 = vpop.f32.mrb[0].mxu0
        %v2686 = vpop.f32.mrb[0].mxu0
        %2687 = vdwg.mxu0
        %v2692 = vunpack.c.l.b16 %v2519
        %v2693 = vunpack.c.l.b16 %v2520
        %v2694 = vunpack.c.l.b16 %v2521
        %v2695 = vunpack.c.l.b16 %v2522
        %v2696 = vpack.c.b16 %v2693, %v2692
        %v2697 = vpack.c.b16 %v2695, %v2694
        %v2701 = vsel %vm2080, %v2506, 0
        %2703 = vmatprep.subr.bf16.mxu0 0
        %2704 = vmatpush1.bf16.msra.mxu0 %v2696
        %2705 = vmatprep.subr.bf16.mxu0 0
        %2706 = vmatpush1.bf16.msra.mxu0 %v2697
        %2707 = vmatprep.subr.bf16.mxu0 0
        %2708 = vmatpush1.bf16.msra.mxu0 0
        %2709 = vmatprep.subr.bf16.mxu0 0
        %2710 = vmatpush1.bf16.msra.mxu0 0
        %2711 = vmatprep.subr.bf16.mxu0 0
        %2712 = vmatpush1.bf16.msra.mxu0 0
        %2713 = vmatprep.subr.bf16.mxu0 0
        %2714 = vmatpush1.bf16.msra.mxu0 0
        %2715 = vmatprep.subr.bf16.mxu0 0
        %2716 = vmatpush1.bf16.msra.mxu0 0
        %2717 = vmatprep.subr.bf16.mxu0 0
        %2718 = vmatpush1.bf16.msra.mxu0 0
        %2719 = vmatprep.subr.bf16.mxu0 0
        %2720 = vmatpush1.bf16.msra.mxu0 0
        %2721 = vmatprep.subr.bf16.mxu0 0
        %2722 = vmatpush1.bf16.msra.mxu0 0
        %2723 = vmatprep.subr.bf16.mxu0 0
        %2724 = vmatpush1.bf16.msra.mxu0 0
        %2725 = vmatprep.subr.bf16.mxu0 0
        %2726 = vmatpush1.bf16.msra.mxu0 0
        %2727 = vmatprep.subr.bf16.mxu0 0
        %2728 = vmatpush1.bf16.msra.mxu0 0
        %2729 = vmatprep.subr.bf16.mxu0 0
        %2730 = vmatpush1.bf16.msra.mxu0 0
        %2731 = vmatprep.subr.bf16.mxu0 0
        %2732 = vmatpush1.bf16.msra.mxu0 0
        %2733 = vmatprep.subr.bf16.mxu0 0
        %2734 = vmatpush1.bf16.msra.mxu0 0
        %2735 = vmatprep.mubr.bf16.mxu0 0
        %2736 = vmatmul.mubr.bf16.gmra.mrb[0].mxu0 %v2701
        %v2737 = vpop.f32.mrb[0].mxu0
        %v2738 = vadd.f32 0.0, %v2737
        %v2739 = vpop.f32.mrb[0].mxu0
        %v2740 = vpop.f32.mrb[0].mxu0
        %v2741 = vpop.f32.mrb[0].mxu0
        %2742 = vdwg.mxu0
        %v2743 = vadd.f32 %v2573, %v2628
        %v2744 = vadd.f32 %v2743, %v2683
        %v2745 = vadd.f32 %v2744, %v2738
        %v2746 = vld [vmem:[%s14] sm:$0x1]
        %v2748 = vlaneseq
        %v2749 = vshrl.u32 %v2748, 7
        %v2750 = vsub.s32 0, %v2749
        %v2751 = vrot.slane %v2746, %v2750
        %v2753 = vadd.f32 %v2745, %v2751
        %v2754 = vadd.f32 %v711, %v2753
        %v2755 = vld [vmem:[%s15] sm:$0x1]
        %v2756 = vld [vmem:[%s16] sm:$0x1]
        %2757 = vadd.xlane.f32.xlu0 %v2754
        %v2758 = vpop.xlane.xlu0 %2757
        %v2759 = vmul.f32 %v2758, %v672
        %v2760 = vsub.f32 %v2754, %v2759
        %v2761 = vmul.f32 %v2760, %v2760
        %2762 = vadd.xlane.f32.xlu0 %v2761
        %v2763 = vpop.xlane.xlu0 %2762
        %v2764 = vmul.f32 %v2763, %v672
        %v2765 = vadd.f32 %v2764, 1e-05
        %v2766 = vrsqrt.pop %v2765
        %v2767 = vmul.f32 %v2760, %v2766
        %v2769 = vlaneseq
        %v2770 = vshrl.u32 %v2769, 7
        %v2771 = vsub.s32 0, %v2770
        %v2772 = vrot.slane %v2755, %v2771
        %v2774 = vmul.f32 %v2767, %v2772
        %v2776 = vlaneseq
        %v2777 = vshrl.u32 %v2776, 7
        %v2778 = vsub.s32 0, %v2777
        %v2779 = vrot.slane %v2756, %v2778
        %v2781 = vadd.f32 %v2774, %v2779
        %v2782 = vpack.c.bf16 %v2781, %v2781
        %v2783 = vld [vmem:[%s17] sm:$0xff]
        %v2784 = vld [vmem:[%s17 + $0x8] sm:$0xff]
        %v2785 = vld [vmem:[%s17 + $0x10] sm:$0xff]
        %v2786 = vld [vmem:[%s17 + $0x18] sm:$0xff]
        %v2787 = vld [vmem:[%s17 + $0x20] sm:$0xff]
        %v2788 = vld [vmem:[%s17 + $0x28] sm:$0xff]
        %v2789 = vld [vmem:[%s17 + $0x30] sm:$0xff]
        %v2790 = vld [vmem:[%s17 + $0x38] sm:$0xff]
        %v2791 = vld [vmem:[%s17 + $0x40] sm:$0xff]
        %v2792 = vld [vmem:[%s17 + $0x48] sm:$0xff]
        %v2793 = vld [vmem:[%s17 + $0x50] sm:$0xff]
        %v2794 = vld [vmem:[%s17 + $0x58] sm:$0xff]
        %v2795 = vld [vmem:[%s17 + $0x60] sm:$0xff]
        %v2796 = vld [vmem:[%s17 + $0x68] sm:$0xff]
        %v2797 = vld [vmem:[%s17 + $0x70] sm:$0xff]
        %v2798 = vld [vmem:[%s17 + $0x78] sm:$0xff]
        %v2799 = vld [vmem:[%s18] sm:$0x3]
        %v2801 = vlaneseq
        %v2802 = vshrl.u32 %v2801, 7
        %v2803 = vsub.s32 0, %v2802
        %v2804 = vrot.slane %v2799, %v2803
        %v2805 = vlaneseq
        %v2806 = vshrl.u32 %v2805, 7
        %v2807 = vsub.s32 1, %v2806
        %v2808 = vrot.slane %v2799, %v2807
        %v2827 = vunpack.c.l.b16 %v2783
        %v2828 = vunpack.c.h.b16 %v2783
        %v2829 = vunpack.c.l.b16 %v2784
        %v2830 = vunpack.c.h.b16 %v2784
        %v2831 = vunpack.c.l.b16 %v2785
        %v2832 = vunpack.c.h.b16 %v2785
        %v2833 = vunpack.c.l.b16 %v2786
        %v2834 = vunpack.c.h.b16 %v2786
        %v2835 = vunpack.c.l.b16 %v2787
        %v2836 = vunpack.c.h.b16 %v2787
        %v2837 = vunpack.c.l.b16 %v2788
        %v2838 = vunpack.c.h.b16 %v2788
        %v2839 = vunpack.c.l.b16 %v2789
        %v2840 = vunpack.c.h.b16 %v2789
        %v2841 = vunpack.c.l.b16 %v2790
        %v2842 = vunpack.c.h.b16 %v2790
        %v2843 = vunpack.c.l.b16 %v2791
        %v2844 = vunpack.c.h.b16 %v2791
        %v2845 = vunpack.c.l.b16 %v2792
        %v2846 = vunpack.c.h.b16 %v2792
        %v2847 = vunpack.c.l.b16 %v2793
        %v2848 = vunpack.c.h.b16 %v2793
        %v2849 = vunpack.c.l.b16 %v2794
        %v2850 = vunpack.c.h.b16 %v2794
        %v2851 = vunpack.c.l.b16 %v2795
        %v2852 = vunpack.c.h.b16 %v2795
        %v2853 = vunpack.c.l.b16 %v2796
        %v2854 = vunpack.c.h.b16 %v2796
        %v2855 = vunpack.c.l.b16 %v2797
        %v2856 = vunpack.c.h.b16 %v2797
        %v2857 = vunpack.c.l.b16 %v2798
        %v2858 = vunpack.c.h.b16 %v2798
        %v2859 = vpack.c.b16 %v2829, %v2827
        %v2860 = vpack.c.b16 %v2830, %v2828
        %v2861 = vpack.c.b16 %v2833, %v2831
        %v2862 = vpack.c.b16 %v2834, %v2832
        %v2863 = vpack.c.b16 %v2837, %v2835
        %v2864 = vpack.c.b16 %v2838, %v2836
        %v2865 = vpack.c.b16 %v2841, %v2839
        %v2866 = vpack.c.b16 %v2842, %v2840
        %v2867 = vpack.c.b16 %v2845, %v2843
        %v2868 = vpack.c.b16 %v2846, %v2844
        %v2869 = vpack.c.b16 %v2849, %v2847
        %v2870 = vpack.c.b16 %v2850, %v2848
        %v2871 = vpack.c.b16 %v2853, %v2851
        %v2872 = vpack.c.b16 %v2854, %v2852
        %v2873 = vpack.c.b16 %v2857, %v2855
        %v2874 = vpack.c.b16 %v2858, %v2856
        %2891 = vmatprep.subr.bf16.mxu0 %v2860
        %2892 = vmatpush1.bf16.msra.mxu0 %v2859
        %2893 = vmatprep.subr.bf16.mxu0 %v2862
        %2894 = vmatpush1.bf16.msra.mxu0 %v2861
        %2895 = vmatprep.subr.bf16.mxu0 %v2864
        %2896 = vmatpush1.bf16.msra.mxu0 %v2863
        %2897 = vmatprep.subr.bf16.mxu0 %v2866
        %2898 = vmatpush1.bf16.msra.mxu0 %v2865
        %2899 = vmatprep.subr.bf16.mxu0 %v2868
        %2900 = vmatpush1.bf16.msra.mxu0 %v2867
        %2901 = vmatprep.subr.bf16.mxu0 %v2870
        %2902 = vmatpush1.bf16.msra.mxu0 %v2869
        %2903 = vmatprep.subr.bf16.mxu0 %v2872
        %2904 = vmatpush1.bf16.msra.mxu0 %v2871
        %2905 = vmatprep.subr.bf16.mxu0 %v2874
        %2906 = vmatpush1.bf16.msra.mxu0 %v2873
        %2907 = vmatprep.subr.bf16.mxu0 0
        %2908 = vmatpush1.bf16.msra.mxu0 0
        %2909 = vmatprep.subr.bf16.mxu0 0
        %2910 = vmatpush1.bf16.msra.mxu0 0
        %2911 = vmatprep.subr.bf16.mxu0 0
        %2912 = vmatpush1.bf16.msra.mxu0 0
        %2913 = vmatprep.subr.bf16.mxu0 0
        %2914 = vmatpush1.bf16.msra.mxu0 0
        %2915 = vmatprep.subr.bf16.mxu0 0
        %2916 = vmatpush1.bf16.msra.mxu0 0
        %2917 = vmatprep.subr.bf16.mxu0 0
        %2918 = vmatpush1.bf16.msra.mxu0 0
        %2919 = vmatprep.subr.bf16.mxu0 0
        %2920 = vmatpush1.bf16.msra.mxu0 0
        %2921 = vmatprep.subr.bf16.mxu0 0
        %2922 = vmatpush1.bf16.msra.mxu0 0
        %2923 = vmatprep.mubr.bf16.mxu0 0
        %2924 = vmatmul.mubr.bf16.gmra.mrb[0].mxu0 %v2782
        %v2925 = vpop.f32.mrb[0].mxu0
        %v2926 = vadd.f32 %v2804, %v2925
        %v2927 = vpop.f32.mrb[0].mxu0
        %v2928 = vadd.f32 %v2808, %v2927
        %v2929 = vpop.f32.mrb[0].mxu0
        %v2930 = vpop.f32.mrb[0].mxu0
        %2931 = vdwg.mxu0
        %v2932 = vmul.f32 %v2926, 1.702
        %v2933 = vmul.f32 %v2928, 1.702
        %v2934 = vxor.u32 %v2932, 2147483648
        %v2935 = vxor.u32 %v2933, 2147483648
        %v2936 = vmul.f32 %v2934, 1.442695
        %v2937 = vpow.pop %v2936
        %v2938 = vmul.f32 %v2935, 1.442695
        %v2939 = vpow.pop %v2938
        %v2940 = vadd.f32 %v2937, 1.0
        %v2941 = vadd.f32 %v2939, 1.0
        %v2942 = vrcp.pop %v2940
        %v2943 = vmul.f32 1.0, %v2942
        %v2944 = vrcp.pop %v2941
        %v2945 = vmul.f32 1.0, %v2944
        %v2946 = vmul.f32 %v2926, %v2943
        %v2947 = vmul.f32 %v2928, %v2945
        %v2948 = vpack.c.bf16 %v2946, %v2946
        %v2949 = vpack.c.bf16 %v2947, %v2947
        %v2950 = vld [vmem:[%s19] sm:$0xf]
        %v2951 = vld [vmem:[%s19 + $0x4] sm:$0xf]
        %v2952 = vld [vmem:[%s19 + $0x8] sm:$0xf]
        %v2953 = vld [vmem:[%s19 + $0xc] sm:$0xf]
        %v2954 = vld [vmem:[%s19 + $0x10] sm:$0xf]
        %v2955 = vld [vmem:[%s19 + $0x14] sm:$0xf]
        %v2956 = vld [vmem:[%s19 + $0x18] sm:$0xf]
        %v2957 = vld [vmem:[%s19 + $0x1c] sm:$0xf]
        %v2958 = vld [vmem:[%s19 + $0x20] sm:$0xf]
        %v2959 = vld [vmem:[%s19 + $0x24] sm:$0xf]
        %v2960 = vld [vmem:[%s19 + $0x28] sm:$0xf]
        %v2961 = vld [vmem:[%s19 + $0x2c] sm:$0xf]
        %v2962 = vld [vmem:[%s19 + $0x30] sm:$0xf]
        %v2963 = vld [vmem:[%s19 + $0x34] sm:$0xf]
        %v2964 = vld [vmem:[%s19 + $0x38] sm:$0xf]
        %v2965 = vld [vmem:[%s19 + $0x3c] sm:$0xf]
        %v2966 = vld [vmem:[%s19 + $0x40] sm:$0xf]
        %v2967 = vld [vmem:[%s19 + $0x44] sm:$0xf]
        %v2968 = vld [vmem:[%s19 + $0x48] sm:$0xf]
        %v2969 = vld [vmem:[%s19 + $0x4c] sm:$0xf]
        %v2970 = vld [vmem:[%s19 + $0x50] sm:$0xf]
        %v2971 = vld [vmem:[%s19 + $0x54] sm:$0xf]
        %v2972 = vld [vmem:[%s19 + $0x58] sm:$0xf]
        %v2973 = vld [vmem:[%s19 + $0x5c] sm:$0xf]
        %v2974 = vld [vmem:[%s19 + $0x60] sm:$0xf]
        %v2975 = vld [vmem:[%s19 + $0x64] sm:$0xf]
        %v2976 = vld [vmem:[%s19 + $0x68] sm:$0xf]
        %v2977 = vld [vmem:[%s19 + $0x6c] sm:$0xf]
        %v2978 = vld [vmem:[%s19 + $0x70] sm:$0xf]
        %v2979 = vld [vmem:[%s19 + $0x74] sm:$0xf]
        %v2980 = vld [vmem:[%s19 + $0x78] sm:$0xf]
        %v2981 = vld [vmem:[%s19 + $0x7c] sm:$0xf]
        %v2982 = vld [vmem:[%s20] sm:$0x1]
        %v2984 = vlaneseq
        %v2985 = vshrl.u32 %v2984, 7
        %v2986 = vsub.s32 0, %v2985
        %v2987 = vrot.slane %v2982, %v2986
        %v3021 = vunpack.c.l.b16 %v2950
        %v3022 = vunpack.c.l.b16 %v2951
        %v3023 = vunpack.c.l.b16 %v2952
        %v3024 = vunpack.c.l.b16 %v2953
        %v3025 = vunpack.c.l.b16 %v2954
        %v3026 = vunpack.c.l.b16 %v2955
        %v3027 = vunpack.c.l.b16 %v2956
        %v3028 = vunpack.c.l.b16 %v2957
        %v3029 = vunpack.c.l.b16 %v2958
        %v3030 = vunpack.c.l.b16 %v2959
        %v3031 = vunpack.c.l.b16 %v2960
        %v3032 = vunpack.c.l.b16 %v2961
        %v3033 = vunpack.c.l.b16 %v2962
        %v3034 = vunpack.c.l.b16 %v2963
        %v3035 = vunpack.c.l.b16 %v2964
        %v3036 = vunpack.c.l.b16 %v2965
        %v3037 = vunpack.c.l.b16 %v2966
        %v3038 = vunpack.c.l.b16 %v2967
        %v3039 = vunpack.c.l.b16 %v2968
        %v3040 = vunpack.c.l.b16 %v2969
        %v3041 = vunpack.c.l.b16 %v2970
        %v3042 = vunpack.c.l.b16 %v2971
        %v3043 = vunpack.c.l.b16 %v2972
        %v3044 = vunpack.c.l.b16 %v2973
        %v3045 = vunpack.c.l.b16 %v2974
        %v3046 = vunpack.c.l.b16 %v2975
        %v3047 = vunpack.c.l.b16 %v2976
        %v3048 = vunpack.c.l.b16 %v2977
        %v3049 = vunpack.c.l.b16 %v2978
        %v3050 = vunpack.c.l.b16 %v2979
        %v3051 = vunpack.c.l.b16 %v2980
        %v3052 = vunpack.c.l.b16 %v2981
        %v3053 = vpack.c.b16 %v3022, %v3021
        %v3054 = vpack.c.b16 %v3024, %v3023
        %v3055 = vpack.c.b16 %v3026, %v3025
        %v3056 = vpack.c.b16 %v3028, %v3027
        %v3057 = vpack.c.b16 %v3030, %v3029
        %v3058 = vpack.c.b16 %v3032, %v3031
        %v3059 = vpack.c.b16 %v3034, %v3033
        %v3060 = vpack.c.b16 %v3036, %v3035
        %v3061 = vpack.c.b16 %v3038, %v3037
        %v3062 = vpack.c.b16 %v3040, %v3039
        %v3063 = vpack.c.b16 %v3042, %v3041
        %v3064 = vpack.c.b16 %v3044, %v3043
        %v3065 = vpack.c.b16 %v3046, %v3045
        %v3066 = vpack.c.b16 %v3048, %v3047
        %v3067 = vpack.c.b16 %v3050, %v3049
        %v3068 = vpack.c.b16 %v3052, %v3051
        %3085 = vmatprep.subr.bf16.mxu0 0
        %3086 = vmatpush1.bf16.msra.mxu0 %v3053
        %3087 = vmatprep.subr.bf16.mxu0 0
        %3088 = vmatpush1.bf16.msra.mxu0 %v3054
        %3089 = vmatprep.subr.bf16.mxu0 0
        %3090 = vmatpush1.bf16.msra.mxu0 %v3055
        %3091 = vmatprep.subr.bf16.mxu0 0
        %3092 = vmatpush1.bf16.msra.mxu0 %v3056
        %3093 = vmatprep.subr.bf16.mxu0 0
        %3094 = vmatpush1.bf16.msra.mxu0 %v3057
        %3095 = vmatprep.subr.bf16.mxu0 0
        %3096 = vmatpush1.bf16.msra.mxu0 %v3058
        %3097 = vmatprep.subr.bf16.mxu0 0
        %3098 = vmatpush1.bf16.msra.mxu0 %v3059
        %3099 = vmatprep.subr.bf16.mxu0 0
        %3100 = vmatpush1.bf16.msra.mxu0 %v3060
        %3101 = vmatprep.subr.bf16.mxu0 0
        %3102 = vmatpush1.bf16.msra.mxu0 %v3061
        %3103 = vmatprep.subr.bf16.mxu0 0
        %3104 = vmatpush1.bf16.msra.mxu0 %v3062
        %3105 = vmatprep.subr.bf16.mxu0 0
        %3106 = vmatpush1.bf16.msra.mxu0 %v3063
        %3107 = vmatprep.subr.bf16.mxu0 0
        %3108 = vmatpush1.bf16.msra.mxu0 %v3064
        %3109 = vmatprep.subr.bf16.mxu0 0
        %3110 = vmatpush1.bf16.msra.mxu0 %v3065
        %3111 = vmatprep.subr.bf16.mxu0 0
        %3112 = vmatpush1.bf16.msra.mxu0 %v3066
        %3113 = vmatprep.subr.bf16.mxu0 0
        %3114 = vmatpush1.bf16.msra.mxu0 %v3067
        %3115 = vmatprep.subr.bf16.mxu0 0
        %3116 = vmatpush1.bf16.msra.mxu0 %v3068
        %3117 = vmatprep.mubr.bf16.mxu0 %v2949
        %3118 = vmatmul.mubr.bf16.gmra.mrb[0].mxu0 %v2948
        %v3119 = vpop.f32.mrb[0].mxu0
        %v3120 = vadd.f32 %v2987, %v3119
        %v3121 = vpop.f32.mrb[0].mxu0
        %v3122 = vpop.f32.mrb[0].mxu0
        %v3123 = vpop.f32.mrb[0].mxu0
        %3124 = vdwg.mxu0
        %v3125 = vadd.f32 %v2754, %v3120
        %s3126 = scalar_lea.vmem %s5, 1
        %v3127 = vld [vmem:[%s3126] sm:$0x1]
        %s3128 = scalar_lea.vmem %s6, 1
        %v3129 = vld [vmem:[%s3128] sm:$0x1]
        %3130 = vadd.xlane.f32.xlu0 %v3125
        %v3131 = vpop.xlane.xlu0 %3130
        %v3132 = vmul.f32 %v3131, %v672
        %v3133 = vsub.f32 %v3125, %v3132
        %v3134 = vmul.f32 %v3133, %v3133
        %3135 = vadd.xlane.f32.xlu0 %v3134
        %v3136 = vpop.xlane.xlu0 %3135
        %v3137 = vmul.f32 %v3136, %v672
        %v3138 = vadd.f32 %v3137, 1e-05
        %v3139 = vrsqrt.pop %v3138
        %v3140 = vmul.f32 %v3133, %v3139
        %v3142 = vlaneseq
        %v3143 = vshrl.u32 %v3142, 7
        %v3144 = vsub.s32 0, %v3143
        %v3145 = vrot.slane %v3127, %v3144
        %v3147 = vmul.f32 %v3140, %v3145
        %v3149 = vlaneseq
        %v3150 = vshrl.u32 %v3149, 7
        %v3151 = vsub.s32 0, %v3150
        %v3152 = vrot.slane %v3129, %v3151
        %v3154 = vadd.f32 %v3147, %v3152
        %v3155 = vpack.c.bf16 %v3154, %v3154
        %s3156 = scalar_lea.vmem %s7, 256
        %v3157 = vld [vmem:[%s3156] sm:$0xf]
        %v3158 = vld [vmem:[%s3156 + $0x4] sm:$0xf]
        %v3159 = vld [vmem:[%s3156 + $0x8] sm:$0xf]
        %v3160 = vld [vmem:[%s3156 + $0xc] sm:$0xf]
        %v3161 = vld [vmem:[%s3156 + $0x10] sm:$0xf]
        %v3162 = vld [vmem:[%s3156 + $0x14] sm:$0xf]
        %v3163 = vld [vmem:[%s3156 + $0x18] sm:$0xf]
        %v3164 = vld [vmem:[%s3156 + $0x1c] sm:$0xf]
        %v3165 = vld [vmem:[%s3156 + $0x20] sm:$0xf]
        %v3166 = vld [vmem:[%s3156 + $0x24] sm:$0xf]
        %v3167 = vld [vmem:[%s3156 + $0x28] sm:$0xf]
        %v3168 = vld [vmem:[%s3156 + $0x2c] sm:$0xf]
        %v3169 = vld [vmem:[%s3156 + $0x30] sm:$0xf]
        %v3170 = vld [vmem:[%s3156 + $0x34] sm:$0xf]
        %v3171 = vld [vmem:[%s3156 + $0x38] sm:$0xf]
        %v3172 = vld [vmem:[%s3156 + $0x3c] sm:$0xf]
        %v3173 = vld [vmem:[%s3156 + $0x40] sm:$0xf]
        %v3174 = vld [vmem:[%s3156 + $0x44] sm:$0xf]
        %v3175 = vld [vmem:[%s3156 + $0x48] sm:$0xf]
        %v3176 = vld [vmem:[%s3156 + $0x4c] sm:$0xf]
        %v3177 = vld [vmem:[%s3156 + $0x50] sm:$0xf]
        %v3178 = vld [vmem:[%s3156 + $0x54] sm:$0xf]
        %v3179 = vld [vmem:[%s3156 + $0x58] sm:$0xf]
        %v3180 = vld [vmem:[%s3156 + $0x5c] sm:$0xf]
        %v3181 = vld [vmem:[%s3156 + $0x60] sm:$0xf]
        %v3182 = vld [vmem:[%s3156 + $0x64] sm:$0xf]
        %v3183 = vld [vmem:[%s3156 + $0x68] sm:$0xf]
        %v3184 = vld [vmem:[%s3156 + $0x6c] sm:$0xf]
        %v3185 = vld [vmem:[%s3156 + $0x70] sm:$0xf]
        %v3186 = vld [vmem:[%s3156 + $0x74] sm:$0xf]
        %v3187 = vld [vmem:[%s3156 + $0x78] sm:$0xf]
        %v3188 = vld [vmem:[%s3156 + $0x7c] sm:$0xf]
        %v3189 = vld [vmem:[%s3156 + $0x80] sm:$0xf]
        %v3190 = vld [vmem:[%s3156 + $0x84] sm:$0xf]
        %v3191 = vld [vmem:[%s3156 + $0x88] sm:$0xf]
        %v3192 = vld [vmem:[%s3156 + $0x8c] sm:$0xf]
        %v3193 = vld [vmem:[%s3156 + $0x90] sm:$0xf]
        %v3194 = vld [vmem:[%s3156 + $0x94] sm:$0xf]
        %v3195 = vld [vmem:[%s3156 + $0x98] sm:$0xf]
        %v3196 = vld [vmem:[%s3156 + $0x9c] sm:$0xf]
        %v3197 = vld [vmem:[%s3156 + $0xa0] sm:$0xf]
        %v3198 = vld [vmem:[%s3156 + $0xa4] sm:$0xf]
        %v3199 = vld [vmem:[%s3156 + $0xa8] sm:$0xf]
        %v3200 = vld [vmem:[%s3156 + $0xac] sm:$0xf]
        %v3201 = vld [vmem:[%s3156 + $0xb0] sm:$0xf]
        %v3202 = vld [vmem:[%s3156 + $0xb4] sm:$0xf]
        %v3203 = vld [vmem:[%s3156 + $0xb8] sm:$0xf]
        %v3204 = vld [vmem:[%s3156 + $0xbc] sm:$0xf]
        %v3205 = vld [vmem:[%s3156 + $0xc0] sm:$0xf]
        %v3206 = vld [vmem:[%s3156 + $0xc4] sm:$0xf]
        %v3207 = vld [vmem:[%s3156 + $0xc8] sm:$0xf]
        %v3208 = vld [vmem:[%s3156 + $0xcc] sm:$0xf]
        %v3209 = vld [vmem:[%s3156 + $0xd0] sm:$0xf]
        %v3210 = vld [vmem:[%s3156 + $0xd4] sm:$0xf]
        %v3211 = vld [vmem:[%s3156 + $0xd8] sm:$0xf]
        %v3212 = vld [vmem:[%s3156 + $0xdc] sm:$0xf]
        %v3213 = vld [vmem:[%s3156 + $0xe0] sm:$0xf]
        %v3214 = vld [vmem:[%s3156 + $0xe4] sm:$0xf]
        %v3215 = vld [vmem:[%s3156 + $0xe8] sm:$0xf]
        %v3216 = vld [vmem:[%s3156 + $0xec] sm:$0xf]
        %v3217 = vld [vmem:[%s3156 + $0xf0] sm:$0xf]
        %v3218 = vld [vmem:[%s3156 + $0xf4] sm:$0xf]
        %v3219 = vld [vmem:[%s3156 + $0xf8] sm:$0xf]
        %v3220 = vld [vmem:[%s3156 + $0xfc] sm:$0xf]
        %s3221 = scalar_lea.vmem %s9, 256
        %v3222 = vld [vmem:[%s3221] sm:$0xf]
        %v3223 = vld [vmem:[%s3221 + $0x4] sm:$0xf]
        %v3224 = vld [vmem:[%s3221 + $0x8] sm:$0xf]
        %v3225 = vld [vmem:[%s3221 + $0xc] sm:$0xf]
        %v3226 = vld [vmem:[%s3221 + $0x10] sm:$0xf]
        %v3227 = vld [vmem:[%s3221 + $0x14] sm:$0xf]
        %v3228 = vld [vmem:[%s3221 + $0x18] sm:$0xf]
        %v3229 = vld [vmem:[%s3221 + $0x1c] sm:$0xf]
        %v3230 = vld [vmem:[%s3221 + $0x20] sm:$0xf]
        %v3231 = vld [vmem:[%s3221 + $0x24] sm:$0xf]
        %v3232 = vld [vmem:[%s3221 + $0x28] sm:$0xf]
        %v3233 = vld [vmem:[%s3221 + $0x2c] sm:$0xf]
        %v3234 = vld [vmem:[%s3221 + $0x30] sm:$0xf]
        %v3235 = vld [vmem:[%s3221 + $0x34] sm:$0xf]
        %v3236 = vld [vmem:[%s3221 + $0x38] sm:$0xf]
        %v3237 = vld [vmem:[%s3221 + $0x3c] sm:$0xf]
        %v3238 = vld [vmem:[%s3221 + $0x40] sm:$0xf]
        %v3239 = vld [vmem:[%s3221 + $0x44] sm:$0xf]
        %v3240 = vld [vmem:[%s3221 + $0x48] sm:$0xf]
        %v3241 = vld [vmem:[%s3221 + $0x4c] sm:$0xf]
        %v3242 = vld [vmem:[%s3221 + $0x50] sm:$0xf]
        %v3243 = vld [vmem:[%s3221 + $0x54] sm:$0xf]
        %v3244 = vld [vmem:[%s3221 + $0x58] sm:$0xf]
        %v3245 = vld [vmem:[%s3221 + $0x5c] sm:$0xf]
        %v3246 = vld [vmem:[%s3221 + $0x60] sm:$0xf]
        %v3247 = vld [vmem:[%s3221 + $0x64] sm:$0xf]
        %v3248 = vld [vmem:[%s3221 + $0x68] sm:$0xf]
        %v3249 = vld [vmem:[%s3221 + $0x6c] sm:$0xf]
        %v3250 = vld [vmem:[%s3221 + $0x70] sm:$0xf]
        %v3251 = vld [vmem:[%s3221 + $0x74] sm:$0xf]
        %v3252 = vld [vmem:[%s3221 + $0x78] sm:$0xf]
        %v3253 = vld [vmem:[%s3221 + $0x7c] sm:$0xf]
        %v3254 = vld [vmem:[%s3221 + $0x80] sm:$0xf]
        %v3255 = vld [vmem:[%s3221 + $0x84] sm:$0xf]
        %v3256 = vld [vmem:[%s3221 + $0x88] sm:$0xf]
        %v3257 = vld [vmem:[%s3221 + $0x8c] sm:$0xf]
        %v3258 = vld [vmem:[%s3221 + $0x90] sm:$0xf]
        %v3259 = vld [vmem:[%s3221 + $0x94] sm:$0xf]
        %v3260 = vld [vmem:[%s3221 + $0x98] sm:$0xf]
        %v3261 = vld [vmem:[%s3221 + $0x9c] sm:$0xf]
        %v3262 = vld [vmem:[%s3221 + $0xa0] sm:$0xf]
        %v3263 = vld [vmem:[%s3221 + $0xa4] sm:$0xf]
        %v3264 = vld [vmem:[%s3221 + $0xa8] sm:$0xf]
        %v3265 = vld [vmem:[%s3221 + $0xac] sm:$0xf]
        %v3266 = vld [vmem:[%s3221 + $0xb0] sm:$0xf]
        %v3267 = vld [vmem:[%s3221 + $0xb4] sm:$0xf]
        %v3268 = vld [vmem:[%s3221 + $0xb8] sm:$0xf]
        %v3269 = vld [vmem:[%s3221 + $0xbc] sm:$0xf]
        %v3270 = vld [vmem:[%s3221 + $0xc0] sm:$0xf]
        %v3271 = vld [vmem:[%s3221 + $0xc4] sm:$0xf]
        %v3272 = vld [vmem:[%s3221 + $0xc8] sm:$0xf]
        %v3273 = vld [vmem:[%s3221 + $0xcc] sm:$0xf]
        %v3274 = vld [vmem:[%s3221 + $0xd0] sm:$0xf]
        %v3275 = vld [vmem:[%s3221 + $0xd4] sm:$0xf]
        %v3276 = vld [vmem:[%s3221 + $0xd8] sm:$0xf]
        %v3277 = vld [vmem:[%s3221 + $0xdc] sm:$0xf]
        %v3278 = vld [vmem:[%s3221 + $0xe0] sm:$0xf]
        %v3279 = vld [vmem:[%s3221 + $0xe4] sm:$0xf]
        %v3280 = vld [vmem:[%s3221 + $0xe8] sm:$0xf]
        %v3281 = vld [vmem:[%s3221 + $0xec] sm:$0xf]
        %v3282 = vld [vmem:[%s3221 + $0xf0] sm:$0xf]
        %v3283 = vld [vmem:[%s3221 + $0xf4] sm:$0xf]
        %v3284 = vld [vmem:[%s3221 + $0xf8] sm:$0xf]
        %v3285 = vld [vmem:[%s3221 + $0xfc] sm:$0xf]
        %s3286 = scalar_lea.vmem %s11, 256
        %v3287 = vld [vmem:[%s3286] sm:$0xf]
        %v3288 = vld [vmem:[%s3286 + $0x4] sm:$0xf]
        %v3289 = vld [vmem:[%s3286 + $0x8] sm:$0xf]
        %v3290 = vld [vmem:[%s3286 + $0xc] sm:$0xf]
        %v3291 = vld [vmem:[%s3286 + $0x10] sm:$0xf]
        %v3292 = vld [vmem:[%s3286 + $0x14] sm:$0xf]
        %v3293 = vld [vmem:[%s3286 + $0x18] sm:$0xf]
        %v3294 = vld [vmem:[%s3286 + $0x1c] sm:$0xf]
        %v3295 = vld [vmem:[%s3286 + $0x20] sm:$0xf]
        %v3296 = vld [vmem:[%s3286 + $0x24] sm:$0xf]
        %v3297 = vld [vmem:[%s3286 + $0x28] sm:$0xf]
        %v3298 = vld [vmem:[%s3286 + $0x2c] sm:$0xf]
        %v3299 = vld [vmem:[%s3286 + $0x30] sm:$0xf]
        %v3300 = vld [vmem:[%s3286 + $0x34] sm:$0xf]
        %v3301 = vld [vmem:[%s3286 + $0x38] sm:$0xf]
        %v3302 = vld [vmem:[%s3286 + $0x3c] sm:$0xf]
        %v3303 = vld [vmem:[%s3286 + $0x40] sm:$0xf]
        %v3304 = vld [vmem:[%s3286 + $0x44] sm:$0xf]
        %v3305 = vld [vmem:[%s3286 + $0x48] sm:$0xf]
        %v3306 = vld [vmem:[%s3286 + $0x4c] sm:$0xf]
        %v3307 = vld [vmem:[%s3286 + $0x50] sm:$0xf]
        %v3308 = vld [vmem:[%s3286 + $0x54] sm:$0xf]
        %v3309 = vld [vmem:[%s3286 + $0x58] sm:$0xf]
        %v3310 = vld [vmem:[%s3286 + $0x5c] sm:$0xf]
        %v3311 = vld [vmem:[%s3286 + $0x60] sm:$0xf]
        %v3312 = vld [vmem:[%s3286 + $0x64] sm:$0xf]
        %v3313 = vld [vmem:[%s3286 + $0x68] sm:$0xf]
        %v3314 = vld [vmem:[%s3286 + $0x6c] sm:$0xf]
        %v3315 = vld [vmem:[%s3286 + $0x70] sm:$0xf]
        %v3316 = vld [vmem:[%s3286 + $0x74] sm:$0xf]
        %v3317 = vld [vmem:[%s3286 + $0x78] sm:$0xf]
        %v3318 = vld [vmem:[%s3286 + $0x7c] sm:$0xf]
        %v3319 = vld [vmem:[%s3286 + $0x80] sm:$0xf]
        %v3320 = vld [vmem:[%s3286 + $0x84] sm:$0xf]
        %v3321 = vld [vmem:[%s3286 + $0x88] sm:$0xf]
        %v3322 = vld [vmem:[%s3286 + $0x8c] sm:$0xf]
        %v3323 = vld [vmem:[%s3286 + $0x90] sm:$0xf]
        %v3324 = vld [vmem:[%s3286 + $0x94] sm:$0xf]
        %v3325 = vld [vmem:[%s3286 + $0x98] sm:$0xf]
        %v3326 = vld [vmem:[%s3286 + $0x9c] sm:$0xf]
        %v3327 = vld [vmem:[%s3286 + $0xa0] sm:$0xf]
        %v3328 = vld [vmem:[%s3286 + $0xa4] sm:$0xf]
        %v3329 = vld [vmem:[%s3286 + $0xa8] sm:$0xf]
        %v3330 = vld [vmem:[%s3286 + $0xac] sm:$0xf]
        %v3331 = vld [vmem:[%s3286 + $0xb0] sm:$0xf]
        %v3332 = vld [vmem:[%s3286 + $0xb4] sm:$0xf]
        %v3333 = vld [vmem:[%s3286 + $0xb8] sm:$0xf]
        %v3334 = vld [vmem:[%s3286 + $0xbc] sm:$0xf]
        %v3335 = vld [vmem:[%s3286 + $0xc0] sm:$0xf]
        %v3336 = vld [vmem:[%s3286 + $0xc4] sm:$0xf]
        %v3337 = vld [vmem:[%s3286 + $0xc8] sm:$0xf]
        %v3338 = vld [vmem:[%s3286 + $0xcc] sm:$0xf]
        %v3339 = vld [vmem:[%s3286 + $0xd0] sm:$0xf]
        %v3340 = vld [vmem:[%s3286 + $0xd4] sm:$0xf]
        %v3341 = vld [vmem:[%s3286 + $0xd8] sm:$0xf]
        %v3342 = vld [vmem:[%s3286 + $0xdc] sm:$0xf]
        %v3343 = vld [vmem:[%s3286 + $0xe0] sm:$0xf]
        %v3344 = vld [vmem:[%s3286 + $0xe4] sm:$0xf]
        %v3345 = vld [vmem:[%s3286 + $0xe8] sm:$0xf]
        %v3346 = vld [vmem:[%s3286 + $0xec] sm:$0xf]
        %v3347 = vld [vmem:[%s3286 + $0xf0] sm:$0xf]
        %v3348 = vld [vmem:[%s3286 + $0xf4] sm:$0xf]
        %v3349 = vld [vmem:[%s3286 + $0xf8] sm:$0xf]
        %v3350 = vld [vmem:[%s3286 + $0xfc] sm:$0xf]
        %s3351 = scalar_lea.vmem %s8, 4
        %v3352 = vld [vmem:[%s3351] sm:$0x1]
        %v3353 = vld [vmem:[%s3351 + $0x1] sm:$0x1]
        %v3354 = vld [vmem:[%s3351 + $0x2] sm:$0x1]
        %v3355 = vld [vmem:[%s3351 + $0x3] sm:$0x1]
        %s3356 = scalar_lea.vmem %s10, 4
        %v3357 = vld [vmem:[%s3356] sm:$0x1]
        %v3358 = vld [vmem:[%s3356 + $0x1] sm:$0x1]
        %v3359 = vld [vmem:[%s3356 + $0x2] sm:$0x1]
        %v3360 = vld [vmem:[%s3356 + $0x3] sm:$0x1]
        %s3361 = scalar_lea.vmem %s12, 4
        %v3362 = vld [vmem:[%s3361] sm:$0x1]
        %v3363 = vld [vmem:[%s3361 + $0x1] sm:$0x1]
        %v3364 = vld [vmem:[%s3361 + $0x2] sm:$0x1]
        %v3365 = vld [vmem:[%s3361 + $0x3] sm:$0x1]
        %v3370 = vlaneseq
        %v3371 = vshrl.u32 %v3370, 7
        %v3372 = vsub.s32 0, %v3371
        %v3373 = vrot.slane %v3352, %v3372
        %v3374 = vlaneseq
        %v3375 = vshrl.u32 %v3374, 7
        %v3376 = vsub.s32 0, %v3375
        %v3377 = vrot.slane %v3353, %v3376
        %v3378 = vlaneseq
        %v3379 = vshrl.u32 %v3378, 7
        %v3380 = vsub.s32 0, %v3379
        %v3381 = vrot.slane %v3354, %v3380
        %v3382 = vlaneseq
        %v3383 = vshrl.u32 %v3382, 7
        %v3384 = vsub.s32 0, %v3383
        %v3385 = vrot.slane %v3355, %v3384
        %v3406 = vunpack.c.l.b16 %v3157
        %v3407 = vunpack.c.l.b16 %v3158
        %v3408 = vunpack.c.l.b16 %v3159
        %v3409 = vunpack.c.l.b16 %v3160
        %v3410 = vunpack.c.l.b16 %v3161
        %v3411 = vunpack.c.l.b16 %v3162
        %v3412 = vunpack.c.l.b16 %v3163
        %v3413 = vunpack.c.l.b16 %v3164
        %v3414 = vunpack.c.l.b16 %v3165
        %v3415 = vunpack.c.l.b16 %v3166
        %v3416 = vunpack.c.l.b16 %v3167
        %v3417 = vunpack.c.l.b16 %v3168
        %v3418 = vunpack.c.l.b16 %v3169
        %v3419 = vunpack.c.l.b16 %v3170
        %v3420 = vunpack.c.l.b16 %v3171
        %v3421 = vunpack.c.l.b16 %v3172
        %v3422 = vpack.c.b16 %v3407, %v3406
        %v3423 = vpack.c.b16 %v3409, %v3408
        %v3424 = vpack.c.b16 %v3411, %v3410
        %v3425 = vpack.c.b16 %v3413, %v3412
        %v3426 = vpack.c.b16 %v3415, %v3414
        %v3427 = vpack.c.b16 %v3417, %v3416
        %v3428 = vpack.c.b16 %v3419, %v3418
        %v3429 = vpack.c.b16 %v3421, %v3420
        %3438 = vmatprep.subr.bf16.mxu0 0
        %3439 = vmatpush1.bf16.msra.mxu0 %v3422
        %3440 = vmatprep.subr.bf16.mxu0 0
        %3441 = vmatpush1.bf16.msra.mxu0 %v3423
        %3442 = vmatprep.subr.bf16.mxu0 0
        %3443 = vmatpush1.bf16.msra.mxu0 %v3424
        %3444 = vmatprep.subr.bf16.mxu0 0
        %3445 = vmatpush1.bf16.msra.mxu0 %v3425
        %3446 = vmatprep.subr.bf16.mxu0 0
        %3447 = vmatpush1.bf16.msra.mxu0 %v3426
        %3448 = vmatprep.subr.bf16.mxu0 0
        %3449 = vmatpush1.bf16.msra.mxu0 %v3427
        %3450 = vmatprep.subr.bf16.mxu0 0
        %3451 = vmatpush1.bf16.msra.mxu0 %v3428
        %3452 = vmatprep.subr.bf16.mxu0 0
        %3453 = vmatpush1.bf16.msra.mxu0 %v3429
        %3454 = vmatprep.subr.bf16.mxu0 0
        %3455 = vmatpush1.bf16.msra.mxu0 0
        %3456 = vmatprep.subr.bf16.mxu0 0
        %3457 = vmatpush1.bf16.msra.mxu0 0
        %3458 = vmatprep.subr.bf16.mxu0 0
        %3459 = vmatpush1.bf16.msra.mxu0 0
        %3460 = vmatprep.subr.bf16.mxu0 0
        %3461 = vmatpush1.bf16.msra.mxu0 0
        %3462 = vmatprep.subr.bf16.mxu0 0
        %3463 = vmatpush1.bf16.msra.mxu0 0
        %3464 = vmatprep.subr.bf16.mxu0 0
        %3465 = vmatpush1.bf16.msra.mxu0 0
        %3466 = vmatprep.subr.bf16.mxu0 0
        %3467 = vmatpush1.bf16.msra.mxu0 0
        %3468 = vmatprep.subr.bf16.mxu0 0
        %3469 = vmatpush1.bf16.msra.mxu0 0
        %3470 = vmatprep.mubr.bf16.mxu0 0
        %3471 = vmatmul.mubr.bf16.gmra.mrb[0].mxu0 %v3155
        %v3472 = vpop.f32.mrb[0].mxu0
        %v3473 = vadd.f32 %v3373, %v3472
        %v3474 = vpop.f32.mrb[0].mxu0
        %v3475 = vpop.f32.mrb[0].mxu0
        %v3476 = vpop.f32.mrb[0].mxu0
        %3477 = vdwg.mxu0
        %v3494 = vunpack.c.l.b16 %v3173
        %v3495 = vunpack.c.l.b16 %v3174
        %v3496 = vunpack.c.l.b16 %v3175
        %v3497 = vunpack.c.l.b16 %v3176
        %v3498 = vunpack.c.l.b16 %v3177
        %v3499 = vunpack.c.l.b16 %v3178
        %v3500 = vunpack.c.l.b16 %v3179
        %v3501 = vunpack.c.l.b16 %v3180
        %v3502 = vunpack.c.l.b16 %v3181
        %v3503 = vunpack.c.l.b16 %v3182
        %v3504 = vunpack.c.l.b16 %v3183
        %v3505 = vunpack.c.l.b16 %v3184
        %v3506 = vunpack.c.l.b16 %v3185
        %v3507 = vunpack.c.l.b16 %v3186
        %v3508 = vunpack.c.l.b16 %v3187
        %v3509 = vunpack.c.l.b16 %v3188
        %v3510 = vpack.c.b16 %v3495, %v3494
        %v3511 = vpack.c.b16 %v3497, %v3496
        %v3512 = vpack.c.b16 %v3499, %v3498
        %v3513 = vpack.c.b16 %v3501, %v3500
        %v3514 = vpack.c.b16 %v3503, %v3502
        %v3515 = vpack.c.b16 %v3505, %v3504
        %v3516 = vpack.c.b16 %v3507, %v3506
        %v3517 = vpack.c.b16 %v3509, %v3508
        %3526 = vmatprep.subr.bf16.mxu0 0
        %3527 = vmatpush1.bf16.msra.mxu0 %v3510
        %3528 = vmatprep.subr.bf16.mxu0 0
        %3529 = vmatpush1.bf16.msra.mxu0 %v3511
        %3530 = vmatprep.subr.bf16.mxu0 0
        %3531 = vmatpush1.bf16.msra.mxu0 %v3512
        %3532 = vmatprep.subr.bf16.mxu0 0
        %3533 = vmatpush1.bf16.msra.mxu0 %v3513
        %3534 = vmatprep.subr.bf16.mxu0 0
        %3535 = vmatpush1.bf16.msra.mxu0 %v3514
        %3536 = vmatprep.subr.bf16.mxu0 0
        %3537 = vmatpush1.bf16.msra.mxu0 %v3515
        %3538 = vmatprep.subr.bf16.mxu0 0
        %3539 = vmatpush1.bf16.msra.mxu0 %v3516
        %3540 = vmatprep.subr.bf16.mxu0 0
        %3541 = vmatpush1.bf16.msra.mxu0 %v3517
        %3542 = vmatprep.subr.bf16.mxu0 0
        %3543 = vmatpush1.bf16.msra.mxu0 0
        %3544 = vmatprep.subr.bf16.mxu0 0
        %3545 = vmatpush1.bf16.msra.mxu0 0
        %3546 = vmatprep.subr.bf16.mxu0 0
        %3547 = vmatpush1.bf16.msra.mxu0 0
        %3548 = vmatprep.subr.bf16.mxu0 0
        %3549 = vmatpush1.bf16.msra.mxu0 0
        %3550 = vmatprep.subr.bf16.mxu0 0
        %3551 = vmatpush1.bf16.msra.mxu0 0
        %3552 = vmatprep.subr.bf16.mxu0 0
        %3553 = vmatpush1.bf16.msra.mxu0 0
        %3554 = vmatprep.subr.bf16.mxu0 0
        %3555 = vmatpush1.bf16.msra.mxu0 0
        %3556 = vmatprep.subr.bf16.mxu0 0
        %3557 = vmatpush1.bf16.msra.mxu0 0
        %3558 = vmatprep.mubr.bf16.mxu0 0
        %3559 = vmatmul.mubr.bf16.gmra.mrb[0].mxu0 %v3155
        %v3560 = vpop.f32.mrb[0].mxu0
        %v3561 = vadd.f32 %v3377, %v3560
        %v3562 = vpop.f32.mrb[0].mxu0
        %v3563 = vpop.f32.mrb[0].mxu0
        %v3564 = vpop.f32.mrb[0].mxu0
        %3565 = vdwg.mxu0
        %v3582 = vunpack.c.l.b16 %v3189
        %v3583 = vunpack.c.l.b16 %v3190
        %v3584 = vunpack.c.l.b16 %v3191
        %v3585 = vunpack.c.l.b16 %v3192
        %v3586 = vunpack.c.l.b16 %v3193
        %v3587 = vunpack.c.l.b16 %v3194
        %v3588 = vunpack.c.l.b16 %v3195
        %v3589 = vunpack.c.l.b16 %v3196
        %v3590 = vunpack.c.l.b16 %v3197
        %v3591 = vunpack.c.l.b16 %v3198
        %v3592 = vunpack.c.l.b16 %v3199
        %v3593 = vunpack.c.l.b16 %v3200
        %v3594 = vunpack.c.l.b16 %v3201
        %v3595 = vunpack.c.l.b16 %v3202
        %v3596 = vunpack.c.l.b16 %v3203
        %v3597 = vunpack.c.l.b16 %v3204
        %v3598 = vpack.c.b16 %v3583, %v3582
        %v3599 = vpack.c.b16 %v3585, %v3584
        %v3600 = vpack.c.b16 %v3587, %v3586
        %v3601 = vpack.c.b16 %v3589, %v3588
        %v3602 = vpack.c.b16 %v3591, %v3590
        %v3603 = vpack.c.b16 %v3593, %v3592
        %v3604 = vpack.c.b16 %v3595, %v3594
        %v3605 = vpack.c.b16 %v3597, %v3596
        %3614 = vmatprep.subr.bf16.mxu0 0
        %3615 = vmatpush1.bf16.msra.mxu0 %v3598
        %3616 = vmatprep.subr.bf16.mxu0 0
        %3617 = vmatpush1.bf16.msra.mxu0 %v3599
        %3618 = vmatprep.subr.bf16.mxu0 0
        %3619 = vmatpush1.bf16.msra.mxu0 %v3600
        %3620 = vmatprep.subr.bf16.mxu0 0
        %3621 = vmatpush1.bf16.msra.mxu0 %v3601
        %3622 = vmatprep.subr.bf16.mxu0 0
        %3623 = vmatpush1.bf16.msra.mxu0 %v3602
        %3624 = vmatprep.subr.bf16.mxu0 0
        %3625 = vmatpush1.bf16.msra.mxu0 %v3603
        %3626 = vmatprep.subr.bf16.mxu0 0
        %3627 = vmatpush1.bf16.msra.mxu0 %v3604
        %3628 = vmatprep.subr.bf16.mxu0 0
        %3629 = vmatpush1.bf16.msra.mxu0 %v3605
        %3630 = vmatprep.subr.bf16.mxu0 0
        %3631 = vmatpush1.bf16.msra.mxu0 0
        %3632 = vmatprep.subr.bf16.mxu0 0
        %3633 = vmatpush1.bf16.msra.mxu0 0
        %3634 = vmatprep.subr.bf16.mxu0 0
        %3635 = vmatpush1.bf16.msra.mxu0 0
        %3636 = vmatprep.subr.bf16.mxu0 0
        %3637 = vmatpush1.bf16.msra.mxu0 0
        %3638 = vmatprep.subr.bf16.mxu0 0
        %3639 = vmatpush1.bf16.msra.mxu0 0
        %3640 = vmatprep.subr.bf16.mxu0 0
        %3641 = vmatpush1.bf16.msra.mxu0 0
        %3642 = vmatprep.subr.bf16.mxu0 0
        %3643 = vmatpush1.bf16.msra.mxu0 0
        %3644 = vmatprep.subr.bf16.mxu0 0
        %3645 = vmatpush1.bf16.msra.mxu0 0
        %3646 = vmatprep.mubr.bf16.mxu0 0
        %3647 = vmatmul.mubr.bf16.gmra.mrb[0].mxu0 %v3155
        %v3648 = vpop.f32.mrb[0].mxu0
        %v3649 = vadd.f32 %v3381, %v3648
        %v3650 = vpop.f32.mrb[0].mxu0
        %v3651 = vpop.f32.mrb[0].mxu0
        %v3652 = vpop.f32.mrb[0].mxu0
        %3653 = vdwg.mxu0
        %v3670 = vunpack.c.l.b16 %v3205
        %v3671 = vunpack.c.l.b16 %v3206
        %v3672 = vunpack.c.l.b16 %v3207
        %v3673 = vunpack.c.l.b16 %v3208
        %v3674 = vunpack.c.l.b16 %v3209
        %v3675 = vunpack.c.l.b16 %v3210
        %v3676 = vunpack.c.l.b16 %v3211
        %v3677 = vunpack.c.l.b16 %v3212
        %v3678 = vunpack.c.l.b16 %v3213
        %v3679 = vunpack.c.l.b16 %v3214
        %v3680 = vunpack.c.l.b16 %v3215
        %v3681 = vunpack.c.l.b16 %v3216
        %v3682 = vunpack.c.l.b16 %v3217
        %v3683 = vunpack.c.l.b16 %v3218
        %v3684 = vunpack.c.l.b16 %v3219
        %v3685 = vunpack.c.l.b16 %v3220
        %v3686 = vpack.c.b16 %v3671, %v3670
        %v3687 = vpack.c.b16 %v3673, %v3672
        %v3688 = vpack.c.b16 %v3675, %v3674
        %v3689 = vpack.c.b16 %v3677, %v3676
        %v3690 = vpack.c.b16 %v3679, %v3678
        %v3691 = vpack.c.b16 %v3681, %v3680
        %v3692 = vpack.c.b16 %v3683, %v3682
        %v3693 = vpack.c.b16 %v3685, %v3684
        %3702 = vmatprep.subr.bf16.mxu0 0
        %3703 = vmatpush1.bf16.msra.mxu0 %v3686
        %3704 = vmatprep.subr.bf16.mxu0 0
        %3705 = vmatpush1.bf16.msra.mxu0 %v3687
        %3706 = vmatprep.subr.bf16.mxu0 0
        %3707 = vmatpush1.bf16.msra.mxu0 %v3688
        %3708 = vmatprep.subr.bf16.mxu0 0
        %3709 = vmatpush1.bf16.msra.mxu0 %v3689
        %3710 = vmatprep.subr.bf16.mxu0 0
        %3711 = vmatpush1.bf16.msra.mxu0 %v3690
        %3712 = vmatprep.subr.bf16.mxu0 0
        %3713 = vmatpush1.bf16.msra.mxu0 %v3691
        %3714 = vmatprep.subr.bf16.mxu0 0
        %3715 = vmatpush1.bf16.msra.mxu0 %v3692
        %3716 = vmatprep.subr.bf16.mxu0 0
        %3717 = vmatpush1.bf16.msra.mxu0 %v3693
        %3718 = vmatprep.subr.bf16.mxu0 0
        %3719 = vmatpush1.bf16.msra.mxu0 0
        %3720 = vmatprep.subr.bf16.mxu0 0
        %3721 = vmatpush1.bf16.msra.mxu0 0
        %3722 = vmatprep.subr.bf16.mxu0 0
        %3723 = vmatpush1.bf16.msra.mxu0 0
        %3724 = vmatprep.subr.bf16.mxu0 0
        %3725 = vmatpush1.bf16.msra.mxu0 0
        %3726 = vmatprep.subr.bf16.mxu0 0
        %3727 = vmatpush1.bf16.msra.mxu0 0
        %3728 = vmatprep.subr.bf16.mxu0 0
        %3729 = vmatpush1.bf16.msra.mxu0 0
        %3730 = vmatprep.subr.bf16.mxu0 0
        %3731 = vmatpush1.bf16.msra.mxu0 0
        %3732 = vmatprep.subr.bf16.mxu0 0
        %3733 = vmatpush1.bf16.msra.mxu0 0
        %3734 = vmatprep.mubr.bf16.mxu0 0
        %3735 = vmatmul.mubr.bf16.gmra.mrb[0].mxu0 %v3155
        %v3736 = vpop.f32.mrb[0].mxu0
        %v3737 = vadd.f32 %v3385, %v3736
        %v3738 = vpop.f32.mrb[0].mxu0
        %v3739 = vpop.f32.mrb[0].mxu0
        %v3740 = vpop.f32.mrb[0].mxu0
        %3741 = vdwg.mxu0
        %v3746 = vlaneseq
        %v3747 = vshrl.u32 %v3746, 7
        %v3748 = vsub.s32 0, %v3747
        %v3749 = vrot.slane %v3357, %v3748
        %v3750 = vlaneseq
        %v3751 = vshrl.u32 %v3750, 7
        %v3752 = vsub.s32 0, %v3751
        %v3753 = vrot.slane %v3358, %v3752
        %v3754 = vlaneseq
        %v3755 = vshrl.u32 %v3754, 7
        %v3756 = vsub.s32 0, %v3755
        %v3757 = vrot.slane %v3359, %v3756
        %v3758 = vlaneseq
        %v3759 = vshrl.u32 %v3758, 7
        %v3760 = vsub.s32 0, %v3759
        %v3761 = vrot.slane %v3360, %v3760
        %v3782 = vunpack.c.l.b16 %v3222
        %v3783 = vunpack.c.l.b16 %v3223
        %v3784 = vunpack.c.l.b16 %v3224
        %v3785 = vunpack.c.l.b16 %v3225
        %v3786 = vunpack.c.l.b16 %v3226
        %v3787 = vunpack.c.l.b16 %v3227
        %v3788 = vunpack.c.l.b16 %v3228
        %v3789 = vunpack.c.l.b16 %v3229
        %v3790 = vunpack.c.l.b16 %v3230
        %v3791 = vunpack.c.l.b16 %v3231
        %v3792 = vunpack.c.l.b16 %v3232
        %v3793 = vunpack.c.l.b16 %v3233
        %v3794 = vunpack.c.l.b16 %v3234
        %v3795 = vunpack.c.l.b16 %v3235
        %v3796 = vunpack.c.l.b16 %v3236
        %v3797 = vunpack.c.l.b16 %v3237
        %v3798 = vpack.c.b16 %v3783, %v3782
        %v3799 = vpack.c.b16 %v3785, %v3784
        %v3800 = vpack.c.b16 %v3787, %v3786
        %v3801 = vpack.c.b16 %v3789, %v3788
        %v3802 = vpack.c.b16 %v3791, %v3790
        %v3803 = vpack.c.b16 %v3793, %v3792
        %v3804 = vpack.c.b16 %v3795, %v3794
        %v3805 = vpack.c.b16 %v3797, %v3796
        %3814 = vmatprep.subr.bf16.mxu0 0
        %3815 = vmatpush1.bf16.msra.mxu0 %v3798
        %3816 = vmatprep.subr.bf16.mxu0 0
        %3817 = vmatpush1.bf16.msra.mxu0 %v3799
        %3818 = vmatprep.subr.bf16.mxu0 0
        %3819 = vmatpush1.bf16.msra.mxu0 %v3800
        %3820 = vmatprep.subr.bf16.mxu0 0
        %3821 = vmatpush1.bf16.msra.mxu0 %v3801
        %3822 = vmatprep.subr.bf16.mxu0 0
        %3823 = vmatpush1.bf16.msra.mxu0 %v3802
        %3824 = vmatprep.subr.bf16.mxu0 0
        %3825 = vmatpush1.bf16.msra.mxu0 %v3803
        %3826 = vmatprep.subr.bf16.mxu0 0
        %3827 = vmatpush1.bf16.msra.mxu0 %v3804
        %3828 = vmatprep.subr.bf16.mxu0 0
        %3829 = vmatpush1.bf16.msra.mxu0 %v3805
        %3830 = vmatprep.subr.bf16.mxu0 0
        %3831 = vmatpush1.bf16.msra.mxu0 0
        %3832 = vmatprep.subr.bf16.mxu0 0
        %3833 = vmatpush1.bf16.msra.mxu0 0
        %3834 = vmatprep.subr.bf16.mxu0 0
        %3835 = vmatpush1.bf16.msra.mxu0 0
        %3836 = vmatprep.subr.bf16.mxu0 0
        %3837 = vmatpush1.bf16.msra.mxu0 0
        %3838 = vmatprep.subr.bf16.mxu0 0
        %3839 = vmatpush1.bf16.msra.mxu0 0
        %3840 = vmatprep.subr.bf16.mxu0 0
        %3841 = vmatpush1.bf16.msra.mxu0 0
        %3842 = vmatprep.subr.bf16.mxu0 0
        %3843 = vmatpush1.bf16.msra.mxu0 0
        %3844 = vmatprep.subr.bf16.mxu0 0
        %3845 = vmatpush1.bf16.msra.mxu0 0
        %3846 = vmatprep.mubr.bf16.mxu0 0
        %3847 = vmatmul.mubr.bf16.gmra.mrb[0].mxu0 %v3155
        %v3848 = vpop.f32.mrb[0].mxu0
        %v3849 = vadd.f32 %v3749, %v3848
        %v3850 = vpop.f32.mrb[0].mxu0
        %v3851 = vpop.f32.mrb[0].mxu0
        %v3852 = vpop.f32.mrb[0].mxu0
        %3853 = vdwg.mxu0
        %v3870 = vunpack.c.l.b16 %v3238
        %v3871 = vunpack.c.l.b16 %v3239
        %v3872 = vunpack.c.l.b16 %v3240
        %v3873 = vunpack.c.l.b16 %v3241
        %v3874 = vunpack.c.l.b16 %v3242
        %v3875 = vunpack.c.l.b16 %v3243
        %v3876 = vunpack.c.l.b16 %v3244
        %v3877 = vunpack.c.l.b16 %v3245
        %v3878 = vunpack.c.l.b16 %v3246
        %v3879 = vunpack.c.l.b16 %v3247
        %v3880 = vunpack.c.l.b16 %v3248
        %v3881 = vunpack.c.l.b16 %v3249
        %v3882 = vunpack.c.l.b16 %v3250
        %v3883 = vunpack.c.l.b16 %v3251
        %v3884 = vunpack.c.l.b16 %v3252
        %v3885 = vunpack.c.l.b16 %v3253
        %v3886 = vpack.c.b16 %v3871, %v3870
        %v3887 = vpack.c.b16 %v3873, %v3872
        %v3888 = vpack.c.b16 %v3875, %v3874
        %v3889 = vpack.c.b16 %v3877, %v3876
        %v3890 = vpack.c.b16 %v3879, %v3878
        %v3891 = vpack.c.b16 %v3881, %v3880
        %v3892 = vpack.c.b16 %v3883, %v3882
        %v3893 = vpack.c.b16 %v3885, %v3884
        %3902 = vmatprep.subr.bf16.mxu0 0
        %3903 = vmatpush1.bf16.msra.mxu0 %v3886
        %3904 = vmatprep.subr.bf16.mxu0 0
        %3905 = vmatpush1.bf16.msra.mxu0 %v3887
        %3906 = vmatprep.subr.bf16.mxu0 0
        %3907 = vmatpush1.bf16.msra.mxu0 %v3888
        %3908 = vmatprep.subr.bf16.mxu0 0
        %3909 = vmatpush1.bf16.msra.mxu0 %v3889
        %3910 = vmatprep.subr.bf16.mxu0 0
        %3911 = vmatpush1.bf16.msra.mxu0 %v3890
        %3912 = vmatprep.subr.bf16.mxu0 0
        %3913 = vmatpush1.bf16.msra.mxu0 %v3891
        %3914 = vmatprep.subr.bf16.mxu0 0
        %3915 = vmatpush1.bf16.msra.mxu0 %v3892
        %3916 = vmatprep.subr.bf16.mxu0 0
        %3917 = vmatpush1.bf16.msra.mxu0 %v3893
        %3918 = vmatprep.subr.bf16.mxu0 0
        %3919 = vmatpush1.bf16.msra.mxu0 0
        %3920 = vmatprep.subr.bf16.mxu0 0
        %3921 = vmatpush1.bf16.msra.mxu0 0
        %3922 = vmatprep.subr.bf16.mxu0 0
        %3923 = vmatpush1.bf16.msra.mxu0 0
        %3924 = vmatprep.subr.bf16.mxu0 0
        %3925 = vmatpush1.bf16.msra.mxu0 0
        %3926 = vmatprep.subr.bf16.mxu0 0
        %3927 = vmatpush1.bf16.msra.mxu0 0
        %3928 = vmatprep.subr.bf16.mxu0 0
        %3929 = vmatpush1.bf16.msra.mxu0 0
        %3930 = vmatprep.subr.bf16.mxu0 0
        %3931 = vmatpush1.bf16.msra.mxu0 0
        %3932 = vmatprep.subr.bf16.mxu0 0
        %3933 = vmatpush1.bf16.msra.mxu0 0
        %3934 = vmatprep.mubr.bf16.mxu0 0
        %3935 = vmatmul.mubr.bf16.gmra.mrb[0].mxu0 %v3155
        %v3936 = vpop.f32.mrb[0].mxu0
        %v3937 = vadd.f32 %v3753, %v3936
        %v3938 = vpop.f32.mrb[0].mxu0
        %v3939 = vpop.f32.mrb[0].mxu0
        %v3940 = vpop.f32.mrb[0].mxu0
        %3941 = vdwg.mxu0
        %v3958 = vunpack.c.l.b16 %v3254
        %v3959 = vunpack.c.l.b16 %v3255
        %v3960 = vunpack.c.l.b16 %v3256
        %v3961 = vunpack.c.l.b16 %v3257
        %v3962 = vunpack.c.l.b16 %v3258
        %v3963 = vunpack.c.l.b16 %v3259
        %v3964 = vunpack.c.l.b16 %v3260
        %v3965 = vunpack.c.l.b16 %v3261
        %v3966 = vunpack.c.l.b16 %v3262
        %v3967 = vunpack.c.l.b16 %v3263
        %v3968 = vunpack.c.l.b16 %v3264
        %v3969 = vunpack.c.l.b16 %v3265
        %v3970 = vunpack.c.l.b16 %v3266
        %v3971 = vunpack.c.l.b16 %v3267
        %v3972 = vunpack.c.l.b16 %v3268
        %v3973 = vunpack.c.l.b16 %v3269
        %v3974 = vpack.c.b16 %v3959, %v3958
        %v3975 = vpack.c.b16 %v3961, %v3960
        %v3976 = vpack.c.b16 %v3963, %v3962
        %v3977 = vpack.c.b16 %v3965, %v3964
        %v3978 = vpack.c.b16 %v3967, %v3966
        %v3979 = vpack.c.b16 %v3969, %v3968
        %v3980 = vpack.c.b16 %v3971, %v3970
        %v3981 = vpack.c.b16 %v3973, %v3972
        %3990 = vmatprep.subr.bf16.mxu0 0
        %3991 = vmatpush1.bf16.msra.mxu0 %v3974
        %3992 = vmatprep.subr.bf16.mxu0 0
        %3993 = vmatpush1.bf16.msra.mxu0 %v3975
        %3994 = vmatprep.subr.bf16.mxu0 0
        %3995 = vmatpush1.bf16.msra.mxu0 %v3976
        %3996 = vmatprep.subr.bf16.mxu0 0
        %3997 = vmatpush1.bf16.msra.mxu0 %v3977
        %3998 = vmatprep.subr.bf16.mxu0 0
        %3999 = vmatpush1.bf16.msra.mxu0 %v3978
        %4000 = vmatprep.subr.bf16.mxu0 0
        %4001 = vmatpush1.bf16.msra.mxu0 %v3979
        %4002 = vmatprep.subr.bf16.mxu0 0
        %4003 = vmatpush1.bf16.msra.mxu0 %v3980
        %4004 = vmatprep.subr.bf16.mxu0 0
        %4005 = vmatpush1.bf16.msra.mxu0 %v3981
        %4006 = vmatprep.subr.bf16.mxu0 0
        %4007 = vmatpush1.bf16.msra.mxu0 0
        %4008 = vmatprep.subr.bf16.mxu0 0
        %4009 = vmatpush1.bf16.msra.mxu0 0
        %4010 = vmatprep.subr.bf16.mxu0 0
        %4011 = vmatpush1.bf16.msra.mxu0 0
        %4012 = vmatprep.subr.bf16.mxu0 0
        %4013 = vmatpush1.bf16.msra.mxu0 0
        %4014 = vmatprep.subr.bf16.mxu0 0
        %4015 = vmatpush1.bf16.msra.mxu0 0
        %4016 = vmatprep.subr.bf16.mxu0 0
        %4017 = vmatpush1.bf16.msra.mxu0 0
        %4018 = vmatprep.subr.bf16.mxu0 0
        %4019 = vmatpush1.bf16.msra.mxu0 0
        %4020 = vmatprep.subr.bf16.mxu0 0
        %4021 = vmatpush1.bf16.msra.mxu0 0
        %4022 = vmatprep.mubr.bf16.mxu0 0
        %4023 = vmatmul.mubr.bf16.gmra.mrb[0].mxu0 %v3155
        %v4024 = vpop.f32.mrb[0].mxu0
        %v4025 = vadd.f32 %v3757, %v4024
        %v4026 = vpop.f32.mrb[0].mxu0
        %v4027 = vpop.f32.mrb[0].mxu0
        %v4028 = vpop.f32.mrb[0].mxu0
        %4029 = vdwg.mxu0
        %v4046 = vunpack.c.l.b16 %v3270
        %v4047 = vunpack.c.l.b16 %v3271
        %v4048 = vunpack.c.l.b16 %v3272
        %v4049 = vunpack.c.l.b16 %v3273
        %v4050 = vunpack.c.l.b16 %v3274
        %v4051 = vunpack.c.l.b16 %v3275
        %v4052 = vunpack.c.l.b16 %v3276
        %v4053 = vunpack.c.l.b16 %v3277
        %v4054 = vunpack.c.l.b16 %v3278
        %v4055 = vunpack.c.l.b16 %v3279
        %v4056 = vunpack.c.l.b16 %v3280
        %v4057 = vunpack.c.l.b16 %v3281
        %v4058 = vunpack.c.l.b16 %v3282
        %v4059 = vunpack.c.l.b16 %v3283
        %v4060 = vunpack.c.l.b16 %v3284
        %v4061 = vunpack.c.l.b16 %v3285
        %v4062 = vpack.c.b16 %v4047, %v4046
        %v4063 = vpack.c.b16 %v4049, %v4048
        %v4064 = vpack.c.b16 %v4051, %v4050
        %v4065 = vpack.c.b16 %v4053, %v4052
        %v4066 = vpack.c.b16 %v4055, %v4054
        %v4067 = vpack.c.b16 %v4057, %v4056
        %v4068 = vpack.c.b16 %v4059, %v4058
        %v4069 = vpack.c.b16 %v4061, %v4060
        %4078 = vmatprep.subr.bf16.mxu0 0
        %4079 = vmatpush1.bf16.msra.mxu0 %v4062
        %4080 = vmatprep.subr.bf16.mxu0 0
        %4081 = vmatpush1.bf16.msra.mxu0 %v4063
        %4082 = vmatprep.subr.bf16.mxu0 0
        %4083 = vmatpush1.bf16.msra.mxu0 %v4064
        %4084 = vmatprep.subr.bf16.mxu0 0
        %4085 = vmatpush1.bf16.msra.mxu0 %v4065
        %4086 = vmatprep.subr.bf16.mxu0 0
        %4087 = vmatpush1.bf16.msra.mxu0 %v4066
        %4088 = vmatprep.subr.bf16.mxu0 0
        %4089 = vmatpush1.bf16.msra.mxu0 %v4067
        %4090 = vmatprep.subr.bf16.mxu0 0
        %4091 = vmatpush1.bf16.msra.mxu0 %v4068
        %4092 = vmatprep.subr.bf16.mxu0 0
        %4093 = vmatpush1.bf16.msra.mxu0 %v4069
        %4094 = vmatprep.subr.bf16.mxu0 0
        %4095 = vmatpush1.bf16.msra.mxu0 0
        %4096 = vmatprep.subr.bf16.mxu0 0
        %4097 = vmatpush1.bf16.msra.mxu0 0
        %4098 = vmatprep.subr.bf16.mxu0 0
        %4099 = vmatpush1.bf16.msra.mxu0 0
        %4100 = vmatprep.subr.bf16.mxu0 0
        %4101 = vmatpush1.bf16.msra.mxu0 0
        %4102 = vmatprep.subr.bf16.mxu0 0
        %4103 = vmatpush1.bf16.msra.mxu0 0
        %4104 = vmatprep.subr.bf16.mxu0 0
        %4105 = vmatpush1.bf16.msra.mxu0 0
        %4106 = vmatprep.subr.bf16.mxu0 0
        %4107 = vmatpush1.bf16.msra.mxu0 0
        %4108 = vmatprep.subr.bf16.mxu0 0
        %4109 = vmatpush1.bf16.msra.mxu0 0
        %4110 = vmatprep.mubr.bf16.mxu0 0
        %4111 = vmatmul.mubr.bf16.gmra.mrb[0].mxu0 %v3155
        %v4112 = vpop.f32.mrb[0].mxu0
        %v4113 = vadd.f32 %v3761, %v4112
        %v4114 = vpop.f32.mrb[0].mxu0
        %v4115 = vpop.f32.mrb[0].mxu0
        %v4116 = vpop.f32.mrb[0].mxu0
        %4117 = vdwg.mxu0
        %v4122 = vlaneseq
        %v4123 = vshrl.u32 %v4122, 7
        %v4124 = vsub.s32 0, %v4123
        %v4125 = vrot.slane %v3362, %v4124
        %v4126 = vlaneseq
        %v4127 = vshrl.u32 %v4126, 7
        %v4128 = vsub.s32 0, %v4127
        %v4129 = vrot.slane %v3363, %v4128
        %v4130 = vlaneseq
        %v4131 = vshrl.u32 %v4130, 7
        %v4132 = vsub.s32 0, %v4131
        %v4133 = vrot.slane %v3364, %v4132
        %v4134 = vlaneseq
        %v4135 = vshrl.u32 %v4134, 7
        %v4136 = vsub.s32 0, %v4135
        %v4137 = vrot.slane %v3365, %v4136
        %v4158 = vunpack.c.l.b16 %v3287
        %v4159 = vunpack.c.l.b16 %v3288
        %v4160 = vunpack.c.l.b16 %v3289
        %v4161 = vunpack.c.l.b16 %v3290
        %v4162 = vunpack.c.l.b16 %v3291
        %v4163 = vunpack.c.l.b16 %v3292
        %v4164 = vunpack.c.l.b16 %v3293
        %v4165 = vunpack.c.l.b16 %v3294
        %v4166 = vunpack.c.l.b16 %v3295
        %v4167 = vunpack.c.l.b16 %v3296
        %v4168 = vunpack.c.l.b16 %v3297
        %v4169 = vunpack.c.l.b16 %v3298
        %v4170 = vunpack.c.l.b16 %v3299
        %v4171 = vunpack.c.l.b16 %v3300
        %v4172 = vunpack.c.l.b16 %v3301
        %v4173 = vunpack.c.l.b16 %v3302
        %v4174 = vpack.c.b16 %v4159, %v4158
        %v4175 = vpack.c.b16 %v4161, %v4160
        %v4176 = vpack.c.b16 %v4163, %v4162
        %v4177 = vpack.c.b16 %v4165, %v4164
        %v4178 = vpack.c.b16 %v4167, %v4166
        %v4179 = vpack.c.b16 %v4169, %v4168
        %v4180 = vpack.c.b16 %v4171, %v4170
        %v4181 = vpack.c.b16 %v4173, %v4172
        %4190 = vmatprep.subr.bf16.mxu0 0
        %4191 = vmatpush1.bf16.msra.mxu0 %v4174
        %4192 = vmatprep.subr.bf16.mxu0 0
        %4193 = vmatpush1.bf16.msra.mxu0 %v4175
        %4194 = vmatprep.subr.bf16.mxu0 0
        %4195 = vmatpush1.bf16.msra.mxu0 %v4176
        %4196 = vmatprep.subr.bf16.mxu0 0
        %4197 = vmatpush1.bf16.msra.mxu0 %v4177
        %4198 = vmatprep.subr.bf16.mxu0 0
        %4199 = vmatpush1.bf16.msra.mxu0 %v4178
        %4200 = vmatprep.subr.bf16.mxu0 0
        %4201 = vmatpush1.bf16.msra.mxu0 %v4179
        %4202 = vmatprep.subr.bf16.mxu0 0
        %4203 = vmatpush1.bf16.msra.mxu0 %v4180
        %4204 = vmatprep.subr.bf16.mxu0 0
        %4205 = vmatpush1.bf16.msra.mxu0 %v4181
        %4206 = vmatprep.subr.bf16.mxu0 0
        %4207 = vmatpush1.bf16.msra.mxu0 0
        %4208 = vmatprep.subr.bf16.mxu0 0
        %4209 = vmatpush1.bf16.msra.mxu0 0
        %4210 = vmatprep.subr.bf16.mxu0 0
        %4211 = vmatpush1.bf16.msra.mxu0 0
        %4212 = vmatprep.subr.bf16.mxu0 0
        %4213 = vmatpush1.bf16.msra.mxu0 0
        %4214 = vmatprep.subr.bf16.mxu0 0
        %4215 = vmatpush1.bf16.msra.mxu0 0
        %4216 = vmatprep.subr.bf16.mxu0 0
        %4217 = vmatpush1.bf16.msra.mxu0 0
        %4218 = vmatprep.subr.bf16.mxu0 0
        %4219 = vmatpush1.bf16.msra.mxu0 0
        %4220 = vmatprep.subr.bf16.mxu0 0
        %4221 = vmatpush1.bf16.msra.mxu0 0
        %4222 = vmatprep.mubr.bf16.mxu0 0
        %4223 = vmatmul.mubr.bf16.gmra.mrb[0].mxu0 %v3155
        %v4224 = vpop.f32.mrb[0].mxu0
        %v4225 = vadd.f32 %v4125, %v4224
        %v4226 = vpop.f32.mrb[0].mxu0
        %v4227 = vpop.f32.mrb[0].mxu0
        %v4228 = vpop.f32.mrb[0].mxu0
        %4229 = vdwg.mxu0
        %v4246 = vunpack.c.l.b16 %v3303
        %v4247 = vunpack.c.l.b16 %v3304
        %v4248 = vunpack.c.l.b16 %v3305
        %v4249 = vunpack.c.l.b16 %v3306
        %v4250 = vunpack.c.l.b16 %v3307
        %v4251 = vunpack.c.l.b16 %v3308
        %v4252 = vunpack.c.l.b16 %v3309
        %v4253 = vunpack.c.l.b16 %v3310
        %v4254 = vunpack.c.l.b16 %v3311
        %v4255 = vunpack.c.l.b16 %v3312
        %v4256 = vunpack.c.l.b16 %v3313
        %v4257 = vunpack.c.l.b16 %v3314
        %v4258 = vunpack.c.l.b16 %v3315
        %v4259 = vunpack.c.l.b16 %v3316
        %v4260 = vunpack.c.l.b16 %v3317
        %v4261 = vunpack.c.l.b16 %v3318
        %v4262 = vpack.c.b16 %v4247, %v4246
        %v4263 = vpack.c.b16 %v4249, %v4248
        %v4264 = vpack.c.b16 %v4251, %v4250
        %v4265 = vpack.c.b16 %v4253, %v4252
        %v4266 = vpack.c.b16 %v4255, %v4254
        %v4267 = vpack.c.b16 %v4257, %v4256
        %v4268 = vpack.c.b16 %v4259, %v4258
        %v4269 = vpack.c.b16 %v4261, %v4260
        %4278 = vmatprep.subr.bf16.mxu0 0
        %4279 = vmatpush1.bf16.msra.mxu0 %v4262
        %4280 = vmatprep.subr.bf16.mxu0 0
        %4281 = vmatpush1.bf16.msra.mxu0 %v4263
        %4282 = vmatprep.subr.bf16.mxu0 0
        %4283 = vmatpush1.bf16.msra.mxu0 %v4264
        %4284 = vmatprep.subr.bf16.mxu0 0
        %4285 = vmatpush1.bf16.msra.mxu0 %v4265
        %4286 = vmatprep.subr.bf16.mxu0 0
        %4287 = vmatpush1.bf16.msra.mxu0 %v4266
        %4288 = vmatprep.subr.bf16.mxu0 0
        %4289 = vmatpush1.bf16.msra.mxu0 %v4267
        %4290 = vmatprep.subr.bf16.mxu0 0
        %4291 = vmatpush1.bf16.msra.mxu0 %v4268
        %4292 = vmatprep.subr.bf16.mxu0 0
        %4293 = vmatpush1.bf16.msra.mxu0 %v4269
        %4294 = vmatprep.subr.bf16.mxu0 0
        %4295 = vmatpush1.bf16.msra.mxu0 0
        %4296 = vmatprep.subr.bf16.mxu0 0
        %4297 = vmatpush1.bf16.msra.mxu0 0
        %4298 = vmatprep.subr.bf16.mxu0 0
        %4299 = vmatpush1.bf16.msra.mxu0 0
        %4300 = vmatprep.subr.bf16.mxu0 0
        %4301 = vmatpush1.bf16.msra.mxu0 0
        %4302 = vmatprep.subr.bf16.mxu0 0
        %4303 = vmatpush1.bf16.msra.mxu0 0
        %4304 = vmatprep.subr.bf16.mxu0 0
        %4305 = vmatpush1.bf16.msra.mxu0 0
        %4306 = vmatprep.subr.bf16.mxu0 0
        %4307 = vmatpush1.bf16.msra.mxu0 0
        %4308 = vmatprep.subr.bf16.mxu0 0
        %4309 = vmatpush1.bf16.msra.mxu0 0
        %4310 = vmatprep.mubr.bf16.mxu0 0
        %4311 = vmatmul.mubr.bf16.gmra.mrb[0].mxu0 %v3155
        %v4312 = vpop.f32.mrb[0].mxu0
        %v4313 = vadd.f32 %v4129, %v4312
        %v4314 = vpop.f32.mrb[0].mxu0
        %v4315 = vpop.f32.mrb[0].mxu0
        %v4316 = vpop.f32.mrb[0].mxu0
        %4317 = vdwg.mxu0
        %v4334 = vunpack.c.l.b16 %v3319
        %v4335 = vunpack.c.l.b16 %v3320
        %v4336 = vunpack.c.l.b16 %v3321
        %v4337 = vunpack.c.l.b16 %v3322
        %v4338 = vunpack.c.l.b16 %v3323
        %v4339 = vunpack.c.l.b16 %v3324
        %v4340 = vunpack.c.l.b16 %v3325
        %v4341 = vunpack.c.l.b16 %v3326
        %v4342 = vunpack.c.l.b16 %v3327
        %v4343 = vunpack.c.l.b16 %v3328
        %v4344 = vunpack.c.l.b16 %v3329
        %v4345 = vunpack.c.l.b16 %v3330
        %v4346 = vunpack.c.l.b16 %v3331
        %v4347 = vunpack.c.l.b16 %v3332
        %v4348 = vunpack.c.l.b16 %v3333
        %v4349 = vunpack.c.l.b16 %v3334
        %v4350 = vpack.c.b16 %v4335, %v4334
        %v4351 = vpack.c.b16 %v4337, %v4336
        %v4352 = vpack.c.b16 %v4339, %v4338
        %v4353 = vpack.c.b16 %v4341, %v4340
        %v4354 = vpack.c.b16 %v4343, %v4342
        %v4355 = vpack.c.b16 %v4345, %v4344
        %v4356 = vpack.c.b16 %v4347, %v4346
        %v4357 = vpack.c.b16 %v4349, %v4348
        %4366 = vmatprep.subr.bf16.mxu0 0
        %4367 = vmatpush1.bf16.msra.mxu0 %v4350
        %4368 = vmatprep.subr.bf16.mxu0 0
        %4369 = vmatpush1.bf16.msra.mxu0 %v4351
        %4370 = vmatprep.subr.bf16.mxu0 0
        %4371 = vmatpush1.bf16.msra.mxu0 %v4352
        %4372 = vmatprep.subr.bf16.mxu0 0
        %4373 = vmatpush1.bf16.msra.mxu0 %v4353
        %4374 = vmatprep.subr.bf16.mxu0 0
        %4375 = vmatpush1.bf16.msra.mxu0 %v4354
        %4376 = vmatprep.subr.bf16.mxu0 0
        %4377 = vmatpush1.bf16.msra.mxu0 %v4355
        %4378 = vmatprep.subr.bf16.mxu0 0
        %4379 = vmatpush1.bf16.msra.mxu0 %v4356
        %4380 = vmatprep.subr.bf16.mxu0 0
        %4381 = vmatpush1.bf16.msra.mxu0 %v4357
        %4382 = vmatprep.subr.bf16.mxu0 0
        %4383 = vmatpush1.bf16.msra.mxu0 0
        %4384 = vmatprep.subr.bf16.mxu0 0
        %4385 = vmatpush1.bf16.msra.mxu0 0
        %4386 = vmatprep.subr.bf16.mxu0 0
        %4387 = vmatpush1.bf16.msra.mxu0 0
        %4388 = vmatprep.subr.bf16.mxu0 0
        %4389 = vmatpush1.bf16.msra.mxu0 0
        %4390 = vmatprep.subr.bf16.mxu0 0
        %4391 = vmatpush1.bf16.msra.mxu0 0
        %4392 = vmatprep.subr.bf16.mxu0 0
        %4393 = vmatpush1.bf16.msra.mxu0 0
        %4394 = vmatprep.subr.bf16.mxu0 0
        %4395 = vmatpush1.bf16.msra.mxu0 0
        %4396 = vmatprep.subr.bf16.mxu0 0
        %4397 = vmatpush1.bf16.msra.mxu0 0
        %4398 = vmatprep.mubr.bf16.mxu0 0
        %4399 = vmatmul.mubr.bf16.gmra.mrb[0].mxu0 %v3155
        %v4400 = vpop.f32.mrb[0].mxu0
        %v4401 = vadd.f32 %v4133, %v4400
        %v4402 = vpop.f32.mrb[0].mxu0
        %v4403 = vpop.f32.mrb[0].mxu0
        %v4404 = vpop.f32.mrb[0].mxu0
        %4405 = vdwg.mxu0
        %v4422 = vunpack.c.l.b16 %v3335
        %v4423 = vunpack.c.l.b16 %v3336
        %v4424 = vunpack.c.l.b16 %v3337
        %v4425 = vunpack.c.l.b16 %v3338
        %v4426 = vunpack.c.l.b16 %v3339
        %v4427 = vunpack.c.l.b16 %v3340
        %v4428 = vunpack.c.l.b16 %v3341
        %v4429 = vunpack.c.l.b16 %v3342
        %v4430 = vunpack.c.l.b16 %v3343
        %v4431 = vunpack.c.l.b16 %v3344
        %v4432 = vunpack.c.l.b16 %v3345
        %v4433 = vunpack.c.l.b16 %v3346
        %v4434 = vunpack.c.l.b16 %v3347
        %v4435 = vunpack.c.l.b16 %v3348
        %v4436 = vunpack.c.l.b16 %v3349
        %v4437 = vunpack.c.l.b16 %v3350
        %v4438 = vpack.c.b16 %v4423, %v4422
        %v4439 = vpack.c.b16 %v4425, %v4424
        %v4440 = vpack.c.b16 %v4427, %v4426
        %v4441 = vpack.c.b16 %v4429, %v4428
        %v4442 = vpack.c.b16 %v4431, %v4430
        %v4443 = vpack.c.b16 %v4433, %v4432
        %v4444 = vpack.c.b16 %v4435, %v4434
        %v4445 = vpack.c.b16 %v4437, %v4436
        %4454 = vmatprep.subr.bf16.mxu0 0
        %4455 = vmatpush1.bf16.msra.mxu0 %v4438
        %4456 = vmatprep.subr.bf16.mxu0 0
        %4457 = vmatpush1.bf16.msra.mxu0 %v4439
        %4458 = vmatprep.subr.bf16.mxu0 0
        %4459 = vmatpush1.bf16.msra.mxu0 %v4440
        %4460 = vmatprep.subr.bf16.mxu0 0
        %4461 = vmatpush1.bf16.msra.mxu0 %v4441
        %4462 = vmatprep.subr.bf16.mxu0 0
        %4463 = vmatpush1.bf16.msra.mxu0 %v4442
        %4464 = vmatprep.subr.bf16.mxu0 0
        %4465 = vmatpush1.bf16.msra.mxu0 %v4443
        %4466 = vmatprep.subr.bf16.mxu0 0
        %4467 = vmatpush1.bf16.msra.mxu0 %v4444
        %4468 = vmatprep.subr.bf16.mxu0 0
        %4469 = vmatpush1.bf16.msra.mxu0 %v4445
        %4470 = vmatprep.subr.bf16.mxu0 0
        %4471 = vmatpush1.bf16.msra.mxu0 0
        %4472 = vmatprep.subr.bf16.mxu0 0
        %4473 = vmatpush1.bf16.msra.mxu0 0
        %4474 = vmatprep.subr.bf16.mxu0 0
        %4475 = vmatpush1.bf16.msra.mxu0 0
        %4476 = vmatprep.subr.bf16.mxu0 0
        %4477 = vmatpush1.bf16.msra.mxu0 0
        %4478 = vmatprep.subr.bf16.mxu0 0
        %4479 = vmatpush1.bf16.msra.mxu0 0
        %4480 = vmatprep.subr.bf16.mxu0 0
        %4481 = vmatpush1.bf16.msra.mxu0 0
        %4482 = vmatprep.subr.bf16.mxu0 0
        %4483 = vmatpush1.bf16.msra.mxu0 0
        %4484 = vmatprep.subr.bf16.mxu0 0
        %4485 = vmatpush1.bf16.msra.mxu0 0
        %4486 = vmatprep.mubr.bf16.mxu0 0
        %4487 = vmatmul.mubr.bf16.gmra.mrb[0].mxu0 %v3155
        %v4488 = vpop.f32.mrb[0].mxu0
        %v4489 = vadd.f32 %v4137, %v4488
        %v4490 = vpop.f32.mrb[0].mxu0
        %v4491 = vpop.f32.mrb[0].mxu0
        %v4492 = vpop.f32.mrb[0].mxu0
        %4493 = vdwg.mxu0
        %v4494 = vpack.c.bf16 %v3473, %v3473
        %v4495 = vpack.c.bf16 %v3561, %v3561
        %v4496 = vpack.c.bf16 %v3649, %v3649
        %v4497 = vpack.c.bf16 %v3737, %v3737
        %v4498 = vpack.c.bf16 %v3849, %v3849
        %v4499 = vpack.c.bf16 %v3937, %v3937
        %v4500 = vpack.c.bf16 %v4025, %v4025
        %v4501 = vpack.c.bf16 %v4113, %v4113
        %v4503 = vsel %vm2080, %v4494, 0
        %v4506 = vsel %vm2080, %v4498, 0
        %4508 = vmatprep.subr.bf16.mxu0 0
        %4509 = vmatpush1.bf16.xpose.msra.mxu0 %v4506
        %4510 = vmatprep.subr.bf16.mxu0 0
        %4511 = vmatpush1.bf16.xpose.msra.mxu0 0
        %4512 = vmatprep.subr.bf16.mxu0 0
        %4513 = vmatpush1.bf16.xpose.msra.mxu0 0
        %4514 = vmatprep.subr.bf16.mxu0 0
        %4515 = vmatpush1.bf16.xpose.msra.mxu0 0
        %4516 = vmatprep.subr.bf16.mxu0 0
        %4517 = vmatpush1.bf16.xpose.msra.mxu0 0
        %4518 = vmatprep.subr.bf16.mxu0 0
        %4519 = vmatpush1.bf16.xpose.msra.mxu0 0
        %4520 = vmatprep.subr.bf16.mxu0 0
        %4521 = vmatpush1.bf16.xpose.msra.mxu0 0
        %4522 = vmatprep.subr.bf16.mxu0 0
        %4523 = vmatpush1.bf16.xpose.msra.mxu0 0
        %4524 = vmatprep.subr.bf16.mxu0 0
        %4525 = vmatpush1.bf16.xpose.msra.mxu0 0
        %4526 = vmatprep.subr.bf16.mxu0 0
        %4527 = vmatpush1.bf16.xpose.msra.mxu0 0
        %4528 = vmatprep.subr.bf16.mxu0 0
        %4529 = vmatpush1.bf16.xpose.msra.mxu0 0
        %4530 = vmatprep.subr.bf16.mxu0 0
        %4531 = vmatpush1.bf16.xpose.msra.mxu0 0
        %4532 = vmatprep.subr.bf16.mxu0 0
        %4533 = vmatpush1.bf16.xpose.msra.mxu0 0
        %4534 = vmatprep.subr.bf16.mxu0 0
        %4535 = vmatpush1.bf16.xpose.msra.mxu0 0
        %4536 = vmatprep.subr.bf16.mxu0 0
        %4537 = vmatpush1.bf16.xpose.msra.mxu0 0
        %4538 = vmatprep.subr.bf16.mxu0 0
        %4539 = vmatpush1.bf16.xpose.msra.mxu0 0
        %4540 = vmatprep.mubr.bf16.mxu0 0
        %4541 = vmatmul.mubr.bf16.gmra.mrb[0].mxu0 %v4503
        %v4542 = vpop.f32.mrb[0].mxu0
        %v4543 = vadd.f32 %v709, %v4542
        %v4544 = vpop.f32.mrb[0].mxu0
        %v4545 = vpop.f32.mrb[0].mxu0
        %v4546 = vpop.f32.mrb[0].mxu0
        %4547 = vdwg.mxu0
        %v4549 = vsel %vm2080, %v4495, 0
        %v4552 = vsel %vm2080, %v4499, 0
        %4554 = vmatprep.subr.bf16.mxu0 0
        %4555 = vmatpush1.bf16.xpose.msra.mxu0 %v4552
        %4556 = vmatprep.subr.bf16.mxu0 0
        %4557 = vmatpush1.bf16.xpose.msra.mxu0 0
        %4558 = vmatprep.subr.bf16.mxu0 0
        %4559 = vmatpush1.bf16.xpose.msra.mxu0 0
        %4560 = vmatprep.subr.bf16.mxu0 0
        %4561 = vmatpush1.bf16.xpose.msra.mxu0 0
        %4562 = vmatprep.subr.bf16.mxu0 0
        %4563 = vmatpush1.bf16.xpose.msra.mxu0 0
        %4564 = vmatprep.subr.bf16.mxu0 0
        %4565 = vmatpush1.bf16.xpose.msra.mxu0 0
        %4566 = vmatprep.subr.bf16.mxu0 0
        %4567 = vmatpush1.bf16.xpose.msra.mxu0 0
        %4568 = vmatprep.subr.bf16.mxu0 0
        %4569 = vmatpush1.bf16.xpose.msra.mxu0 0
        %4570 = vmatprep.subr.bf16.mxu0 0
        %4571 = vmatpush1.bf16.xpose.msra.mxu0 0
        %4572 = vmatprep.subr.bf16.mxu0 0
        %4573 = vmatpush1.bf16.xpose.msra.mxu0 0
        %4574 = vmatprep.subr.bf16.mxu0 0
        %4575 = vmatpush1.bf16.xpose.msra.mxu0 0
        %4576 = vmatprep.subr.bf16.mxu0 0
        %4577 = vmatpush1.bf16.xpose.msra.mxu0 0
        %4578 = vmatprep.subr.bf16.mxu0 0
        %4579 = vmatpush1.bf16.xpose.msra.mxu0 0
        %4580 = vmatprep.subr.bf16.mxu0 0
        %4581 = vmatpush1.bf16.xpose.msra.mxu0 0
        %4582 = vmatprep.subr.bf16.mxu0 0
        %4583 = vmatpush1.bf16.xpose.msra.mxu0 0
        %4584 = vmatprep.subr.bf16.mxu0 0
        %4585 = vmatpush1.bf16.xpose.msra.mxu0 0
        %4586 = vmatprep.mubr.bf16.mxu0 0
        %4587 = vmatmul.mubr.bf16.gmra.mrb[0].mxu0 %v4549
        %v4588 = vpop.f32.mrb[0].mxu0
        %v4589 = vadd.f32 %v709, %v4588
        %v4590 = vpop.f32.mrb[0].mxu0
        %v4591 = vpop.f32.mrb[0].mxu0
        %v4592 = vpop.f32.mrb[0].mxu0
        %4593 = vdwg.mxu0
        %v4595 = vsel %vm2080, %v4496, 0
        %v4598 = vsel %vm2080, %v4500, 0
        %4600 = vmatprep.subr.bf16.mxu0 0
        %4601 = vmatpush1.bf16.xpose.msra.mxu0 %v4598
        %4602 = vmatprep.subr.bf16.mxu0 0
        %4603 = vmatpush1.bf16.xpose.msra.mxu0 0
        %4604 = vmatprep.subr.bf16.mxu0 0
        %4605 = vmatpush1.bf16.xpose.msra.mxu0 0
        %4606 = vmatprep.subr.bf16.mxu0 0
        %4607 = vmatpush1.bf16.xpose.msra.mxu0 0
        %4608 = vmatprep.subr.bf16.mxu0 0
        %4609 = vmatpush1.bf16.xpose.msra.mxu0 0
        %4610 = vmatprep.subr.bf16.mxu0 0
        %4611 = vmatpush1.bf16.xpose.msra.mxu0 0
        %4612 = vmatprep.subr.bf16.mxu0 0
        %4613 = vmatpush1.bf16.xpose.msra.mxu0 0
        %4614 = vmatprep.subr.bf16.mxu0 0
        %4615 = vmatpush1.bf16.xpose.msra.mxu0 0
        %4616 = vmatprep.subr.bf16.mxu0 0
        %4617 = vmatpush1.bf16.xpose.msra.mxu0 0
        %4618 = vmatprep.subr.bf16.mxu0 0
        %4619 = vmatpush1.bf16.xpose.msra.mxu0 0
        %4620 = vmatprep.subr.bf16.mxu0 0
        %4621 = vmatpush1.bf16.xpose.msra.mxu0 0
        %4622 = vmatprep.subr.bf16.mxu0 0
        %4623 = vmatpush1.bf16.xpose.msra.mxu0 0
        %4624 = vmatprep.subr.bf16.mxu0 0
        %4625 = vmatpush1.bf16.xpose.msra.mxu0 0
        %4626 = vmatprep.subr.bf16.mxu0 0
        %4627 = vmatpush1.bf16.xpose.msra.mxu0 0
        %4628 = vmatprep.subr.bf16.mxu0 0
        %4629 = vmatpush1.bf16.xpose.msra.mxu0 0
        %4630 = vmatprep.subr.bf16.mxu0 0
        %4631 = vmatpush1.bf16.xpose.msra.mxu0 0
        %4632 = vmatprep.mubr.bf16.mxu0 0
        %4633 = vmatmul.mubr.bf16.gmra.mrb[0].mxu0 %v4595
        %v4634 = vpop.f32.mrb[0].mxu0
        %v4635 = vadd.f32 %v709, %v4634
        %v4636 = vpop.f32.mrb[0].mxu0
        %v4637 = vpop.f32.mrb[0].mxu0
        %v4638 = vpop.f32.mrb[0].mxu0
        %4639 = vdwg.mxu0
        %v4641 = vsel %vm2080, %v4497, 0
        %v4644 = vsel %vm2080, %v4501, 0
        %4646 = vmatprep.subr.bf16.mxu0 0
        %4647 = vmatpush1.bf16.xpose.msra.mxu0 %v4644
        %4648 = vmatprep.subr.bf16.mxu0 0
        %4649 = vmatpush1.bf16.xpose.msra.mxu0 0
        %4650 = vmatprep.subr.bf16.mxu0 0
        %4651 = vmatpush1.bf16.xpose.msra.mxu0 0
        %4652 = vmatprep.subr.bf16.mxu0 0
        %4653 = vmatpush1.bf16.xpose.msra.mxu0 0
        %4654 = vmatprep.subr.bf16.mxu0 0
        %4655 = vmatpush1.bf16.xpose.msra.mxu0 0
        %4656 = vmatprep.subr.bf16.mxu0 0
        %4657 = vmatpush1.bf16.xpose.msra.mxu0 0
        %4658 = vmatprep.subr.bf16.mxu0 0
        %4659 = vmatpush1.bf16.xpose.msra.mxu0 0
        %4660 = vmatprep.subr.bf16.mxu0 0
        %4661 = vmatpush1.bf16.xpose.msra.mxu0 0
        %4662 = vmatprep.subr.bf16.mxu0 0
        %4663 = vmatpush1.bf16.xpose.msra.mxu0 0
        %4664 = vmatprep.subr.bf16.mxu0 0
        %4665 = vmatpush1.bf16.xpose.msra.mxu0 0
        %4666 = vmatprep.subr.bf16.mxu0 0
        %4667 = vmatpush1.bf16.xpose.msra.mxu0 0
        %4668 = vmatprep.subr.bf16.mxu0 0
        %4669 = vmatpush1.bf16.xpose.msra.mxu0 0
        %4670 = vmatprep.subr.bf16.mxu0 0
        %4671 = vmatpush1.bf16.xpose.msra.mxu0 0
        %4672 = vmatprep.subr.bf16.mxu0 0
        %4673 = vmatpush1.bf16.xpose.msra.mxu0 0
        %4674 = vmatprep.subr.bf16.mxu0 0
        %4675 = vmatpush1.bf16.xpose.msra.mxu0 0
        %4676 = vmatprep.subr.bf16.mxu0 0
        %4677 = vmatpush1.bf16.xpose.msra.mxu0 0
        %4678 = vmatprep.mubr.bf16.mxu0 0
        %4679 = vmatmul.mubr.bf16.gmra.mrb[0].mxu0 %v4641
        %v4680 = vpop.f32.mrb[0].mxu0
        %v4681 = vadd.f32 %v709, %v4680
        %v4682 = vpop.f32.mrb[0].mxu0
        %v4683 = vpop.f32.mrb[0].mxu0
        %v4684 = vpop.f32.mrb[0].mxu0
        %4685 = vdwg.mxu0
        %v4686 = vsel %vm2265, %v4543, -inf
        %4687 = vmax.xlane.f32.xlu0 %v4686
        %v4688 = vpop.xlane.xlu0 %4687
        %v4689 = vsel %vm2265, %v4589, -inf
        %4690 = vmax.xlane.f32.xlu0 %v4689
        %v4691 = vpop.xlane.xlu0 %4690
        %v4692 = vsel %vm2265, %v4635, -inf
        %4693 = vmax.xlane.f32.xlu0 %v4692
        %v4694 = vpop.xlane.xlu0 %4693
        %v4695 = vsel %vm2265, %v4681, -inf
        %4696 = vmax.xlane.f32.xlu0 %v4695
        %v4697 = vpop.xlane.xlu0 %4696
        %v4698 = vsub.f32 %v4543, %v4688
        %v4699 = vsub.f32 %v4589, %v4691
        %v4700 = vsub.f32 %v4635, %v4694
        %v4701 = vsub.f32 %v4681, %v4697
        %v4702 = vmul.f32 %v4698, 1.442695
        %v4703 = vpow.pop %v4702
        %v4704 = vmul.f32 %v4699, 1.442695
        %v4705 = vpow.pop %v4704
        %v4706 = vmul.f32 %v4700, 1.442695
        %v4707 = vpow.pop %v4706
        %v4708 = vmul.f32 %v4701, 1.442695
        %v4709 = vpow.pop %v4708
        %v4710 = vsel %vm2265, %v4703, 0.0
        %4711 = vadd.xlane.f32.xlu0 %v4710
        %v4712 = vpop.xlane.xlu0 %4711
        %v4713 = vsel %vm2265, %v4705, 0.0
        %4714 = vadd.xlane.f32.xlu0 %v4713
        %v4715 = vpop.xlane.xlu0 %4714
        %v4716 = vsel %vm2265, %v4707, 0.0
        %4717 = vadd.xlane.f32.xlu0 %v4716
        %v4718 = vpop.xlane.xlu0 %4717
        %v4719 = vsel %vm2265, %v4709, 0.0
        %4720 = vadd.xlane.f32.xlu0 %v4719
        %v4721 = vpop.xlane.xlu0 %4720
        %v4722 = vrcp.pop %v4712
        %v4723 = vrcp.pop %v4715
        %v4724 = vrcp.pop %v4718
        %v4725 = vrcp.pop %v4721
        %v4726 = vmul.f32 %v4703, %v4722
        %v4727 = vmul.f32 %v4705, %v4723
        %v4728 = vmul.f32 %v4707, %v4724
        %v4729 = vmul.f32 %v4709, %v4725
        %v4730 = vpack.c.bf16 %v4726, %v4726
        %v4731 = vpack.c.bf16 %v4727, %v4727
        %v4732 = vpack.c.bf16 %v4728, %v4728
        %v4733 = vpack.c.bf16 %v4729, %v4729
        %v4734 = vpack.c.bf16 %v4225, %v4225
        %v4735 = vpack.c.bf16 %v4313, %v4313
        %v4736 = vpack.c.bf16 %v4401, %v4401
        %v4737 = vpack.c.bf16 %v4489, %v4489
        %v4739 = vsel %vm2265, %v4730, 0
        %v4742 = vsel %vm2321, %v4734, 0
        %4744 = vmatprep.subr.bf16.mxu0 0
        %4745 = vmatpush1.bf16.msra.mxu0 %v4742
        %4746 = vmatprep.subr.bf16.mxu0 0
        %4747 = vmatpush1.bf16.msra.mxu0 0
        %4748 = vmatprep.subr.bf16.mxu0 0
        %4749 = vmatpush1.bf16.msra.mxu0 0
        %4750 = vmatprep.subr.bf16.mxu0 0
        %4751 = vmatpush1.bf16.msra.mxu0 0
        %4752 = vmatprep.subr.bf16.mxu0 0
        %4753 = vmatpush1.bf16.msra.mxu0 0
        %4754 = vmatprep.subr.bf16.mxu0 0
        %4755 = vmatpush1.bf16.msra.mxu0 0
        %4756 = vmatprep.subr.bf16.mxu0 0
        %4757 = vmatpush1.bf16.msra.mxu0 0
        %4758 = vmatprep.subr.bf16.mxu0 0
        %4759 = vmatpush1.bf16.msra.mxu0 0
        %4760 = vmatprep.subr.bf16.mxu0 0
        %4761 = vmatpush1.bf16.msra.mxu0 0
        %4762 = vmatprep.subr.bf16.mxu0 0
        %4763 = vmatpush1.bf16.msra.mxu0 0
        %4764 = vmatprep.subr.bf16.mxu0 0
        %4765 = vmatpush1.bf16.msra.mxu0 0
        %4766 = vmatprep.subr.bf16.mxu0 0
        %4767 = vmatpush1.bf16.msra.mxu0 0
        %4768 = vmatprep.subr.bf16.mxu0 0
        %4769 = vmatpush1.bf16.msra.mxu0 0
        %4770 = vmatprep.subr.bf16.mxu0 0
        %4771 = vmatpush1.bf16.msra.mxu0 0
        %4772 = vmatprep.subr.bf16.mxu0 0
        %4773 = vmatpush1.bf16.msra.mxu0 0
        %4774 = vmatprep.subr.bf16.mxu0 0
        %4775 = vmatpush1.bf16.msra.mxu0 0
        %4776 = vmatprep.mubr.bf16.mxu0 0
        %4777 = vmatmul.mubr.bf16.gmra.mrb[0].mxu0 %v4739
        %v4778 = vpop.f32.mrb[0].mxu0
        %v4779 = vadd.f32 0.0, %v4778
        %v4780 = vpop.f32.mrb[0].mxu0
        %v4781 = vpop.f32.mrb[0].mxu0
        %v4782 = vpop.f32.mrb[0].mxu0
        %4783 = vdwg.mxu0
        %v4785 = vsel %vm2265, %v4731, 0
        %v4788 = vsel %vm2321, %v4735, 0
        %4790 = vmatprep.subr.bf16.mxu0 0
        %4791 = vmatpush1.bf16.msra.mxu0 %v4788
        %4792 = vmatprep.subr.bf16.mxu0 0
        %4793 = vmatpush1.bf16.msra.mxu0 0
        %4794 = vmatprep.subr.bf16.mxu0 0
        %4795 = vmatpush1.bf16.msra.mxu0 0
        %4796 = vmatprep.subr.bf16.mxu0 0
        %4797 = vmatpush1.bf16.msra.mxu0 0
        %4798 = vmatprep.subr.bf16.mxu0 0
        %4799 = vmatpush1.bf16.msra.mxu0 0
        %4800 = vmatprep.subr.bf16.mxu0 0
        %4801 = vmatpush1.bf16.msra.mxu0 0
        %4802 = vmatprep.subr.bf16.mxu0 0
        %4803 = vmatpush1.bf16.msra.mxu0 0
        %4804 = vmatprep.subr.bf16.mxu0 0
        %4805 = vmatpush1.bf16.msra.mxu0 0
        %4806 = vmatprep.subr.bf16.mxu0 0
        %4807 = vmatpush1.bf16.msra.mxu0 0
        %4808 = vmatprep.subr.bf16.mxu0 0
        %4809 = vmatpush1.bf16.msra.mxu0 0
        %4810 = vmatprep.subr.bf16.mxu0 0
        %4811 = vmatpush1.bf16.msra.mxu0 0
        %4812 = vmatprep.subr.bf16.mxu0 0
        %4813 = vmatpush1.bf16.msra.mxu0 0
        %4814 = vmatprep.subr.bf16.mxu0 0
        %4815 = vmatpush1.bf16.msra.mxu0 0
        %4816 = vmatprep.subr.bf16.mxu0 0
        %4817 = vmatpush1.bf16.msra.mxu0 0
        %4818 = vmatprep.subr.bf16.mxu0 0
        %4819 = vmatpush1.bf16.msra.mxu0 0
        %4820 = vmatprep.subr.bf16.mxu0 0
        %4821 = vmatpush1.bf16.msra.mxu0 0
        %4822 = vmatprep.mubr.bf16.mxu0 0
        %4823 = vmatmul.mubr.bf16.gmra.mrb[0].mxu0 %v4785
        %v4824 = vpop.f32.mrb[0].mxu0
        %v4825 = vadd.f32 0.0, %v4824
        %v4826 = vpop.f32.mrb[0].mxu0
        %v4827 = vpop.f32.mrb[0].mxu0
        %v4828 = vpop.f32.mrb[0].mxu0
        %4829 = vdwg.mxu0
        %v4831 = vsel %vm2265, %v4732, 0
        %v4834 = vsel %vm2321, %v4736, 0
        %4836 = vmatprep.subr.bf16.mxu0 0
        %4837 = vmatpush1.bf16.msra.mxu0 %v4834
        %4838 = vmatprep.subr.bf16.mxu0 0
        %4839 = vmatpush1.bf16.msra.mxu0 0
        %4840 = vmatprep.subr.bf16.mxu0 0
        %4841 = vmatpush1.bf16.msra.mxu0 0
        %4842 = vmatprep.subr.bf16.mxu0 0
        %4843 = vmatpush1.bf16.msra.mxu0 0
        %4844 = vmatprep.subr.bf16.mxu0 0
        %4845 = vmatpush1.bf16.msra.mxu0 0
        %4846 = vmatprep.subr.bf16.mxu0 0
        %4847 = vmatpush1.bf16.msra.mxu0 0
        %4848 = vmatprep.subr.bf16.mxu0 0
        %4849 = vmatpush1.bf16.msra.mxu0 0
        %4850 = vmatprep.subr.bf16.mxu0 0
        %4851 = vmatpush1.bf16.msra.mxu0 0
        %4852 = vmatprep.subr.bf16.mxu0 0
        %4853 = vmatpush1.bf16.msra.mxu0 0
        %4854 = vmatprep.subr.bf16.mxu0 0
        %4855 = vmatpush1.bf16.msra.mxu0 0
        %4856 = vmatprep.subr.bf16.mxu0 0
        %4857 = vmatpush1.bf16.msra.mxu0 0
        %4858 = vmatprep.subr.bf16.mxu0 0
        %4859 = vmatpush1.bf16.msra.mxu0 0
        %4860 = vmatprep.subr.bf16.mxu0 0
        %4861 = vmatpush1.bf16.msra.mxu0 0
        %4862 = vmatprep.subr.bf16.mxu0 0
        %4863 = vmatpush1.bf16.msra.mxu0 0
        %4864 = vmatprep.subr.bf16.mxu0 0
        %4865 = vmatpush1.bf16.msra.mxu0 0
        %4866 = vmatprep.subr.bf16.mxu0 0
        %4867 = vmatpush1.bf16.msra.mxu0 0
        %4868 = vmatprep.mubr.bf16.mxu0 0
        %4869 = vmatmul.mubr.bf16.gmra.mrb[0].mxu0 %v4831
        %v4870 = vpop.f32.mrb[0].mxu0
        %v4871 = vadd.f32 0.0, %v4870
        %v4872 = vpop.f32.mrb[0].mxu0
        %v4873 = vpop.f32.mrb[0].mxu0
        %v4874 = vpop.f32.mrb[0].mxu0
        %4875 = vdwg.mxu0
        %v4877 = vsel %vm2265, %v4733, 0
        %v4880 = vsel %vm2321, %v4737, 0
        %4882 = vmatprep.subr.bf16.mxu0 0
        %4883 = vmatpush1.bf16.msra.mxu0 %v4880
        %4884 = vmatprep.subr.bf16.mxu0 0
        %4885 = vmatpush1.bf16.msra.mxu0 0
        %4886 = vmatprep.subr.bf16.mxu0 0
        %4887 = vmatpush1.bf16.msra.mxu0 0
        %4888 = vmatprep.subr.bf16.mxu0 0
        %4889 = vmatpush1.bf16.msra.mxu0 0
        %4890 = vmatprep.subr.bf16.mxu0 0
        %4891 = vmatpush1.bf16.msra.mxu0 0
        %4892 = vmatprep.subr.bf16.mxu0 0
        %4893 = vmatpush1.bf16.msra.mxu0 0
        %4894 = vmatprep.subr.bf16.mxu0 0
        %4895 = vmatpush1.bf16.msra.mxu0 0
        %4896 = vmatprep.subr.bf16.mxu0 0
        %4897 = vmatpush1.bf16.msra.mxu0 0
        %4898 = vmatprep.subr.bf16.mxu0 0
        %4899 = vmatpush1.bf16.msra.mxu0 0
        %4900 = vmatprep.subr.bf16.mxu0 0
        %4901 = vmatpush1.bf16.msra.mxu0 0
        %4902 = vmatprep.subr.bf16.mxu0 0
        %4903 = vmatpush1.bf16.msra.mxu0 0
        %4904 = vmatprep.subr.bf16.mxu0 0
        %4905 = vmatpush1.bf16.msra.mxu0 0
        %4906 = vmatprep.subr.bf16.mxu0 0
        %4907 = vmatpush1.bf16.msra.mxu0 0
        %4908 = vmatprep.subr.bf16.mxu0 0
        %4909 = vmatpush1.bf16.msra.mxu0 0
        %4910 = vmatprep.subr.bf16.mxu0 0
        %4911 = vmatpush1.bf16.msra.mxu0 0
        %4912 = vmatprep.subr.bf16.mxu0 0
        %4913 = vmatpush1.bf16.msra.mxu0 0
        %4914 = vmatprep.mubr.bf16.mxu0 0
        %4915 = vmatmul.mubr.bf16.gmra.mrb[0].mxu0 %v4877
        %v4916 = vpop.f32.mrb[0].mxu0
        %v4917 = vadd.f32 0.0, %v4916
        %v4918 = vpop.f32.mrb[0].mxu0
        %v4919 = vpop.f32.mrb[0].mxu0
        %v4920 = vpop.f32.mrb[0].mxu0
        %4921 = vdwg.mxu0
        %v4922 = vpack.c.bf16 %v4779, %v4779
        %v4923 = vpack.c.bf16 %v4825, %v4825
        %v4924 = vpack.c.bf16 %v4871, %v4871
        %v4925 = vpack.c.bf16 %v4917, %v4917
        %s4926 = scalar_lea.vmem %s13, 64
        %v4927 = vld [vmem:[%s4926] sm:$0xf]
        %v4928 = vld [vmem:[%s4926 + $0x4] sm:$0xf]
        %v4929 = vld [vmem:[%s4926 + $0x8] sm:$0xf]
        %v4930 = vld [vmem:[%s4926 + $0xc] sm:$0xf]
        %v4931 = vld [vmem:[%s4926 + $0x10] sm:$0xf]
        %v4932 = vld [vmem:[%s4926 + $0x14] sm:$0xf]
        %v4933 = vld [vmem:[%s4926 + $0x18] sm:$0xf]
        %v4934 = vld [vmem:[%s4926 + $0x1c] sm:$0xf]
        %v4935 = vld [vmem:[%s4926 + $0x20] sm:$0xf]
        %v4936 = vld [vmem:[%s4926 + $0x24] sm:$0xf]
        %v4937 = vld [vmem:[%s4926 + $0x28] sm:$0xf]
        %v4938 = vld [vmem:[%s4926 + $0x2c] sm:$0xf]
        %v4939 = vld [vmem:[%s4926 + $0x30] sm:$0xf]
        %v4940 = vld [vmem:[%s4926 + $0x34] sm:$0xf]
        %v4941 = vld [vmem:[%s4926 + $0x38] sm:$0xf]
        %v4942 = vld [vmem:[%s4926 + $0x3c] sm:$0xf]
        %v4947 = vunpack.c.l.b16 %v4927
        %v4948 = vunpack.c.l.b16 %v4928
        %v4949 = vunpack.c.l.b16 %v4929
        %v4950 = vunpack.c.l.b16 %v4930
        %v4951 = vpack.c.b16 %v4948, %v4947
        %v4952 = vpack.c.b16 %v4950, %v4949
        %v4956 = vsel %vm2080, %v4922, 0
        %4958 = vmatprep.subr.bf16.mxu0 0
        %4959 = vmatpush1.bf16.msra.mxu0 %v4951
        %4960 = vmatprep.subr.bf16.mxu0 0
        %4961 = vmatpush1.bf16.msra.mxu0 %v4952
        %4962 = vmatprep.subr.bf16.mxu0 0
        %4963 = vmatpush1.bf16.msra.mxu0 0
        %4964 = vmatprep.subr.bf16.mxu0 0
        %4965 = vmatpush1.bf16.msra.mxu0 0
        %4966 = vmatprep.subr.bf16.mxu0 0
        %4967 = vmatpush1.bf16.msra.mxu0 0
        %4968 = vmatprep.subr.bf16.mxu0 0
        %4969 = vmatpush1.bf16.msra.mxu0 0
        %4970 = vmatprep.subr.bf16.mxu0 0
        %4971 = vmatpush1.bf16.msra.mxu0 0
        %4972 = vmatprep.subr.bf16.mxu0 0
        %4973 = vmatpush1.bf16.msra.mxu0 0
        %4974 = vmatprep.subr.bf16.mxu0 0
        %4975 = vmatpush1.bf16.msra.mxu0 0
        %4976 = vmatprep.subr.bf16.mxu0 0
        %4977 = vmatpush1.bf16.msra.mxu0 0
        %4978 = vmatprep.subr.bf16.mxu0 0
        %4979 = vmatpush1.bf16.msra.mxu0 0
        %4980 = vmatprep.subr.bf16.mxu0 0
        %4981 = vmatpush1.bf16.msra.mxu0 0
        %4982 = vmatprep.subr.bf16.mxu0 0
        %4983 = vmatpush1.bf16.msra.mxu0 0
        %4984 = vmatprep.subr.bf16.mxu0 0
        %4985 = vmatpush1.bf16.msra.mxu0 0
        %4986 = vmatprep.subr.bf16.mxu0 0
        %4987 = vmatpush1.bf16.msra.mxu0 0
        %4988 = vmatprep.subr.bf16.mxu0 0
        %4989 = vmatpush1.bf16.msra.mxu0 0
        %4990 = vmatprep.mubr.bf16.mxu0 0
        %4991 = vmatmul.mubr.bf16.gmra.mrb[0].mxu0 %v4956
        %v4992 = vpop.f32.mrb[0].mxu0
        %v4993 = vadd.f32 0.0, %v4992
        %v4994 = vpop.f32.mrb[0].mxu0
        %v4995 = vpop.f32.mrb[0].mxu0
        %v4996 = vpop.f32.mrb[0].mxu0
        %4997 = vdwg.mxu0
        %v5002 = vunpack.c.l.b16 %v4931
        %v5003 = vunpack.c.l.b16 %v4932
        %v5004 = vunpack.c.l.b16 %v4933
        %v5005 = vunpack.c.l.b16 %v4934
        %v5006 = vpack.c.b16 %v5003, %v5002
        %v5007 = vpack.c.b16 %v5005, %v5004
        %v5011 = vsel %vm2080, %v4923, 0
        %5013 = vmatprep.subr.bf16.mxu0 0
        %5014 = vmatpush1.bf16.msra.mxu0 %v5006
        %5015 = vmatprep.subr.bf16.mxu0 0
        %5016 = vmatpush1.bf16.msra.mxu0 %v5007
        %5017 = vmatprep.subr.bf16.mxu0 0
        %5018 = vmatpush1.bf16.msra.mxu0 0
        %5019 = vmatprep.subr.bf16.mxu0 0
        %5020 = vmatpush1.bf16.msra.mxu0 0
        %5021 = vmatprep.subr.bf16.mxu0 0
        %5022 = vmatpush1.bf16.msra.mxu0 0
        %5023 = vmatprep.subr.bf16.mxu0 0
        %5024 = vmatpush1.bf16.msra.mxu0 0
        %5025 = vmatprep.subr.bf16.mxu0 0
        %5026 = vmatpush1.bf16.msra.mxu0 0
        %5027 = vmatprep.subr.bf16.mxu0 0
        %5028 = vmatpush1.bf16.msra.mxu0 0
        %5029 = vmatprep.subr.bf16.mxu0 0
        %5030 = vmatpush1.bf16.msra.mxu0 0
        %5031 = vmatprep.subr.bf16.mxu0 0
        %5032 = vmatpush1.bf16.msra.mxu0 0
        %5033 = vmatprep.subr.bf16.mxu0 0
        %5034 = vmatpush1.bf16.msra.mxu0 0
        %5035 = vmatprep.subr.bf16.mxu0 0
        %5036 = vmatpush1.bf16.msra.mxu0 0
        %5037 = vmatprep.subr.bf16.mxu0 0
        %5038 = vmatpush1.bf16.msra.mxu0 0
        %5039 = vmatprep.subr.bf16.mxu0 0
        %5040 = vmatpush1.bf16.msra.mxu0 0
        %5041 = vmatprep.subr.bf16.mxu0 0
        %5042 = vmatpush1.bf16.msra.mxu0 0
        %5043 = vmatprep.subr.bf16.mxu0 0
        %5044 = vmatpush1.bf16.msra.mxu0 0
        %5045 = vmatprep.mubr.bf16.mxu0 0
        %5046 = vmatmul.mubr.bf16.gmra.mrb[0].mxu0 %v5011
        %v5047 = vpop.f32.mrb[0].mxu0
        %v5048 = vadd.f32 0.0, %v5047
        %v5049 = vpop.f32.mrb[0].mxu0
        %v5050 = vpop.f32.mrb[0].mxu0
        %v5051 = vpop.f32.mrb[0].mxu0
        %5052 = vdwg.mxu0
        %v5057 = vunpack.c.l.b16 %v4935
        %v5058 = vunpack.c.l.b16 %v4936
        %v5059 = vunpack.c.l.b16 %v4937
        %v5060 = vunpack.c.l.b16 %v4938
        %v5061 = vpack.c.b16 %v5058, %v5057
        %v5062 = vpack.c.b16 %v5060, %v5059
        %v5066 = vsel %vm2080, %v4924, 0
        %5068 = vmatprep.subr.bf16.mxu0 0
        %5069 = vmatpush1.bf16.msra.mxu0 %v5061
        %5070 = vmatprep.subr.bf16.mxu0 0
        %5071 = vmatpush1.bf16.msra.mxu0 %v5062
        %5072 = vmatprep.subr.bf16.mxu0 0
        %5073 = vmatpush1.bf16.msra.mxu0 0
        %5074 = vmatprep.subr.bf16.mxu0 0
        %5075 = vmatpush1.bf16.msra.mxu0 0
        %5076 = vmatprep.subr.bf16.mxu0 0
        %5077 = vmatpush1.bf16.msra.mxu0 0
        %5078 = vmatprep.subr.bf16.mxu0 0
        %5079 = vmatpush1.bf16.msra.mxu0 0
        %5080 = vmatprep.subr.bf16.mxu0 0
        %5081 = vmatpush1.bf16.msra.mxu0 0
        %5082 = vmatprep.subr.bf16.mxu0 0
        %5083 = vmatpush1.bf16.msra.mxu0 0
        %5084 = vmatprep.subr.bf16.mxu0 0
        %5085 = vmatpush1.bf16.msra.mxu0 0
        %5086 = vmatprep.subr.bf16.mxu0 0
        %5087 = vmatpush1.bf16.msra.mxu0 0
        %5088 = vmatprep.subr.bf16.mxu0 0
        %5089 = vmatpush1.bf16.msra.mxu0 0
        %5090 = vmatprep.subr.bf16.mxu0 0
        %5091 = vmatpush1.bf16.msra.mxu0 0
        %5092 = vmatprep.subr.bf16.mxu0 0
        %5093 = vmatpush1.bf16.msra.mxu0 0
        %5094 = vmatprep.subr.bf16.mxu0 0
        %5095 = vmatpush1.bf16.msra.mxu0 0
        %5096 = vmatprep.subr.bf16.mxu0 0
        %5097 = vmatpush1.bf16.msra.mxu0 0
        %5098 = vmatprep.subr.bf16.mxu0 0
        %5099 = vmatpush1.bf16.msra.mxu0 0
        %5100 = vmatprep.mubr.bf16.mxu0 0
        %5101 = vmatmul.mubr.bf16.gmra.mrb[0].mxu0 %v5066
        %v5102 = vpop.f32.mrb[0].mxu0
        %v5103 = vadd.f32 0.0, %v5102
        %v5104 = vpop.f32.mrb[0].mxu0
        %v5105 = vpop.f32.mrb[0].mxu0
        %v5106 = vpop.f32.mrb[0].mxu0
        %5107 = vdwg.mxu0
        %v5112 = vunpack.c.l.b16 %v4939
        %v5113 = vunpack.c.l.b16 %v4940
        %v5114 = vunpack.c.l.b16 %v4941
        %v5115 = vunpack.c.l.b16 %v4942
        %v5116 = vpack.c.b16 %v5113, %v5112
        %v5117 = vpack.c.b16 %v5115, %v5114
        %v5121 = vsel %vm2080, %v4925, 0
        %5123 = vmatprep.subr.bf16.mxu0 0
        %5124 = vmatpush1.bf16.msra.mxu0 %v5116
        %5125 = vmatprep.subr.bf16.mxu0 0
        %5126 = vmatpush1.bf16.msra.mxu0 %v5117
        %5127 = vmatprep.subr.bf16.mxu0 0
        %5128 = vmatpush1.bf16.msra.mxu0 0
        %5129 = vmatprep.subr.bf16.mxu0 0
        %5130 = vmatpush1.bf16.msra.mxu0 0
        %5131 = vmatprep.subr.bf16.mxu0 0
        %5132 = vmatpush1.bf16.msra.mxu0 0
        %5133 = vmatprep.subr.bf16.mxu0 0
        %5134 = vmatpush1.bf16.msra.mxu0 0
        %5135 = vmatprep.subr.bf16.mxu0 0
        %5136 = vmatpush1.bf16.msra.mxu0 0
        %5137 = vmatprep.subr.bf16.mxu0 0
        %5138 = vmatpush1.bf16.msra.mxu0 0
        %5139 = vmatprep.subr.bf16.mxu0 0
        %5140 = vmatpush1.bf16.msra.mxu0 0
        %5141 = vmatprep.subr.bf16.mxu0 0
        %5142 = vmatpush1.bf16.msra.mxu0 0
        %5143 = vmatprep.subr.bf16.mxu0 0
        %5144 = vmatpush1.bf16.msra.mxu0 0
        %5145 = vmatprep.subr.bf16.mxu0 0
        %5146 = vmatpush1.bf16.msra.mxu0 0
        %5147 = vmatprep.subr.bf16.mxu0 0
        %5148 = vmatpush1.bf16.msra.mxu0 0
        %5149 = vmatprep.subr.bf16.mxu0 0
        %5150 = vmatpush1.bf16.msra.mxu0 0
        %5151 = vmatprep.subr.bf16.mxu0 0
        %5152 = vmatpush1.bf16.msra.mxu0 0
        %5153 = vmatprep.subr.bf16.mxu0 0
        %5154 = vmatpush1.bf16.msra.mxu0 0
        %5155 = vmatprep.mubr.bf16.mxu0 0
        %5156 = vmatmul.mubr.bf16.gmra.mrb[0].mxu0 %v5121
        %v5157 = vpop.f32.mrb[0].mxu0
        %v5158 = vadd.f32 0.0, %v5157
        %v5159 = vpop.f32.mrb[0].mxu0
        %v5160 = vpop.f32.mrb[0].mxu0
        %v5161 = vpop.f32.mrb[0].mxu0
        %5162 = vdwg.mxu0
        %v5163 = vadd.f32 %v4993, %v5048
        %v5164 = vadd.f32 %v5163, %v5103
        %v5165 = vadd.f32 %v5164, %v5158
        %s5166 = scalar_lea.vmem %s14, 1
        %v5167 = vld [vmem:[%s5166] sm:$0x1]
        %v5169 = vlaneseq
        %v5170 = vshrl.u32 %v5169, 7
        %v5171 = vsub.s32 0, %v5170
        %v5172 = vrot.slane %v5167, %v5171
        %v5174 = vadd.f32 %v5165, %v5172
        %v5175 = vadd.f32 %v3125, %v5174
        %s5176 = scalar_lea.vmem %s15, 1
        %v5177 = vld [vmem:[%s5176] sm:$0x1]
        %s5178 = scalar_lea.vmem %s16, 1
        %v5179 = vld [vmem:[%s5178] sm:$0x1]
        %5180 = vadd.xlane.f32.xlu0 %v5175
        %v5181 = vpop.xlane.xlu0 %5180
        %v5182 = vmul.f32 %v5181, %v672
        %v5183 = vsub.f32 %v5175, %v5182
        %v5184 = vmul.f32 %v5183, %v5183
        %5185 = vadd.xlane.f32.xlu0 %v5184
        %v5186 = vpop.xlane.xlu0 %5185
        %v5187 = vmul.f32 %v5186, %v672
        %v5188 = vadd.f32 %v5187, 1e-05
        %v5189 = vrsqrt.pop %v5188
        %v5190 = vmul.f32 %v5183, %v5189
        %v5192 = vlaneseq
        %v5193 = vshrl.u32 %v5192, 7
        %v5194 = vsub.s32 0, %v5193
        %v5195 = vrot.slane %v5177, %v5194
        %v5197 = vmul.f32 %v5190, %v5195
        %v5199 = vlaneseq
        %v5200 = vshrl.u32 %v5199, 7
        %v5201 = vsub.s32 0, %v5200
        %v5202 = vrot.slane %v5179, %v5201
        %v5204 = vadd.f32 %v5197, %v5202
        %v5205 = vpack.c.bf16 %v5204, %v5204
        %s5206 = scalar_lea.vmem %s17, 128
        %v5207 = vld [vmem:[%s5206] sm:$0xff]
        %v5208 = vld [vmem:[%s5206 + $0x8] sm:$0xff]
        %v5209 = vld [vmem:[%s5206 + $0x10] sm:$0xff]
        %v5210 = vld [vmem:[%s5206 + $0x18] sm:$0xff]
        %v5211 = vld [vmem:[%s5206 + $0x20] sm:$0xff]
        %v5212 = vld [vmem:[%s5206 + $0x28] sm:$0xff]
        %v5213 = vld [vmem:[%s5206 + $0x30] sm:$0xff]
        %v5214 = vld [vmem:[%s5206 + $0x38] sm:$0xff]
        %v5215 = vld [vmem:[%s5206 + $0x40] sm:$0xff]
        %v5216 = vld [vmem:[%s5206 + $0x48] sm:$0xff]
        %v5217 = vld [vmem:[%s5206 + $0x50] sm:$0xff]
        %v5218 = vld [vmem:[%s5206 + $0x58] sm:$0xff]
        %v5219 = vld [vmem:[%s5206 + $0x60] sm:$0xff]
        %v5220 = vld [vmem:[%s5206 + $0x68] sm:$0xff]
        %v5221 = vld [vmem:[%s5206 + $0x70] sm:$0xff]
        %v5222 = vld [vmem:[%s5206 + $0x78] sm:$0xff]
        %s5223 = scalar_lea.vmem %s18, 2
        %v5224 = vld [vmem:[%s5223] sm:$0x3]
        %v5226 = vlaneseq
        %v5227 = vshrl.u32 %v5226, 7
        %v5228 = vsub.s32 0, %v5227
        %v5229 = vrot.slane %v5224, %v5228
        %v5230 = vlaneseq
        %v5231 = vshrl.u32 %v5230, 7
        %v5232 = vsub.s32 1, %v5231
        %v5233 = vrot.slane %v5224, %v5232
        %v5252 = vunpack.c.l.b16 %v5207
        %v5253 = vunpack.c.h.b16 %v5207
        %v5254 = vunpack.c.l.b16 %v5208
        %v5255 = vunpack.c.h.b16 %v5208
        %v5256 = vunpack.c.l.b16 %v5209
        %v5257 = vunpack.c.h.b16 %v5209
        %v5258 = vunpack.c.l.b16 %v5210
        %v5259 = vunpack.c.h.b16 %v5210
        %v5260 = vunpack.c.l.b16 %v5211
        %v5261 = vunpack.c.h.b16 %v5211
        %v5262 = vunpack.c.l.b16 %v5212
        %v5263 = vunpack.c.h.b16 %v5212
        %v5264 = vunpack.c.l.b16 %v5213
        %v5265 = vunpack.c.h.b16 %v5213
        %v5266 = vunpack.c.l.b16 %v5214
        %v5267 = vunpack.c.h.b16 %v5214
        %v5268 = vunpack.c.l.b16 %v5215
        %v5269 = vunpack.c.h.b16 %v5215
        %v5270 = vunpack.c.l.b16 %v5216
        %v5271 = vunpack.c.h.b16 %v5216
        %v5272 = vunpack.c.l.b16 %v5217
        %v5273 = vunpack.c.h.b16 %v5217
        %v5274 = vunpack.c.l.b16 %v5218
        %v5275 = vunpack.c.h.b16 %v5218
        %v5276 = vunpack.c.l.b16 %v5219
        %v5277 = vunpack.c.h.b16 %v5219
        %v5278 = vunpack.c.l.b16 %v5220
        %v5279 = vunpack.c.h.b16 %v5220
        %v5280 = vunpack.c.l.b16 %v5221
        %v5281 = vunpack.c.h.b16 %v5221
        %v5282 = vunpack.c.l.b16 %v5222
        %v5283 = vunpack.c.h.b16 %v5222
        %v5284 = vpack.c.b16 %v5254, %v5252
        %v5285 = vpack.c.b16 %v5255, %v5253
        %v5286 = vpack.c.b16 %v5258, %v5256
        %v5287 = vpack.c.b16 %v5259, %v5257
        %v5288 = vpack.c.b16 %v5262, %v5260
        %v5289 = vpack.c.b16 %v5263, %v5261
        %v5290 = vpack.c.b16 %v5266, %v5264
        %v5291 = vpack.c.b16 %v5267, %v5265
        %v5292 = vpack.c.b16 %v5270, %v5268
        %v5293 = vpack.c.b16 %v5271, %v5269
        %v5294 = vpack.c.b16 %v5274, %v5272
        %v5295 = vpack.c.b16 %v5275, %v5273
        %v5296 = vpack.c.b16 %v5278, %v5276
        %v5297 = vpack.c.b16 %v5279, %v5277
        %v5298 = vpack.c.b16 %v5282, %v5280
        %v5299 = vpack.c.b16 %v5283, %v5281
        %5316 = vmatprep.subr.bf16.mxu0 %v5285
        %5317 = vmatpush1.bf16.msra.mxu0 %v5284
        %5318 = vmatprep.subr.bf16.mxu0 %v5287
        %5319 = vmatpush1.bf16.msra.mxu0 %v5286
        %5320 = vmatprep.subr.bf16.mxu0 %v5289
        %5321 = vmatpush1.bf16.msra.mxu0 %v5288
        %5322 = vmatprep.subr.bf16.mxu0 %v5291
        %5323 = vmatpush1.bf16.msra.mxu0 %v5290
        %5324 = vmatprep.subr.bf16.mxu0 %v5293
        %5325 = vmatpush1.bf16.msra.mxu0 %v5292
        %5326 = vmatprep.subr.bf16.mxu0 %v5295
        %5327 = vmatpush1.bf16.msra.mxu0 %v5294
        %5328 = vmatprep.subr.bf16.mxu0 %v5297
        %5329 = vmatpush1.bf16.msra.mxu0 %v5296
        %5330 = vmatprep.subr.bf16.mxu0 %v5299
        %5331 = vmatpush1.bf16.msra.mxu0 %v5298
        %5332 = vmatprep.subr.bf16.mxu0 0
        %5333 = vmatpush1.bf16.msra.mxu0 0
        %5334 = vmatprep.subr.bf16.mxu0 0
        %5335 = vmatpush1.bf16.msra.mxu0 0
        %5336 = vmatprep.subr.bf16.mxu0 0
        %5337 = vmatpush1.bf16.msra.mxu0 0
        %5338 = vmatprep.subr.bf16.mxu0 0
        %5339 = vmatpush1.bf16.msra.mxu0 0
        %5340 = vmatprep.subr.bf16.mxu0 0
        %5341 = vmatpush1.bf16.msra.mxu0 0
        %5342 = vmatprep.subr.bf16.mxu0 0
        %5343 = vmatpush1.bf16.msra.mxu0 0
        %5344 = vmatprep.subr.bf16.mxu0 0
        %5345 = vmatpush1.bf16.msra.mxu0 0
        %5346 = vmatprep.subr.bf16.mxu0 0
        %5347 = vmatpush1.bf16.msra.mxu0 0
        %5348 = vmatprep.mubr.bf16.mxu0 0
        %5349 = vmatmul.mubr.bf16.gmra.mrb[0].mxu0 %v5205
        %v5350 = vpop.f32.mrb[0].mxu0
        %v5351 = vadd.f32 %v5229, %v5350
        %v5352 = vpop.f32.mrb[0].mxu0
        %v5353 = vadd.f32 %v5233, %v5352
        %v5354 = vpop.f32.mrb[0].mxu0
        %v5355 = vpop.f32.mrb[0].mxu0
        %5356 = vdwg.mxu0
        %v5357 = vmul.f32 %v5351, 1.702
        %v5358 = vmul.f32 %v5353, 1.702
        %v5359 = vxor.u32 %v5357, 2147483648
        %v5360 = vxor.u32 %v5358, 2147483648
        %v5361 = vmul.f32 %v5359, 1.442695
        %v5362 = vpow.pop %v5361
        %v5363 = vmul.f32 %v5360, 1.442695
        %v5364 = vpow.pop %v5363
        %v5365 = vadd.f32 %v5362, 1.0
        %v5366 = vadd.f32 %v5364, 1.0
        %v5367 = vrcp.pop %v5365
        %v5368 = vmul.f32 1.0, %v5367
        %v5369 = vrcp.pop %v5366
        %v5370 = vmul.f32 1.0, %v5369
        %v5371 = vmul.f32 %v5351, %v5368
        %v5372 = vmul.f32 %v5353, %v5370
        %v5373 = vpack.c.bf16 %v5371, %v5371
        %v5374 = vpack.c.bf16 %v5372, %v5372
        %s5375 = scalar_lea.vmem %s19, 128
        %v5376 = vld [vmem:[%s5375] sm:$0xf]
        %v5377 = vld [vmem:[%s5375 + $0x4] sm:$0xf]
        %v5378 = vld [vmem:[%s5375 + $0x8] sm:$0xf]
        %v5379 = vld [vmem:[%s5375 + $0xc] sm:$0xf]
        %v5380 = vld [vmem:[%s5375 + $0x10] sm:$0xf]
        %v5381 = vld [vmem:[%s5375 + $0x14] sm:$0xf]
        %v5382 = vld [vmem:[%s5375 + $0x18] sm:$0xf]
        %v5383 = vld [vmem:[%s5375 + $0x1c] sm:$0xf]
        %v5384 = vld [vmem:[%s5375 + $0x20] sm:$0xf]
        %v5385 = vld [vmem:[%s5375 + $0x24] sm:$0xf]
        %v5386 = vld [vmem:[%s5375 + $0x28] sm:$0xf]
        %v5387 = vld [vmem:[%s5375 + $0x2c] sm:$0xf]
        %v5388 = vld [vmem:[%s5375 + $0x30] sm:$0xf]
        %v5389 = vld [vmem:[%s5375 + $0x34] sm:$0xf]
        %v5390 = vld [vmem:[%s5375 + $0x38] sm:$0xf]
        %v5391 = vld [vmem:[%s5375 + $0x3c] sm:$0xf]
        %v5392 = vld [vmem:[%s5375 + $0x40] sm:$0xf]
        %v5393 = vld [vmem:[%s5375 + $0x44] sm:$0xf]
        %v5394 = vld [vmem:[%s5375 + $0x48] sm:$0xf]
        %v5395 = vld [vmem:[%s5375 + $0x4c] sm:$0xf]
        %v5396 = vld [vmem:[%s5375 + $0x50] sm:$0xf]
        %v5397 = vld [vmem:[%s5375 + $0x54] sm:$0xf]
        %v5398 = vld [vmem:[%s5375 + $0x58] sm:$0xf]
        %v5399 = vld [vmem:[%s5375 + $0x5c] sm:$0xf]
        %v5400 = vld [vmem:[%s5375 + $0x60] sm:$0xf]
        %v5401 = vld [vmem:[%s5375 + $0x64] sm:$0xf]
        %v5402 = vld [vmem:[%s5375 + $0x68] sm:$0xf]
        %v5403 = vld [vmem:[%s5375 + $0x6c] sm:$0xf]
        %v5404 = vld [vmem:[%s5375 + $0x70] sm:$0xf]
        %v5405 = vld [vmem:[%s5375 + $0x74] sm:$0xf]
        %v5406 = vld [vmem:[%s5375 + $0x78] sm:$0xf]
        %v5407 = vld [vmem:[%s5375 + $0x7c] sm:$0xf]
        %s5408 = scalar_lea.vmem %s20, 1
        %v5409 = vld [vmem:[%s5408] sm:$0x1]
        %v5411 = vlaneseq
        %v5412 = vshrl.u32 %v5411, 7
        %v5413 = vsub.s32 0, %v5412
        %v5414 = vrot.slane %v5409, %v5413
        %v5448 = vunpack.c.l.b16 %v5376
        %v5449 = vunpack.c.l.b16 %v5377
        %v5450 = vunpack.c.l.b16 %v5378
        %v5451 = vunpack.c.l.b16 %v5379
        %v5452 = vunpack.c.l.b16 %v5380
        %v5453 = vunpack.c.l.b16 %v5381
        %v5454 = vunpack.c.l.b16 %v5382
        %v5455 = vunpack.c.l.b16 %v5383
        %v5456 = vunpack.c.l.b16 %v5384
        %v5457 = vunpack.c.l.b16 %v5385
        %v5458 = vunpack.c.l.b16 %v5386
        %v5459 = vunpack.c.l.b16 %v5387
        %v5460 = vunpack.c.l.b16 %v5388
        %v5461 = vunpack.c.l.b16 %v5389
        %v5462 = vunpack.c.l.b16 %v5390
        %v5463 = vunpack.c.l.b16 %v5391
        %v5464 = vunpack.c.l.b16 %v5392
        %v5465 = vunpack.c.l.b16 %v5393
        %v5466 = vunpack.c.l.b16 %v5394
        %v5467 = vunpack.c.l.b16 %v5395
        %v5468 = vunpack.c.l.b16 %v5396
        %v5469 = vunpack.c.l.b16 %v5397
        %v5470 = vunpack.c.l.b16 %v5398
        %v5471 = vunpack.c.l.b16 %v5399
        %v5472 = vunpack.c.l.b16 %v5400
        %v5473 = vunpack.c.l.b16 %v5401
        %v5474 = vunpack.c.l.b16 %v5402
        %v5475 = vunpack.c.l.b16 %v5403
        %v5476 = vunpack.c.l.b16 %v5404
        %v5477 = vunpack.c.l.b16 %v5405
        %v5478 = vunpack.c.l.b16 %v5406
        %v5479 = vunpack.c.l.b16 %v5407
        %v5480 = vpack.c.b16 %v5449, %v5448
        %v5481 = vpack.c.b16 %v5451, %v5450
        %v5482 = vpack.c.b16 %v5453, %v5452
        %v5483 = vpack.c.b16 %v5455, %v5454
        %v5484 = vpack.c.b16 %v5457, %v5456
        %v5485 = vpack.c.b16 %v5459, %v5458
        %v5486 = vpack.c.b16 %v5461, %v5460
        %v5487 = vpack.c.b16 %v5463, %v5462
        %v5488 = vpack.c.b16 %v5465, %v5464
        %v5489 = vpack.c.b16 %v5467, %v5466
        %v5490 = vpack.c.b16 %v5469, %v5468
        %v5491 = vpack.c.b16 %v5471, %v5470
        %v5492 = vpack.c.b16 %v5473, %v5472
        %v5493 = vpack.c.b16 %v5475, %v5474
        %v5494 = vpack.c.b16 %v5477, %v5476
        %v5495 = vpack.c.b16 %v5479, %v5478
        %5512 = vmatprep.subr.bf16.mxu0 0
        %5513 = vmatpush1.bf16.msra.mxu0 %v5480
        %5514 = vmatprep.subr.bf16.mxu0 0
        %5515 = vmatpush1.bf16.msra.mxu0 %v5481
        %5516 = vmatprep.subr.bf16.mxu0 0
        %5517 = vmatpush1.bf16.msra.mxu0 %v5482
        %5518 = vmatprep.subr.bf16.mxu0 0
        %5519 = vmatpush1.bf16.msra.mxu0 %v5483
        %5520 = vmatprep.subr.bf16.mxu0 0
        %5521 = vmatpush1.bf16.msra.mxu0 %v5484
        %5522 = vmatprep.subr.bf16.mxu0 0
        %5523 = vmatpush1.bf16.msra.mxu0 %v5485
        %5524 = vmatprep.subr.bf16.mxu0 0
        %5525 = vmatpush1.bf16.msra.mxu0 %v5486
        %5526 = vmatprep.subr.bf16.mxu0 0
        %5527 = vmatpush1.bf16.msra.mxu0 %v5487
        %5528 = vmatprep.subr.bf16.mxu0 0
        %5529 = vmatpush1.bf16.msra.mxu0 %v5488
        %5530 = vmatprep.subr.bf16.mxu0 0
        %5531 = vmatpush1.bf16.msra.mxu0 %v5489
        %5532 = vmatprep.subr.bf16.mxu0 0
        %5533 = vmatpush1.bf16.msra.mxu0 %v5490
        %5534 = vmatprep.subr.bf16.mxu0 0
        %5535 = vmatpush1.bf16.msra.mxu0 %v5491
        %5536 = vmatprep.subr.bf16.mxu0 0
        %5537 = vmatpush1.bf16.msra.mxu0 %v5492
        %5538 = vmatprep.subr.bf16.mxu0 0
        %5539 = vmatpush1.bf16.msra.mxu0 %v5493
        %5540 = vmatprep.subr.bf16.mxu0 0
        %5541 = vmatpush1.bf16.msra.mxu0 %v5494
        %5542 = vmatprep.subr.bf16.mxu0 0
        %5543 = vmatpush1.bf16.msra.mxu0 %v5495
        %5544 = vmatprep.mubr.bf16.mxu0 %v5374
        %5545 = vmatmul.mubr.bf16.gmra.mrb[0].mxu0 %v5373
        %v5546 = vpop.f32.mrb[0].mxu0
        %v5547 = vadd.f32 %v5414, %v5546
        %v5548 = vpop.f32.mrb[0].mxu0
        %v5549 = vpop.f32.mrb[0].mxu0
        %v5550 = vpop.f32.mrb[0].mxu0
        %5551 = vdwg.mxu0
        %v5552 = vadd.f32 %v5175, %v5547
        %5553 = vst [vmem:[%s658] sm:$0xff] %v5552
        %5554 = vst [vmem:[%s658 + $0x8] sm:$0xff] %v695
        %s5555 = sand.u32 %s494, 1
        %s5556 = scalar_lea.sflag [#allocation3], %s5555
        %s5557 = sand.u32 %s494, 1
        %s5558 = smul.addr %s5557, 16
        %s5559 = scalar_lea.vmem [#allocation2], %s5558
        // Predicated region
        $region105: #{clip_embedder_forward.1} parent=103 // pred_check
          %p5560 = pneg %p504
        $region106: #{clip_embedder_forward.1} parent=103 // pred_check_branch
          %5562 = sbr.rel (%p5560) target = $region108
        $region107: #{clip_embedder_forward.1} parent=103 // pred_region
          %s5564 = ssub.s32 256, 256
          %5565 = vsyncadd %s5556, %s5564
          %s5566 = smul.addr %s35, 2
          %s5567 = smul.addr %s5566, 128
          %s5568 = scalar_lea.hbm %s21, %s5567
          %s5570 = sshll.u32 %s5559, 4
          %s5571 = int_to_ptr.vmem [resolvable:$true] %s5570
          %5573 = dma.vmem_to_hbm [thread:$0]  %s5571, 256, %s5568, %s5556
        $region108: #{clip_embedder_forward.1} parent=103 // pred_fallthru
          _
      $region104: #{clip_embedder_forward.1} parent=5 // pred_fallthru
        _
      %p5574 = scmp.le.s32.totalorder 2, %s30
      // Predicated region
      $region109: #{clip_embedder_forward.1} parent=5 // pred_check
        %p5575 = pneg %p5574
      $region110: #{clip_embedder_forward.1} parent=5 // pred_check_branch
        %5577 = sbr.rel (%p5575) target = $region112
      $region111: #{clip_embedder_forward.1} parent=5 // pred_region
        %s5578 = ssub.s32 %s30, 2
        // Predicated region
        $region113: #{clip_embedder_forward.1} parent=111 // pred_check
          %p5579 = pneg %p510
        $region114: #{clip_embedder_forward.1} parent=111 // pred_check_branch
          %5581 = sbr.rel (%p5579) target = $region116
        $region115: #{clip_embedder_forward.1} parent=111 // pred_region
          %s5582 = sand.u32 %s495, 1
          %s5583 = scalar_lea.sflag [#allocation3], %s5582
          %s5584 = sand.u32 %s495, 1
          %s5585 = smul.addr %s5584, 16
          %s5586 = scalar_lea.vmem [#allocation2], %s5585
          %5587 = dma.done %s5583, 256
        $region116: #{clip_embedder_forward.1} parent=111 // pred_fallthru
          _
      $region112: #{clip_embedder_forward.1} parent=5 // pred_fallthru
        _
    $region6: #{clip_embedder_forward.1} parent=1 // loop_footer
      %s34 = sadd.s32 1, %s30
    $region7: #{clip_embedder_forward.1} parent=1 // loop_footer_branch
      %29 = sbr.rel target = $region3
    $region8: #{clip_embedder_forward.1} parent=1 // loop_exit
      _
    %5588 = vsyncpa [#allocation3], 1
    %s5589 = scalar_lea.sflag [#allocation3], 1
    %5590 = vsyncpa %s5589, 1

</llo_original>
